<compile_context>
chip_gen: v5e
topology: v5e:2x2
jax: 0.10.0
libtpu: 0.0.40
codegen_flags: <defaults>
</compile_context>

<pallas_src>
import functools

import jax
import jax.numpy as jnp
from jax.experimental import pallas as pl
from jax.experimental.pallas import tpu as pltpu


def _round_up(v, m):
    return ((v + m - 1) // m) * m


# --------------------------------------------------------------------------
# Pallas kernel.
#
# Grid: (n_i row blocks [outer, "parallel"], n_j frequency blocks [inner]).
# Inputs per grid step:
#   x_ref, y_ref : (tm, fft)    frame tiles (compute dtype, e.g. bf16)
#   basis_ref    : (fft, 2*tk)  lanes [0:tk] = win*cos, lanes [tk:2*tk] = -win*sin
# Scratch accumulators (tm, tk) f32 hold elementwise partial sums over the
# frequency blocks; the full XLU reduce runs once per row block (last j) and
# is written into that row block's (8, 128) output tile (scalar in [0, 0]).
# --------------------------------------------------------------------------
def _stft_loss_kernel(x_ref, y_ref, basis_ref,
                      sqdiff_ref, ysq_ref, logl1_ref,
                      acc_sq, acc_ysq, acc_log, *, tk):
    j = pl.program_id(1)
    n_j = pl.num_programs(1)

    @pl.when(j == 0)
    def _():
        acc_sq[...] = jnp.zeros_like(acc_sq)
        acc_ysq[...] = jnp.zeros_like(acc_ysq)
        acc_log[...] = jnp.zeros_like(acc_log)

    basis = basis_ref[...]                                    # (fft, 2*tk)
    out_x = jnp.dot(x_ref[...], basis, preferred_element_type=jnp.float32)
    out_y = jnp.dot(y_ref[...], basis, preferred_element_type=jnp.float32)

    xr, xi = out_x[:, :tk], out_x[:, tk:]
    yr, yi = out_y[:, :tk], out_y[:, tk:]

    # clamp(power, 1e-7) matches the torch reference's clamp before sqrt.
    x_pow = jnp.maximum(xr * xr + xi * xi, 1e-7)
    y_pow = jnp.maximum(yr * yr + yi * yi, 1e-7)

    # (y_mag - x_mag)^2 == x_pow + y_pow - 2*sqrt(x_pow*y_pow)   (1 sqrt)
    # clamped at 0: the identity can go a hair negative when x ~= y.
    sq_diff = jnp.maximum(x_pow + y_pow - 2.0 * jnp.sqrt(x_pow * y_pow), 0.0)
    # |log y_mag - log x_mag| == 0.5*|log(y_pow) - log(x_pow)|   (2 logs)
    log_l1 = 0.5 * jnp.abs(jnp.log(y_pow) - jnp.log(x_pow))

    # Unmasked elementwise (VPU) accumulation; padded rows/cols contribute
    # exactly the 1e-7 clamp to y_pow (subtracted in the wrapper) and ~0
    # to sq_diff / log_l1.
    acc_sq[...] += sq_diff
    acc_ysq[...] += y_pow
    acc_log[...] += log_l1

    @pl.when(j == n_j - 1)
    def _():
        row = jax.lax.broadcasted_iota(jnp.int32, (8, 128), 0)
        col = jax.lax.broadcasted_iota(jnp.int32, (8, 128), 1)
        pick = (row == 0) & (col == 0)
        sqdiff_ref[...] = jnp.where(pick, jnp.sum(acc_sq[...]), 0.0)
        ysq_ref[...] = jnp.where(pick, jnp.sum(acc_ysq[...]), 0.0)
        logl1_ref[...] = jnp.where(pick, jnp.sum(acc_log[...]), 0.0)


# --------------------------------------------------------------------------
# VMEM-footprint model and tile selection.
# --------------------------------------------------------------------------
def _kernel_footprint_bytes(tm, tk, fft, in_bytes):
    frames = 2 * 2 * tm * fft * in_bytes          # x + y tiles, double-buffered
    basis = 2 * fft * (2 * tk) * in_bytes         # basis tile, double-buffered
    acc = 3 * tm * tk * 4                         # scratch accumulators
    mxu_out = 2 * tm * (2 * tk) * 4               # two matmul results
    temps = 6 * tm * tk * 4                       # elementwise temporaries
    return frames + basis + acc + mxu_out + temps


def _vmem_capacity_bytes():
    try:
        cap = getattr(pltpu.get_tpu_info(), "vmem_capacity_bytes", None)
        if cap:
            return int(cap)
    except Exception:
        pass
    try:
        kind = jax.devices()[0].device_kind.lower()
        if any(tag in kind for tag in ("v2", "v3", "v4", "v5", "v6")):
            return 128 << 20
    except Exception:
        pass
    return 64 << 20                               # conservative (v7x / unknown)


def _choose_tiles(m, n_bins, fft, budget_bytes, in_bytes, tile_m_max):
    """Pick (tm, tk): prefer least padded work, then a fully-resident basis
    (n_j == 1), then fewest grid steps, then the largest tiles."""
    kp_min = _round_up(n_bins, 128)
    m16 = _round_up(max(m, 16), 16)
    tm_cap = _round_up(max(tile_m_max, 16), 16)
    tm_cands = sorted({min(t, m16, tm_cap)
                       for t in (1024, 512, 384, 256, 128, 64, 32, 16)},
                      reverse=True)
    tk_cands = [kp_min] + [t for t in (1024, 512, 384, 256, 128) if t < kp_min]

    best = None
    for tm in tm_cands:
        m_pad = _round_up(m, tm)
        n_i = m_pad // tm
        for tk in tk_cands:
            kp = _round_up(n_bins, tk)
            n_j = kp // tk
            if _kernel_footprint_bytes(tm, tk, fft, in_bytes) > budget_bytes:
                continue
            key = (m_pad * kp, n_j, n_i * n_j, -tm, -tk)
            if best is None or key < best[0]:
                best = (key, tm, tk)
    if best is None:                              # nothing fits: minimal tiles
        return min(16, m16), 128
    return best[1], best[2]


def _stft_partial_sums(xf, yf, basis, tm, tk, vmem_limit_bytes):
    m_pad, fft = xf.shape
    n_i = m_pad // tm
    n_j = basis.shape[0] // fft

    kernel = functools.partial(_stft_loss_kernel, tk=tk)
    out_shape = [jax.ShapeDtypeStruct((n_i * 8, 128), jnp.float32)] * 3

    return pl.pallas_call(
        kernel,
        out_shape=out_shape,
        grid_spec=pltpu.PrefetchScalarGridSpec(
            num_scalar_prefetch=0,
            # Row blocks outermost (independent -> "parallel" for v7x's two
            # TensorCores), frequency blocks innermost (accumulated).
            grid=(n_i, n_j),
            in_specs=[
                pl.BlockSpec((tm, fft), lambda i, j: (i, 0)),
                pl.BlockSpec((tm, fft), lambda i, j: (i, 0)),
                pl.BlockSpec((fft, 2 * tk), lambda i, j: (j, 0)),
            ],
            out_specs=[pl.BlockSpec((8, 128), lambda i, j: (i, 0))
                       for _ in range(3)],
            scratch_shapes=[pltpu.VMEM((tm, tk), jnp.float32)] * 3,
        ),
        compiler_params=pltpu.CompilerParams(
            dimension_semantics=("parallel", "arbitrary"),
            vmem_limit_bytes=int(vmem_limit_bytes),
        ),
    )(xf, yf, basis)


# --------------------------------------------------------------------------
# Glue (plain JAX): same semantics as torch.stft with center=True,
# pad_mode='reflect', onesided=True, normalized=False, hann window.
# --------------------------------------------------------------------------
def _hann_window(win_length):
    # torch.hann_window default is periodic=True.
    nn_ = jnp.arange(win_length, dtype=jnp.float32)
    return 0.5 - 0.5 * jnp.cos(2.0 * jnp.pi * nn_ / win_length)


def _make_frames(x, fft_size, hop_size):
    """Centered, reflect-padded frames (B*n_frames, fft_size), UNwindowed."""
    b, _ = x.shape
    pad = fft_size // 2
    xp = jnp.pad(x, ((0, 0), (pad, pad)), mode="reflect")
    n_frames = 1 + (xp.shape[1] - fft_size) // hop_size
    idx = (jnp.arange(n_frames)[:, None] * hop_size
           + jnp.arange(fft_size)[None, :])            # (F, fft)
    fr = xp[:, idx]                                    # (B, F, fft)
    return fr.reshape(b * n_frames, fft_size)


def _windowed_dft_basis(fft_size, n_bins, window_full, tk, n_kblocks):
    """(n_kblocks*fft_size, 2*tk): row block j holds [win*cos | -win*sin] for
    frequency bins j*tk .. (j+1)*tk-1 (zero-padded past n_bins)."""
    kp = n_kblocks * tk
    nvec = jnp.arange(fft_size, dtype=jnp.int32)[:, None]
    kvec = jnp.arange(kp, dtype=jnp.int32)[None, :]
    # Reduce the phase mod fft_size in exact integer math before the f32
    # cos/sin (keeps large-fft angles accurate).
    phase = (nvec * kvec) % fft_size
    ang = (2.0 * jnp.pi / fft_size) * phase.astype(jnp.float32)
    col_valid = jnp.arange(kp)[None, :] < n_bins
    w = window_full[:, None]
    cos_m = jnp.where(col_valid, jnp.cos(ang) * w, 0.0)
    sin_m = jnp.where(col_valid, -jnp.sin(ang) * w, 0.0)
    cos_b = cos_m.reshape(fft_size, n_kblocks, tk).transpose(1, 0, 2)
    sin_b = sin_m.reshape(fft_size, n_kblocks, tk).transpose(1, 0, 2)
    basis = jnp.concatenate([cos_b, sin_b], axis=2)    # (n_kb, fft, 2*tk)
    return basis.reshape(n_kblocks * fft_size, 2 * tk)


def multi_resolution_stft_loss(x, y,
                               fft_sizes=(1024, 2048, 512),
                               hop_sizes=(120, 240, 50),
                               win_lengths=(600, 1200, 240),
                               factor_sc=0.1, factor_mag=0.1,
                               compute_dtype=jnp.bfloat16,
                               tile_m_max=1024,
                               vmem_budget_bytes=None):
    """Returns (factor_sc * sc_loss, factor_mag * mag_loss), matching the
    PyTorch MultiResolutionSTFTLoss forward pass."""
    cap = _vmem_capacity_bytes()
    if vmem_budget_bytes is None:
        vmem_budget_bytes = int(cap * 0.60)
    in_bytes = jnp.dtype(compute_dtype).itemsize

    sc_total = jnp.float32(0.0)
    mag_total = jnp.float32(0.0)
    for fs, hop, wl in zip(fft_sizes, hop_sizes, win_lengths):
        win = _hann_window(wl)
        left = (fs - wl) // 2
        window_full = jnp.zeros(fs, jnp.float32).at[left:left + wl].set(win)

        xf = _make_frames(x, fs, hop)           # (m, fs); window is in basis
        yf = _make_frames(y, fs, hop)
        m = xf.shape[0]
        n_bins = fs // 2 + 1

        tm, tk = _choose_tiles(m, n_bins, fs, vmem_budget_bytes, in_bytes,
                               tile_m_max)
        kp = _round_up(n_bins, tk)
        n_j = kp // tk
        m_pad = _round_up(m, tm)

        basis = _windowed_dft_basis(fs, n_bins, window_full, tk, n_j)
        basis = basis.astype(compute_dtype)

        xf = jnp.pad(xf.astype(compute_dtype), ((0, m_pad - m), (0, 0)))
        yf = jnp.pad(yf.astype(compute_dtype), ((0, m_pad - m), (0, 0)))

        footprint = _kernel_footprint_bytes(tm, tk, fs, in_bytes)
        vmem_limit = int(min(max(footprint * 14 // 10 + (6 << 20), 16 << 20),
                             int(cap * 0.85)))

        sq_p, ysq_p, log_p = _stft_partial_sums(xf, yf, basis, tm, tk,
                                                vmem_limit)

        # Padded rows/columns contribute exactly the 1e-7 power clamp to the
        # |y|^2 sum (and ~0 to the other two); subtract that known bias.
        pad_bias = 1e-7 * float(m_pad * kp - m * n_bins)
        sq_sum = jnp.maximum(jnp.sum(sq_p), 0.0)
        ysq_sum = jnp.sum(ysq_p) - jnp.float32(pad_bias)
        log_sum = jnp.sum(log_p)

        sc_total = sc_total + jnp.sqrt(sq_sum) / jnp.sqrt(ysq_sum)
        mag_total = mag_total + log_sum / jnp.float32(m * n_bins)

    n_res = len(fft_sizes)
    return factor_sc * sc_total / n_res, factor_mag * mag_total / n_res


# --------------------------------------------------------------------------
# Pure-JAX reference (same math, no Pallas) for a sanity check.
# --------------------------------------------------------------------------
def _reference_loss(x, y, fft_sizes, hop_sizes, win_lengths,
                    factor_sc=0.1, factor_mag=0.1):
    sc_total = 0.0
    mag_total = 0.0
    hi = jax.lax.Precision.HIGHEST
    for fs, hop, wl in zip(fft_sizes, hop_sizes, win_lengths):
        win = _hann_window(wl)
        left = (fs - wl) // 2
        window_full = jnp.zeros(fs, jnp.float32).at[left:left + wl].set(win)
        n_bins = fs // 2 + 1
        nvec = jnp.arange(fs, dtype=jnp.int32)[:, None]
        kvec = jnp.arange(n_bins, dtype=jnp.int32)[None, :]
        ang = (2.0 * jnp.pi / fs) * ((nvec * kvec) % fs).astype(jnp.float32)
        # Window folded into the basis == windowing the frames (exact).
        cos_m = jnp.cos(ang) * window_full[:, None]
        sin_m = -jnp.sin(ang) * window_full[:, None]

        def mag_of(sig):
            fr = _make_frames(sig, fs, hop)
            re = jnp.dot(fr, cos_m, precision=hi)
            im = jnp.dot(fr, sin_m, precision=hi)
            return jnp.sqrt(jnp.maximum(re * re + im * im, 1e-7))

        x_mag = mag_of(x)
        y_mag = mag_of(y)
        sc_total += jnp.linalg.norm(y_mag - x_mag) / jnp.linalg.norm(y_mag)
        mag_total += jnp.mean(jnp.abs(jnp.log(y_mag) - jnp.log(x_mag)))
    n_res = len(fft_sizes)
    return factor_sc * sc_total / n_res, factor_mag * mag_total / n_res


if __name__ == "__main__":
    # Small shapes consistent with the module's (B, T) signal inputs; the
    # three STFT resolutions are scaled down proportionally.
    fft_sizes = (128, 256, 64)
    hop_sizes = (16, 32, 8)
    win_lengths = (80, 160, 40)

    key = jax.random.PRNGKey(0)
    kx, ky = jax.random.split(key)
    B, T = 2, 256
    x = jax.random.normal(kx, (B, T), dtype=jnp.float32)
    y = jax.random.normal(ky, (B, T), dtype=jnp.float32)

    sc_ref, mag_ref = _reference_loss(x, y, fft_sizes, hop_sizes, win_lengths)

    # 1) f32 matmul path, auto tiles (single-block path) — tight tolerance.
    loss_f32 = jax.jit(functools.partial(
        multi_resolution_stft_loss,
        fft_sizes=fft_sizes, hop_sizes=hop_sizes, win_lengths=win_lengths,
        compute_dtype=jnp.float32))
    sc1, mag1 = loss_f32(x, y)
    sc1 = jax.block_until_ready(sc1)
    mag1 = jax.block_until_ready(mag1)
    assert jnp.allclose(sc1, sc_ref, rtol=5e-4, atol=1e-6), (sc1, sc_ref)
    assert jnp.allclose(mag1, mag_ref, rtol=5e-4, atol=1e-6), (mag1, mag_ref)

    # 2) bf16 matmul path (production default) with tiny row tiles and a tiny
    #    VMEM budget so the multi-row-block AND multi-frequency-block
    #    accumulation paths are exercised on these small shapes.
    loss_bf16 = jax.jit(functools.partial(
        multi_resolution_stft_loss,
        fft_sizes=fft_sizes, hop_sizes=hop_sizes, win_lengths=win_lengths,
        compute_dtype=jnp.bfloat16, tile_m_max=16,
        vmem_budget_bytes=256 << 10))
    sc2, mag2 = loss_bf16(x, y)
    sc2 = jax.block_until_ready(sc2)
    mag2 = jax.block_until_ready(mag2)
    assert jnp.allclose(sc2, sc_ref, rtol=2e-2, atol=1e-4), (sc2, sc_ref)
    assert jnp.allclose(mag2, mag_ref, rtol=2e-2, atol=1e-4), (mag2, mag_ref)

    print("KERNEL_OK")
</pallas_src>

<mosaic_0001>
module attributes {stable_mosaic.version = 11 : i64} {
  func.func @_stft_loss_kernel(%arg0: i32, %arg1: i32, %arg2: memref<32x256xf32, #tpu.memory_space<vmem>>, %arg3: memref<32x256xf32, #tpu.memory_space<vmem>>, %arg4: memref<256x512xf32, #tpu.memory_space<vmem>>, %arg5: memref<8x128xf32, #tpu.memory_space<vmem>>, %arg6: memref<8x128xf32, #tpu.memory_space<vmem>>, %arg7: memref<8x128xf32, #tpu.memory_space<vmem>>, %arg8: memref<32x256xf32, #tpu.memory_space<vmem>>, %arg9: memref<32x256xf32, #tpu.memory_space<vmem>>, %arg10: memref<32x256xf32, #tpu.memory_space<vmem>>) attributes {dimension_semantics = [#tpu.dimension_semantics<parallel>, #tpu.dimension_semantics<arbitrary>], iteration_bounds = array<i64: 1, 1>, scalar_prefetch = 0 : i64, scratch_operands = 3 : i64, tpu.core_type = #tpu.core_type<tc>, window_params = [{transform_indices = @transform_0, window_bounds = array<i64: 32, 256>}, {transform_indices = @transform_1, window_bounds = array<i64: 32, 256>}, {transform_indices = @transform_2, window_bounds = array<i64: 256, 512>}, {transform_indices = @transform_3, window_bounds = array<i64: 8, 128>}, {transform_indices = @transform_4, window_bounds = array<i64: 8, 128>}, {transform_indices = @transform_5, window_bounds = array<i64: 8, 128>}]} {
    %c0_i32 = arith.constant 0 : i32
    %0 = arith.cmpi eq, %arg1, %c0_i32 : i32
    %1 = arith.extui %0 : i1 to i32
    %c0_i32_0 = arith.constant 0 : i32
    %2 = arith.cmpi ne, %1, %c0_i32_0 : i32
    scf.if %2 {
      %cst_26 = arith.constant 0.000000e+00 : f32
      %48 = vector.broadcast %cst_26 : f32 to vector<32x256xf32>
      %c0_27 = arith.constant 0 : index
      %c0_28 = arith.constant 0 : index
      %49 = vector.load %arg8[%c0_27, %c0_28] : memref<32x256xf32, #tpu.memory_space<vmem>>, vector<32x256xf32>
      tpu.vector_store %arg8[%c0_27, %c0_28], %48 {strides = array<i32>} : memref<32x256xf32, #tpu.memory_space<vmem>>, vector<32x256xf32>,
      %cst_29 = arith.constant 0.000000e+00 : f32
      %50 = vector.broadcast %cst_29 : f32 to vector<32x256xf32>
      %c0_30 = arith.constant 0 : index
      %c0_31 = arith.constant 0 : index
      %51 = vector.load %arg9[%c0_30, %c0_31] : memref<32x256xf32, #tpu.memory_space<vmem>>, vector<32x256xf32>
      tpu.vector_store %arg9[%c0_30, %c0_31], %50 {strides = array<i32>} : memref<32x256xf32, #tpu.memory_space<vmem>>, vector<32x256xf32>,
      %cst_32 = arith.constant 0.000000e+00 : f32
      %52 = vector.broadcast %cst_32 : f32 to vector<32x256xf32>
      %c0_33 = arith.constant 0 : index
      %c0_34 = arith.constant 0 : index
      %53 = vector.load %arg10[%c0_33, %c0_34] : memref<32x256xf32, #tpu.memory_space<vmem>>, vector<32x256xf32>
      tpu.vector_store %arg10[%c0_33, %c0_34], %52 {strides = array<i32>} : memref<32x256xf32, #tpu.memory_space<vmem>>, vector<32x256xf32>,
    } else {
    }
    %c0 = arith.constant 0 : index
    %c0_1 = arith.constant 0 : index
    %3 = vector.load %arg4[%c0, %c0_1] : memref<256x512xf32, #tpu.memory_space<vmem>>, vector<256x512xf32>
    %c0_2 = arith.constant 0 : index
    %c0_3 = arith.constant 0 : index
    %4 = vector.load %arg2[%c0_2, %c0_3] : memref<32x256xf32, #tpu.memory_space<vmem>>, vector<32x256xf32>
    %cst = arith.constant dense<0.000000e+00> : vector<32x512xf32>
    %5 = tpu.matmul %4, %3, %cst {dimension_numbers = #tpu.dot_dimension_numbers<[1], [0], [0], [1], [0, 0, 1, 1], [], []>} : vector<32x256xf32>, vector<256x512xf32>, vector<32x512xf32> -> vector<32x512xf32>
    %c0_4 = arith.constant 0 : index
    %c0_5 = arith.constant 0 : index
    %6 = vector.load %arg3[%c0_4, %c0_5] : memref<32x256xf32, #tpu.memory_space<vmem>>, vector<32x256xf32>
    %cst_6 = arith.constant dense<0.000000e+00> : vector<32x512xf32>
    %7 = tpu.matmul %6, %3, %cst_6 {dimension_numbers = #tpu.dot_dimension_numbers<[1], [0], [0], [1], [0, 0, 1, 1], [], []>} : vector<32x256xf32>, vector<256x512xf32>, vector<32x512xf32> -> vector<32x512xf32>
    %8 = vector.extract_strided_slice %5 {offsets = [0, 0], sizes = [32, 256], strides = [1, 1]} : vector<32x512xf32> to vector<32x256xf32>
    %9 = vector.extract_strided_slice %5 {offsets = [0, 256], sizes = [32, 256], strides = [1, 1]} : vector<32x512xf32> to vector<32x256xf32>
    %10 = vector.extract_strided_slice %7 {offsets = [0, 0], sizes = [32, 256], strides = [1, 1]} : vector<32x512xf32> to vector<32x256xf32>
    %11 = vector.extract_strided_slice %7 {offsets = [0, 256], sizes = [32, 256], strides = [1, 1]} : vector<32x512xf32> to vector<32x256xf32>
    %12 = arith.mulf %8, %8 : vector<32x256xf32>
    %13 = arith.mulf %9, %9 : vector<32x256xf32>
    %14 = arith.addf %12, %13 : vector<32x256xf32>
    %cst_7 = arith.constant 1.000000e-07 : f32
    %15 = vector.broadcast %cst_7 : f32 to vector<32x256xf32>
    %16 = arith.maximumf %14, %15 : vector<32x256xf32>
    %17 = arith.mulf %10, %10 : vector<32x256xf32>
    %18 = arith.mulf %11, %11 : vector<32x256xf32>
    %19 = arith.addf %17, %18 : vector<32x256xf32>
    %cst_8 = arith.constant 1.000000e-07 : f32
    %20 = vector.broadcast %cst_8 : f32 to vector<32x256xf32>
    %21 = arith.maximumf %19, %20 : vector<32x256xf32>
    %22 = arith.addf %16, %21 : vector<32x256xf32>
    %23 = arith.mulf %16, %21 : vector<32x256xf32>
    %24 = math.sqrt %23 : vector<32x256xf32>
    %cst_9 = arith.constant 2.000000e+00 : f32
    %25 = vector.broadcast %cst_9 : f32 to vector<32x256xf32>
    %26 = arith.mulf %25, %24 : vector<32x256xf32>
    %27 = arith.subf %22, %26 : vector<32x256xf32>
    %cst_10 = arith.constant 0.000000e+00 : f32
    %28 = vector.broadcast %cst_10 : f32 to vector<32x256xf32>
    %29 = arith.maximumf %27, %28 : vector<32x256xf32>
    %30 = math.log %21 : vector<32x256xf32>
    %31 = math.log %16 : vector<32x256xf32>
    %32 = arith.subf %30, %31 : vector<32x256xf32>
    %33 = math.absf %32 : vector<32x256xf32>
    %cst_11 = arith.constant 5.000000e-01 : f32
    %34 = vector.broadcast %cst_11 : f32 to vector<32x256xf32>
    %35 = arith.mulf %34, %33 : vector<32x256xf32>
    %c0_12 = arith.constant 0 : index
    %c0_13 = arith.constant 0 : index
    %36 = vector.load %arg8[%c0_12, %c0_13] : memref<32x256xf32, #tpu.memory_space<vmem>>, vector<32x256xf32>
    %37 = arith.addf %36, %29 : vector<32x256xf32>
    %c0_14 = arith.constant 0 : index
    %c0_15 = arith.constant 0 : index
    %38 = vector.load %arg8[%c0_14, %c0_15] : memref<32x256xf32, #tpu.memory_space<vmem>>, vector<32x256xf32>
    tpu.vector_store %arg8[%c0_14, %c0_15], %37 {strides = array<i32>} : memref<32x256xf32, #tpu.memory_space<vmem>>, vector<32x256xf32>,
    %c0_16 = arith.constant 0 : index
    %c0_17 = arith.constant 0 : index
    %39 = vector.load %arg9[%c0_16, %c0_17] : memref<32x256xf32, #tpu.memory_space<vmem>>, vector<32x256xf32>
    %40 = arith.addf %39, %21 : vector<32x256xf32>
    %c0_18 = arith.constant 0 : index
    %c0_19 = arith.constant 0 : index
    %41 = vector.load %arg9[%c0_18, %c0_19] : memref<32x256xf32, #tpu.memory_space<vmem>>, vector<32x256xf32>
    tpu.vector_store %arg9[%c0_18, %c0_19], %40 {strides = array<i32>} : memref<32x256xf32, #tpu.memory_space<vmem>>, vector<32x256xf32>,
    %c0_20 = arith.constant 0 : index
    %c0_21 = arith.constant 0 : index
    %42 = vector.load %arg10[%c0_20, %c0_21] : memref<32x256xf32, #tpu.memory_space<vmem>>, vector<32x256xf32>
    %43 = arith.addf %42, %35 : vector<32x256xf32>
    %c0_22 = arith.constant 0 : index
    %c0_23 = arith.constant 0 : index
    %44 = vector.load %arg10[%c0_22, %c0_23] : memref<32x256xf32, #tpu.memory_space<vmem>>, vector<32x256xf32>
    tpu.vector_store %arg10[%c0_22, %c0_23], %43 {strides = array<i32>} : memref<32x256xf32, #tpu.memory_space<vmem>>, vector<32x256xf32>,
    %c0_i32_24 = arith.constant 0 : i32
    %45 = arith.cmpi eq, %arg1, %c0_i32_24 : i32
    %46 = arith.extui %45 : i1 to i32
    %c0_i32_25 = arith.constant 0 : i32
    %47 = arith.cmpi ne, %46, %c0_i32_25 : i32
    scf.if %47 {
      %48 = tpu.iota {dimensions = array<i32: 0>} : vector<8x128xi32>
      %49 = tpu.iota {dimensions = array<i32: 1>} : vector<8x128xi32>
      %c0_i32_26 = arith.constant 0 : i32
      %50 = vector.broadcast %c0_i32_26 : i32 to vector<8x128xi32>
      %51 = arith.cmpi eq, %48, %50 : vector<8x128xi32>
      %c0_i32_27 = arith.constant 0 : i32
      %52 = vector.broadcast %c0_i32_27 : i32 to vector<8x128xi32>
      %53 = arith.cmpi eq, %49, %52 : vector<8x128xi32>
      %54 = arith.andi %51, %53 : vector<8x128xi1>
      %c0_28 = arith.constant 0 : index
      %c0_29 = arith.constant 0 : index
      %55 = vector.load %arg8[%c0_28, %c0_29] : memref<32x256xf32, #tpu.memory_space<vmem>>, vector<32x256xf32>
      %56 = vector.shape_cast %55 : vector<32x256xf32> to vector<1x32x256xf32>
      %cst_30 = arith.constant dense<0.000000e+00> : vector<1xf32>
      %57 = vector.multi_reduction <add>, %56, %cst_30 [1, 2] : vector<1x32x256xf32> to vector<1xf32>
      %58 = vector.shape_cast %57 : vector<1xf32> to vector<1x1x1xf32>
      %59 = vector.extract %58[0, 0, 0] : f32 from vector<1x1x1xf32>
      %cst_31 = arith.constant 0.000000e+00 : f32
      %60 = vector.broadcast %59 : f32 to vector<8x128xf32>
      %61 = vector.broadcast %cst_31 : f32 to vector<8x128xf32>
      %62 = arith.select %54, %60, %61 : vector<8x128xi1>, vector<8x128xf32>
      %c0_32 = arith.constant 0 : index
      %c0_33 = arith.constant 0 : index
      %63 = vector.load %arg5[%c0_32, %c0_33] : memref<8x128xf32, #tpu.memory_space<vmem>>, vector<8x128xf32>
      tpu.vector_store %arg5[%c0_32, %c0_33], %62 {strides = array<i32>} : memref<8x128xf32, #tpu.memory_space<vmem>>, vector<8x128xf32>,
      %c0_34 = arith.constant 0 : index
      %c0_35 = arith.constant 0 : index
      %64 = vector.load %arg9[%c0_34, %c0_35] : memref<32x256xf32, #tpu.memory_space<vmem>>, vector<32x256xf32>
      %65 = vector.shape_cast %64 : vector<32x256xf32> to vector<1x32x256xf32>
      %cst_36 = arith.constant dense<0.000000e+00> : vector<1xf32>
      %66 = vector.multi_reduction <add>, %65, %cst_36 [1, 2] : vector<1x32x256xf32> to vector<1xf32>
      %67 = vector.shape_cast %66 : vector<1xf32> to vector<1x1x1xf32>
      %68 = vector.extract %67[0, 0, 0] : f32 from vector<1x1x1xf32>
      %cst_37 = arith.constant 0.000000e+00 : f32
      %69 = vector.broadcast %68 : f32 to vector<8x128xf32>
      %70 = vector.broadcast %cst_37 : f32 to vector<8x128xf32>
      %71 = arith.select %54, %69, %70 : vector<8x128xi1>, vector<8x128xf32>
      %c0_38 = arith.constant 0 : index
      %c0_39 = arith.constant 0 : index
      %72 = vector.load %arg6[%c0_38, %c0_39] : memref<8x128xf32, #tpu.memory_space<vmem>>, vector<8x128xf32>
      tpu.vector_store %arg6[%c0_38, %c0_39], %71 {strides = array<i32>} : memref<8x128xf32, #tpu.memory_space<vmem>>, vector<8x128xf32>,
      %c0_40 = arith.constant 0 : index
      %c0_41 = arith.constant 0 : index
      %73 = vector.load %arg10[%c0_40, %c0_41] : memref<32x256xf32, #tpu.memory_space<vmem>>, vector<32x256xf32>
      %74 = vector.shape_cast %73 : vector<32x256xf32> to vector<1x32x256xf32>
      %cst_42 = arith.constant dense<0.000000e+00> : vector<1xf32>
      %75 = vector.multi_reduction <add>, %74, %cst_42 [1, 2] : vector<1x32x256xf32> to vector<1xf32>
      %76 = vector.shape_cast %75 : vector<1xf32> to vector<1x1x1xf32>
      %77 = vector.extract %76[0, 0, 0] : f32 from vector<1x1x1xf32>
      %cst_43 = arith.constant 0.000000e+00 : f32
      %78 = vector.broadcast %77 : f32 to vector<8x128xf32>
      %79 = vector.broadcast %cst_43 : f32 to vector<8x128xf32>
      %80 = arith.select %54, %78, %79 : vector<8x128xi1>, vector<8x128xf32>
      %c0_44 = arith.constant 0 : index
      %c0_45 = arith.constant 0 : index
      %81 = vector.load %arg7[%c0_44, %c0_45] : memref<8x128xf32, #tpu.memory_space<vmem>>, vector<8x128xf32>
      tpu.vector_store %arg7[%c0_44, %c0_45], %80 {strides = array<i32>} : memref<8x128xf32, #tpu.memory_space<vmem>>, vector<8x128xf32>,
    } else {
    }
    return
  }
  func.func @transform_0(%arg0: i32, %arg1: i32) -> (i32, i32) {
    %c0_i32 = arith.constant 0 : i32
    %c0_i32_0 = arith.constant 0 : i32
    return %arg0, %c0_i32 : i32, i32
  }
  func.func @transform_1(%arg0: i32, %arg1: i32) -> (i32, i32) {
    %c0_i32 = arith.constant 0 : i32
    %c0_i32_0 = arith.constant 0 : i32
    return %arg0, %c0_i32 : i32, i32
  }
  func.func @transform_2(%arg0: i32, %arg1: i32) -> (i32, i32) {
    %c0_i32 = arith.constant 0 : i32
    %c0_i32_0 = arith.constant 0 : i32
    return %arg1, %c0_i32 : i32, i32
  }
  func.func @transform_3(%arg0: i32, %arg1: i32) -> (i32, i32) {
    %c0_i32 = arith.constant 0 : i32
    %c0_i32_0 = arith.constant 0 : i32
    return %arg0, %c0_i32 : i32, i32
  }
  func.func @transform_4(%arg0: i32, %arg1: i32) -> (i32, i32) {
    %c0_i32 = arith.constant 0 : i32
    %c0_i32_0 = arith.constant 0 : i32
    return %arg0, %c0_i32 : i32, i32
  }
  func.func @transform_5(%arg0: i32, %arg1: i32) -> (i32, i32) {
    %c0_i32 = arith.constant 0 : i32
    %c0_i32_0 = arith.constant 0 : i32
    return %arg0, %c0_i32 : i32, i32
  }
}

module attributes {stable_mosaic.version = 11 : i64} {
  func.func @_stft_loss_kernel(%arg0: i32, %arg1: i32, %arg2: memref<48x128xf32, #tpu.memory_space<vmem>>, %arg3: memref<48x128xf32, #tpu.memory_space<vmem>>, %arg4: memref<128x256xf32, #tpu.memory_space<vmem>>, %arg5: memref<8x128xf32, #tpu.memory_space<vmem>>, %arg6: memref<8x128xf32, #tpu.memory_space<vmem>>, %arg7: memref<8x128xf32, #tpu.memory_space<vmem>>, %arg8: memref<48x128xf32, #tpu.memory_space<vmem>>, %arg9: memref<48x128xf32, #tpu.memory_space<vmem>>, %arg10: memref<48x128xf32, #tpu.memory_space<vmem>>) attributes {dimension_semantics = [#tpu.dimension_semantics<parallel>, #tpu.dimension_semantics<arbitrary>], iteration_bounds = array<i64: 1, 1>, scalar_prefetch = 0 : i64, scratch_operands = 3 : i64, tpu.core_type = #tpu.core_type<tc>, window_params = [{transform_indices = @transform_0, window_bounds = array<i64: 48, 128>}, {transform_indices = @transform_1, window_bounds = array<i64: 48, 128>}, {transform_indices = @transform_2, window_bounds = array<i64: 128, 256>}, {transform_indices = @transform_3, window_bounds = array<i64: 8, 128>}, {transform_indices = @transform_4, window_bounds = array<i64: 8, 128>}, {transform_indices = @transform_5, window_bounds = array<i64: 8, 128>}]} {
    %c0_i32 = arith.constant 0 : i32
    %0 = arith.cmpi eq, %arg1, %c0_i32 : i32
    %1 = arith.extui %0 : i1 to i32
    %c0_i32_0 = arith.constant 0 : i32
    %2 = arith.cmpi ne, %1, %c0_i32_0 : i32
    scf.if %2 {
      %cst_26 = arith.constant 0.000000e+00 : f32
      %48 = vector.broadcast %cst_26 : f32 to vector<48x128xf32>
      %c0_27 = arith.constant 0 : index
      %c0_28 = arith.constant 0 : index
      %49 = vector.load %arg8[%c0_27, %c0_28] : memref<48x128xf32, #tpu.memory_space<vmem>>, vector<48x128xf32>
      tpu.vector_store %arg8[%c0_27, %c0_28], %48 {strides = array<i32>} : memref<48x128xf32, #tpu.memory_space<vmem>>, vector<48x128xf32>,
      %cst_29 = arith.constant 0.000000e+00 : f32
      %50 = vector.broadcast %cst_29 : f32 to vector<48x128xf32>
      %c0_30 = arith.constant 0 : index
      %c0_31 = arith.constant 0 : index
      %51 = vector.load %arg9[%c0_30, %c0_31] : memref<48x128xf32, #tpu.memory_space<vmem>>, vector<48x128xf32>
      tpu.vector_store %arg9[%c0_30, %c0_31], %50 {strides = array<i32>} : memref<48x128xf32, #tpu.memory_space<vmem>>, vector<48x128xf32>,
      %cst_32 = arith.constant 0.000000e+00 : f32
      %52 = vector.broadcast %cst_32 : f32 to vector<48x128xf32>
      %c0_33 = arith.constant 0 : index
      %c0_34 = arith.constant 0 : index
      %53 = vector.load %arg10[%c0_33, %c0_34] : memref<48x128xf32, #tpu.memory_space<vmem>>, vector<48x128xf32>
      tpu.vector_store %arg10[%c0_33, %c0_34], %52 {strides = array<i32>} : memref<48x128xf32, #tpu.memory_space<vmem>>, vector<48x128xf32>,
    } else {
    }
    %c0 = arith.constant 0 : index
    %c0_1 = arith.constant 0 : index
    %3 = vector.load %arg4[%c0, %c0_1] : memref<128x256xf32, #tpu.memory_space<vmem>>, vector<128x256xf32>
    %c0_2 = arith.constant 0 : index
    %c0_3 = arith.constant 0 : index
    %4 = vector.load %arg2[%c0_2, %c0_3] : memref<48x128xf32, #tpu.memory_space<vmem>>, vector<48x128xf32>
    %cst = arith.constant dense<0.000000e+00> : vector<48x256xf32>
    %5 = tpu.matmul %4, %3, %cst {dimension_numbers = #tpu.dot_dimension_numbers<[1], [0], [0], [1], [0, 0, 1, 1], [], []>} : vector<48x128xf32>, vector<128x256xf32>, vector<48x256xf32> -> vector<48x256xf32>
    %c0_4 = arith.constant 0 : index
    %c0_5 = arith.constant 0 : index
    %6 = vector.load %arg3[%c0_4, %c0_5] : memref<48x128xf32, #tpu.memory_space<vmem>>, vector<48x128xf32>
    %cst_6 = arith.constant dense<0.000000e+00> : vector<48x256xf32>
    %7 = tpu.matmul %6, %3, %cst_6 {dimension_numbers = #tpu.dot_dimension_numbers<[1], [0], [0], [1], [0, 0, 1, 1], [], []>} : vector<48x128xf32>, vector<128x256xf32>, vector<48x256xf32> -> vector<48x256xf32>
    %8 = vector.extract_strided_slice %5 {offsets = [0, 0], sizes = [48, 128], strides = [1, 1]} : vector<48x256xf32> to vector<48x128xf32>
    %9 = vector.extract_strided_slice %5 {offsets = [0, 128], sizes = [48, 128], strides = [1, 1]} : vector<48x256xf32> to vector<48x128xf32>
    %10 = vector.extract_strided_slice %7 {offsets = [0, 0], sizes = [48, 128], strides = [1, 1]} : vector<48x256xf32> to vector<48x128xf32>
    %11 = vector.extract_strided_slice %7 {offsets = [0, 128], sizes = [48, 128], strides = [1, 1]} : vector<48x256xf32> to vector<48x128xf32>
    %12 = arith.mulf %8, %8 : vector<48x128xf32>
    %13 = arith.mulf %9, %9 : vector<48x128xf32>
    %14 = arith.addf %12, %13 : vector<48x128xf32>
    %cst_7 = arith.constant 1.000000e-07 : f32
    %15 = vector.broadcast %cst_7 : f32 to vector<48x128xf32>
    %16 = arith.maximumf %14, %15 : vector<48x128xf32>
    %17 = arith.mulf %10, %10 : vector<48x128xf32>
    %18 = arith.mulf %11, %11 : vector<48x128xf32>
    %19 = arith.addf %17, %18 : vector<48x128xf32>
    %cst_8 = arith.constant 1.000000e-07 : f32
    %20 = vector.broadcast %cst_8 : f32 to vector<48x128xf32>
    %21 = arith.maximumf %19, %20 : vector<48x128xf32>
    %22 = arith.addf %16, %21 : vector<48x128xf32>
    %23 = arith.mulf %16, %21 : vector<48x128xf32>
    %24 = math.sqrt %23 : vector<48x128xf32>
    %cst_9 = arith.constant 2.000000e+00 : f32
    %25 = vector.broadcast %cst_9 : f32 to vector<48x128xf32>
    %26 = arith.mulf %25, %24 : vector<48x128xf32>
    %27 = arith.subf %22, %26 : vector<48x128xf32>
    %cst_10 = arith.constant 0.000000e+00 : f32
    %28 = vector.broadcast %cst_10 : f32 to vector<48x128xf32>
    %29 = arith.maximumf %27, %28 : vector<48x128xf32>
    %30 = math.log %21 : vector<48x128xf32>
    %31 = math.log %16 : vector<48x128xf32>
    %32 = arith.subf %30, %31 : vector<48x128xf32>
    %33 = math.absf %32 : vector<48x128xf32>
    %cst_11 = arith.constant 5.000000e-01 : f32
    %34 = vector.broadcast %cst_11 : f32 to vector<48x128xf32>
    %35 = arith.mulf %34, %33 : vector<48x128xf32>
    %c0_12 = arith.constant 0 : index
    %c0_13 = arith.constant 0 : index
    %36 = vector.load %arg8[%c0_12, %c0_13] : memref<48x128xf32, #tpu.memory_space<vmem>>, vector<48x128xf32>
    %37 = arith.addf %36, %29 : vector<48x128xf32>
    %c0_14 = arith.constant 0 : index
    %c0_15 = arith.constant 0 : index
    %38 = vector.load %arg8[%c0_14, %c0_15] : memref<48x128xf32, #tpu.memory_space<vmem>>, vector<48x128xf32>
    tpu.vector_store %arg8[%c0_14, %c0_15], %37 {strides = array<i32>} : memref<48x128xf32, #tpu.memory_space<vmem>>, vector<48x128xf32>,
    %c0_16 = arith.constant 0 : index
    %c0_17 = arith.constant 0 : index
    %39 = vector.load %arg9[%c0_16, %c0_17] : memref<48x128xf32, #tpu.memory_space<vmem>>, vector<48x128xf32>
    %40 = arith.addf %39, %21 : vector<48x128xf32>
    %c0_18 = arith.constant 0 : index
    %c0_19 = arith.constant 0 : index
    %41 = vector.load %arg9[%c0_18, %c0_19] : memref<48x128xf32, #tpu.memory_space<vmem>>, vector<48x128xf32>
    tpu.vector_store %arg9[%c0_18, %c0_19], %40 {strides = array<i32>} : memref<48x128xf32, #tpu.memory_space<vmem>>, vector<48x128xf32>,
    %c0_20 = arith.constant 0 : index
    %c0_21 = arith.constant 0 : index
    %42 = vector.load %arg10[%c0_20, %c0_21] : memref<48x128xf32, #tpu.memory_space<vmem>>, vector<48x128xf32>
    %43 = arith.addf %42, %35 : vector<48x128xf32>
    %c0_22 = arith.constant 0 : index
    %c0_23 = arith.constant 0 : index
    %44 = vector.load %arg10[%c0_22, %c0_23] : memref<48x128xf32, #tpu.memory_space<vmem>>, vector<48x128xf32>
    tpu.vector_store %arg10[%c0_22, %c0_23], %43 {strides = array<i32>} : memref<48x128xf32, #tpu.memory_space<vmem>>, vector<48x128xf32>,
    %c0_i32_24 = arith.constant 0 : i32
    %45 = arith.cmpi eq, %arg1, %c0_i32_24 : i32
    %46 = arith.extui %45 : i1 to i32
    %c0_i32_25 = arith.constant 0 : i32
    %47 = arith.cmpi ne, %46, %c0_i32_25 : i32
    scf.if %47 {
      %48 = tpu.iota {dimensions = array<i32: 0>} : vector<8x128xi32>
      %49 = tpu.iota {dimensions = array<i32: 1>} : vector<8x128xi32>
      %c0_i32_26 = arith.constant 0 : i32
      %50 = vector.broadcast %c0_i32_26 : i32 to vector<8x128xi32>
      %51 = arith.cmpi eq, %48, %50 : vector<8x128xi32>
      %c0_i32_27 = arith.constant 0 : i32
      %52 = vector.broadcast %c0_i32_27 : i32 to vector<8x128xi32>
      %53 = arith.cmpi eq, %49, %52 : vector<8x128xi32>
      %54 = arith.andi %51, %53 : vector<8x128xi1>
      %c0_28 = arith.constant 0 : index
      %c0_29 = arith.constant 0 : index
      %55 = vector.load %arg8[%c0_28, %c0_29] : memref<48x128xf32, #tpu.memory_space<vmem>>, vector<48x128xf32>
      %56 = vector.shape_cast %55 : vector<48x128xf32> to vector<1x48x128xf32>
      %cst_30 = arith.constant dense<0.000000e+00> : vector<1xf32>
      %57 = vector.multi_reduction <add>, %56, %cst_30 [1, 2] : vector<1x48x128xf32> to vector<1xf32>
      %58 = vector.shape_cast %57 : vector<1xf32> to vector<1x1x1xf32>
      %59 = vector.extract %58[0, 0, 0] : f32 from vector<1x1x1xf32>
      %cst_31 = arith.constant 0.000000e+00 : f32
      %60 = vector.broadcast %59 : f32 to vector<8x128xf32>
      %61 = vector.broadcast %cst_31 : f32 to vector<8x128xf32>
      %62 = arith.select %54, %60, %61 : vector<8x128xi1>, vector<8x128xf32>
      %c0_32 = arith.constant 0 : index
      %c0_33 = arith.constant 0 : index
      %63 = vector.load %arg5[%c0_32, %c0_33] : memref<8x128xf32, #tpu.memory_space<vmem>>, vector<8x128xf32>
      tpu.vector_store %arg5[%c0_32, %c0_33], %62 {strides = array<i32>} : memref<8x128xf32, #tpu.memory_space<vmem>>, vector<8x128xf32>,
      %c0_34 = arith.constant 0 : index
      %c0_35 = arith.constant 0 : index
      %64 = vector.load %arg9[%c0_34, %c0_35] : memref<48x128xf32, #tpu.memory_space<vmem>>, vector<48x128xf32>
      %65 = vector.shape_cast %64 : vector<48x128xf32> to vector<1x48x128xf32>
      %cst_36 = arith.constant dense<0.000000e+00> : vector<1xf32>
      %66 = vector.multi_reduction <add>, %65, %cst_36 [1, 2] : vector<1x48x128xf32> to vector<1xf32>
      %67 = vector.shape_cast %66 : vector<1xf32> to vector<1x1x1xf32>
      %68 = vector.extract %67[0, 0, 0] : f32 from vector<1x1x1xf32>
      %cst_37 = arith.constant 0.000000e+00 : f32
      %69 = vector.broadcast %68 : f32 to vector<8x128xf32>
      %70 = vector.broadcast %cst_37 : f32 to vector<8x128xf32>
      %71 = arith.select %54, %69, %70 : vector<8x128xi1>, vector<8x128xf32>
      %c0_38 = arith.constant 0 : index
      %c0_39 = arith.constant 0 : index
      %72 = vector.load %arg6[%c0_38, %c0_39] : memref<8x128xf32, #tpu.memory_space<vmem>>, vector<8x128xf32>
      tpu.vector_store %arg6[%c0_38, %c0_39], %71 {strides = array<i32>} : memref<8x128xf32, #tpu.memory_space<vmem>>, vector<8x128xf32>,
      %c0_40 = arith.constant 0 : index
      %c0_41 = arith.constant 0 : index
      %73 = vector.load %arg10[%c0_40, %c0_41] : memref<48x128xf32, #tpu.memory_space<vmem>>, vector<48x128xf32>
      %74 = vector.shape_cast %73 : vector<48x128xf32> to vector<1x48x128xf32>
      %cst_42 = arith.constant dense<0.000000e+00> : vector<1xf32>
      %75 = vector.multi_reduction <add>, %74, %cst_42 [1, 2] : vector<1x48x128xf32> to vector<1xf32>
      %76 = vector.shape_cast %75 : vector<1xf32> to vector<1x1x1xf32>
      %77 = vector.extract %76[0, 0, 0] : f32 from vector<1x1x1xf32>
      %cst_43 = arith.constant 0.000000e+00 : f32
      %78 = vector.broadcast %77 : f32 to vector<8x128xf32>
      %79 = vector.broadcast %cst_43 : f32 to vector<8x128xf32>
      %80 = arith.select %54, %78, %79 : vector<8x128xi1>, vector<8x128xf32>
      %c0_44 = arith.constant 0 : index
      %c0_45 = arith.constant 0 : index
      %81 = vector.load %arg7[%c0_44, %c0_45] : memref<8x128xf32, #tpu.memory_space<vmem>>, vector<8x128xf32>
      tpu.vector_store %arg7[%c0_44, %c0_45], %80 {strides = array<i32>} : memref<8x128xf32, #tpu.memory_space<vmem>>, vector<8x128xf32>,
    } else {
    }
    return
  }
  func.func @transform_0(%arg0: i32, %arg1: i32) -> (i32, i32) {
    %c0_i32 = arith.constant 0 : i32
    %c0_i32_0 = arith.constant 0 : i32
    return %arg0, %c0_i32 : i32, i32
  }
  func.func @transform_1(%arg0: i32, %arg1: i32) -> (i32, i32) {
    %c0_i32 = arith.constant 0 : i32
    %c0_i32_0 = arith.constant 0 : i32
    return %arg0, %c0_i32 : i32, i32
  }
  func.func @transform_2(%arg0: i32, %arg1: i32) -> (i32, i32) {
    %c0_i32 = arith.constant 0 : i32
    %c0_i32_0 = arith.constant 0 : i32
    return %arg1, %c0_i32 : i32, i32
  }
  func.func @transform_3(%arg0: i32, %arg1: i32) -> (i32, i32) {
    %c0_i32 = arith.constant 0 : i32
    %c0_i32_0 = arith.constant 0 : i32
    return %arg0, %c0_i32 : i32, i32
  }
  func.func @transform_4(%arg0: i32, %arg1: i32) -> (i32, i32) {
    %c0_i32 = arith.constant 0 : i32
    %c0_i32_0 = arith.constant 0 : i32
    return %arg0, %c0_i32 : i32, i32
  }
  func.func @transform_5(%arg0: i32, %arg1: i32) -> (i32, i32) {
    %c0_i32 = arith.constant 0 : i32
    %c0_i32_0 = arith.constant 0 : i32
    return %arg0, %c0_i32 : i32, i32
  }
}

module attributes {stable_mosaic.version = 11 : i64} {
  func.func @_stft_loss_kernel(%arg0: i32, %arg1: i32, %arg2: memref<80x64xf32, #tpu.memory_space<vmem>>, %arg3: memref<80x64xf32, #tpu.memory_space<vmem>>, %arg4: memref<64x256xf32, #tpu.memory_space<vmem>>, %arg5: memref<8x128xf32, #tpu.memory_space<vmem>>, %arg6: memref<8x128xf32, #tpu.memory_space<vmem>>, %arg7: memref<8x128xf32, #tpu.memory_space<vmem>>, %arg8: memref<80x128xf32, #tpu.memory_space<vmem>>, %arg9: memref<80x128xf32, #tpu.memory_space<vmem>>, %arg10: memref<80x128xf32, #tpu.memory_space<vmem>>) attributes {dimension_semantics = [#tpu.dimension_semantics<parallel>, #tpu.dimension_semantics<arbitrary>], iteration_bounds = array<i64: 1, 1>, scalar_prefetch = 0 : i64, scratch_operands = 3 : i64, tpu.core_type = #tpu.core_type<tc>, window_params = [{transform_indices = @transform_0, window_bounds = array<i64: 80, 64>}, {transform_indices = @transform_1, window_bounds = array<i64: 80, 64>}, {transform_indices = @transform_2, window_bounds = array<i64: 64, 256>}, {transform_indices = @transform_3, window_bounds = array<i64: 8, 128>}, {transform_indices = @transform_4, window_bounds = array<i64: 8, 128>}, {transform_indices = @transform_5, window_bounds = array<i64: 8, 128>}]} {
    %c0_i32 = arith.constant 0 : i32
    %0 = arith.cmpi eq, %arg1, %c0_i32 : i32
    %1 = arith.extui %0 : i1 to i32
    %c0_i32_0 = arith.constant 0 : i32
    %2 = arith.cmpi ne, %1, %c0_i32_0 : i32
    scf.if %2 {
      %cst_26 = arith.constant 0.000000e+00 : f32
      %48 = vector.broadcast %cst_26 : f32 to vector<80x128xf32>
      %c0_27 = arith.constant 0 : index
      %c0_28 = arith.constant 0 : index
      %49 = vector.load %arg8[%c0_27, %c0_28] : memref<80x128xf32, #tpu.memory_space<vmem>>, vector<80x128xf32>
      tpu.vector_store %arg8[%c0_27, %c0_28], %48 {strides = array<i32>} : memref<80x128xf32, #tpu.memory_space<vmem>>, vector<80x128xf32>,
      %cst_29 = arith.constant 0.000000e+00 : f32
      %50 = vector.broadcast %cst_29 : f32 to vector<80x128xf32>
      %c0_30 = arith.constant 0 : index
      %c0_31 = arith.constant 0 : index
      %51 = vector.load %arg9[%c0_30, %c0_31] : memref<80x128xf32, #tpu.memory_space<vmem>>, vector<80x128xf32>
      tpu.vector_store %arg9[%c0_30, %c0_31], %50 {strides = array<i32>} : memref<80x128xf32, #tpu.memory_space<vmem>>, vector<80x128xf32>,
      %cst_32 = arith.constant 0.000000e+00 : f32
      %52 = vector.broadcast %cst_32 : f32 to vector<80x128xf32>
      %c0_33 = arith.constant 0 : index
      %c0_34 = arith.constant 0 : index
      %53 = vector.load %arg10[%c0_33, %c0_34] : memref<80x128xf32, #tpu.memory_space<vmem>>, vector<80x128xf32>
      tpu.vector_store %arg10[%c0_33, %c0_34], %52 {strides = array<i32>} : memref<80x128xf32, #tpu.memory_space<vmem>>, vector<80x128xf32>,
    } else {
    }
    %c0 = arith.constant 0 : index
    %c0_1 = arith.constant 0 : index
    %3 = vector.load %arg4[%c0, %c0_1] : memref<64x256xf32, #tpu.memory_space<vmem>>, vector<64x256xf32>
    %c0_2 = arith.constant 0 : index
    %c0_3 = arith.constant 0 : index
    %4 = vector.load %arg2[%c0_2, %c0_3] : memref<80x64xf32, #tpu.memory_space<vmem>>, vector<80x64xf32>
    %cst = arith.constant dense<0.000000e+00> : vector<80x256xf32>
    %5 = tpu.matmul %4, %3, %cst {dimension_numbers = #tpu.dot_dimension_numbers<[1], [0], [0], [1], [0, 0, 1, 1], [], []>} : vector<80x64xf32>, vector<64x256xf32>, vector<80x256xf32> -> vector<80x256xf32>
    %c0_4 = arith.constant 0 : index
    %c0_5 = arith.constant 0 : index
    %6 = vector.load %arg3[%c0_4, %c0_5] : memref<80x64xf32, #tpu.memory_space<vmem>>, vector<80x64xf32>
    %cst_6 = arith.constant dense<0.000000e+00> : vector<80x256xf32>
    %7 = tpu.matmul %6, %3, %cst_6 {dimension_numbers = #tpu.dot_dimension_numbers<[1], [0], [0], [1], [0, 0, 1, 1], [], []>} : vector<80x64xf32>, vector<64x256xf32>, vector<80x256xf32> -> vector<80x256xf32>
    %8 = vector.extract_strided_slice %5 {offsets = [0, 0], sizes = [80, 128], strides = [1, 1]} : vector<80x256xf32> to vector<80x128xf32>
    %9 = vector.extract_strided_slice %5 {offsets = [0, 128], sizes = [80, 128], strides = [1, 1]} : vector<80x256xf32> to vector<80x128xf32>
    %10 = vector.extract_strided_slice %7 {offsets = [0, 0], sizes = [80, 128], strides = [1, 1]} : vector<80x256xf32> to vector<80x128xf32>
    %11 = vector.extract_strided_slice %7 {offsets = [0, 128], sizes = [80, 128], strides = [1, 1]} : vector<80x256xf32> to vector<80x128xf32>
    %12 = arith.mulf %8, %8 : vector<80x128xf32>
    %13 = arith.mulf %9, %9 : vector<80x128xf32>
    %14 = arith.addf %12, %13 : vector<80x128xf32>
    %cst_7 = arith.constant 1.000000e-07 : f32
    %15 = vector.broadcast %cst_7 : f32 to vector<80x128xf32>
    %16 = arith.maximumf %14, %15 : vector<80x128xf32>
    %17 = arith.mulf %10, %10 : vector<80x128xf32>
    %18 = arith.mulf %11, %11 : vector<80x128xf32>
    %19 = arith.addf %17, %18 : vector<80x128xf32>
    %cst_8 = arith.constant 1.000000e-07 : f32
    %20 = vector.broadcast %cst_8 : f32 to vector<80x128xf32>
    %21 = arith.maximumf %19, %20 : vector<80x128xf32>
    %22 = arith.addf %16, %21 : vector<80x128xf32>
    %23 = arith.mulf %16, %21 : vector<80x128xf32>
    %24 = math.sqrt %23 : vector<80x128xf32>
    %cst_9 = arith.constant 2.000000e+00 : f32
    %25 = vector.broadcast %cst_9 : f32 to vector<80x128xf32>
    %26 = arith.mulf %25, %24 : vector<80x128xf32>
    %27 = arith.subf %22, %26 : vector<80x128xf32>
    %cst_10 = arith.constant 0.000000e+00 : f32
    %28 = vector.broadcast %cst_10 : f32 to vector<80x128xf32>
    %29 = arith.maximumf %27, %28 : vector<80x128xf32>
    %30 = math.log %21 : vector<80x128xf32>
    %31 = math.log %16 : vector<80x128xf32>
    %32 = arith.subf %30, %31 : vector<80x128xf32>
    %33 = math.absf %32 : vector<80x128xf32>
    %cst_11 = arith.constant 5.000000e-01 : f32
    %34 = vector.broadcast %cst_11 : f32 to vector<80x128xf32>
    %35 = arith.mulf %34, %33 : vector<80x128xf32>
    %c0_12 = arith.constant 0 : index
    %c0_13 = arith.constant 0 : index
    %36 = vector.load %arg8[%c0_12, %c0_13] : memref<80x128xf32, #tpu.memory_space<vmem>>, vector<80x128xf32>
    %37 = arith.addf %36, %29 : vector<80x128xf32>
    %c0_14 = arith.constant 0 : index
    %c0_15 = arith.constant 0 : index
    %38 = vector.load %arg8[%c0_14, %c0_15] : memref<80x128xf32, #tpu.memory_space<vmem>>, vector<80x128xf32>
    tpu.vector_store %arg8[%c0_14, %c0_15], %37 {strides = array<i32>} : memref<80x128xf32, #tpu.memory_space<vmem>>, vector<80x128xf32>,
    %c0_16 = arith.constant 0 : index
    %c0_17 = arith.constant 0 : index
    %39 = vector.load %arg9[%c0_16, %c0_17] : memref<80x128xf32, #tpu.memory_space<vmem>>, vector<80x128xf32>
    %40 = arith.addf %39, %21 : vector<80x128xf32>
    %c0_18 = arith.constant 0 : index
    %c0_19 = arith.constant 0 : index
    %41 = vector.load %arg9[%c0_18, %c0_19] : memref<80x128xf32, #tpu.memory_space<vmem>>, vector<80x128xf32>
    tpu.vector_store %arg9[%c0_18, %c0_19], %40 {strides = array<i32>} : memref<80x128xf32, #tpu.memory_space<vmem>>, vector<80x128xf32>,
    %c0_20 = arith.constant 0 : index
    %c0_21 = arith.constant 0 : index
    %42 = vector.load %arg10[%c0_20, %c0_21] : memref<80x128xf32, #tpu.memory_space<vmem>>, vector<80x128xf32>
    %43 = arith.addf %42, %35 : vector<80x128xf32>
    %c0_22 = arith.constant 0 : index
    %c0_23 = arith.constant 0 : index
    %44 = vector.load %arg10[%c0_22, %c0_23] : memref<80x128xf32, #tpu.memory_space<vmem>>, vector<80x128xf32>
    tpu.vector_store %arg10[%c0_22, %c0_23], %43 {strides = array<i32>} : memref<80x128xf32, #tpu.memory_space<vmem>>, vector<80x128xf32>,
    %c0_i32_24 = arith.constant 0 : i32
    %45 = arith.cmpi eq, %arg1, %c0_i32_24 : i32
    %46 = arith.extui %45 : i1 to i32
    %c0_i32_25 = arith.constant 0 : i32
    %47 = arith.cmpi ne, %46, %c0_i32_25 : i32
    scf.if %47 {
      %48 = tpu.iota {dimensions = array<i32: 0>} : vector<8x128xi32>
      %49 = tpu.iota {dimensions = array<i32: 1>} : vector<8x128xi32>
      %c0_i32_26 = arith.constant 0 : i32
      %50 = vector.broadcast %c0_i32_26 : i32 to vector<8x128xi32>
      %51 = arith.cmpi eq, %48, %50 : vector<8x128xi32>
      %c0_i32_27 = arith.constant 0 : i32
      %52 = vector.broadcast %c0_i32_27 : i32 to vector<8x128xi32>
      %53 = arith.cmpi eq, %49, %52 : vector<8x128xi32>
      %54 = arith.andi %51, %53 : vector<8x128xi1>
      %c0_28 = arith.constant 0 : index
      %c0_29 = arith.constant 0 : index
      %55 = vector.load %arg8[%c0_28, %c0_29] : memref<80x128xf32, #tpu.memory_space<vmem>>, vector<80x128xf32>
      %56 = vector.shape_cast %55 : vector<80x128xf32> to vector<1x80x128xf32>
      %cst_30 = arith.constant dense<0.000000e+00> : vector<1xf32>
      %57 = vector.multi_reduction <add>, %56, %cst_30 [1, 2] : vector<1x80x128xf32> to vector<1xf32>
      %58 = vector.shape_cast %57 : vector<1xf32> to vector<1x1x1xf32>
      %59 = vector.extract %58[0, 0, 0] : f32 from vector<1x1x1xf32>
      %cst_31 = arith.constant 0.000000e+00 : f32
      %60 = vector.broadcast %59 : f32 to vector<8x128xf32>
      %61 = vector.broadcast %cst_31 : f32 to vector<8x128xf32>
      %62 = arith.select %54, %60, %61 : vector<8x128xi1>, vector<8x128xf32>
      %c0_32 = arith.constant 0 : index
      %c0_33 = arith.constant 0 : index
      %63 = vector.load %arg5[%c0_32, %c0_33] : memref<8x128xf32, #tpu.memory_space<vmem>>, vector<8x128xf32>
      tpu.vector_store %arg5[%c0_32, %c0_33], %62 {strides = array<i32>} : memref<8x128xf32, #tpu.memory_space<vmem>>, vector<8x128xf32>,
      %c0_34 = arith.constant 0 : index
      %c0_35 = arith.constant 0 : index
      %64 = vector.load %arg9[%c0_34, %c0_35] : memref<80x128xf32, #tpu.memory_space<vmem>>, vector<80x128xf32>
      %65 = vector.shape_cast %64 : vector<80x128xf32> to vector<1x80x128xf32>
      %cst_36 = arith.constant dense<0.000000e+00> : vector<1xf32>
      %66 = vector.multi_reduction <add>, %65, %cst_36 [1, 2] : vector<1x80x128xf32> to vector<1xf32>
      %67 = vector.shape_cast %66 : vector<1xf32> to vector<1x1x1xf32>
      %68 = vector.extract %67[0, 0, 0] : f32 from vector<1x1x1xf32>
      %cst_37 = arith.constant 0.000000e+00 : f32
      %69 = vector.broadcast %68 : f32 to vector<8x128xf32>
      %70 = vector.broadcast %cst_37 : f32 to vector<8x128xf32>
      %71 = arith.select %54, %69, %70 : vector<8x128xi1>, vector<8x128xf32>
      %c0_38 = arith.constant 0 : index
      %c0_39 = arith.constant 0 : index
      %72 = vector.load %arg6[%c0_38, %c0_39] : memref<8x128xf32, #tpu.memory_space<vmem>>, vector<8x128xf32>
      tpu.vector_store %arg6[%c0_38, %c0_39], %71 {strides = array<i32>} : memref<8x128xf32, #tpu.memory_space<vmem>>, vector<8x128xf32>,
      %c0_40 = arith.constant 0 : index
      %c0_41 = arith.constant 0 : index
      %73 = vector.load %arg10[%c0_40, %c0_41] : memref<80x128xf32, #tpu.memory_space<vmem>>, vector<80x128xf32>
      %74 = vector.shape_cast %73 : vector<80x128xf32> to vector<1x80x128xf32>
      %cst_42 = arith.constant dense<0.000000e+00> : vector<1xf32>
      %75 = vector.multi_reduction <add>, %74, %cst_42 [1, 2] : vector<1x80x128xf32> to vector<1xf32>
      %76 = vector.shape_cast %75 : vector<1xf32> to vector<1x1x1xf32>
      %77 = vector.extract %76[0, 0, 0] : f32 from vector<1x1x1xf32>
      %cst_43 = arith.constant 0.000000e+00 : f32
      %78 = vector.broadcast %77 : f32 to vector<8x128xf32>
      %79 = vector.broadcast %cst_43 : f32 to vector<8x128xf32>
      %80 = arith.select %54, %78, %79 : vector<8x128xi1>, vector<8x128xf32>
      %c0_44 = arith.constant 0 : index
      %c0_45 = arith.constant 0 : index
      %81 = vector.load %arg7[%c0_44, %c0_45] : memref<8x128xf32, #tpu.memory_space<vmem>>, vector<8x128xf32>
      tpu.vector_store %arg7[%c0_44, %c0_45], %80 {strides = array<i32>} : memref<8x128xf32, #tpu.memory_space<vmem>>, vector<8x128xf32>,
    } else {
    }
    return
  }
  func.func @transform_0(%arg0: i32, %arg1: i32) -> (i32, i32) {
    %c0_i32 = arith.constant 0 : i32
    %c0_i32_0 = arith.constant 0 : i32
    return %arg0, %c0_i32 : i32, i32
  }
  func.func @transform_1(%arg0: i32, %arg1: i32) -> (i32, i32) {
    %c0_i32 = arith.constant 0 : i32
    %c0_i32_0 = arith.constant 0 : i32
    return %arg0, %c0_i32 : i32, i32
  }
  func.func @transform_2(%arg0: i32, %arg1: i32) -> (i32, i32) {
    %c0_i32 = arith.constant 0 : i32
    %c0_i32_0 = arith.constant 0 : i32
    return %arg1, %c0_i32 : i32, i32
  }
  func.func @transform_3(%arg0: i32, %arg1: i32) -> (i32, i32) {
    %c0_i32 = arith.constant 0 : i32
    %c0_i32_0 = arith.constant 0 : i32
    return %arg0, %c0_i32 : i32, i32
  }
  func.func @transform_4(%arg0: i32, %arg1: i32) -> (i32, i32) {
    %c0_i32 = arith.constant 0 : i32
    %c0_i32_0 = arith.constant 0 : i32
    return %arg0, %c0_i32 : i32, i32
  }
  func.func @transform_5(%arg0: i32, %arg1: i32) -> (i32, i32) {
    %c0_i32 = arith.constant 0 : i32
    %c0_i32_0 = arith.constant 0 : i32
    return %arg0, %c0_i32 : i32, i32
  }
}

</mosaic_0001>

<llo_original>
// kernel: multi_resolution_stft_loss.4
$region0: #{multi_resolution_stft_loss.4}
  #allocation0 [shape = 'u32[]', space=smem, size = 0x4, offset = 0x4, fixed_abs, tag = 'smem constant byte address 0x4 - core index']
  #allocation1 [shape = 'u32[72,128]{1,0:T(1,128)}', space=vmem, size = 0x9000, scoped, tag = 'internal scratch']
  #allocation2 [shape = 'f32[32,256]{1,0:T(8,128)}', space=vmem, size = 0x8000, scoped, tag = 'scratch operand']
  #allocation3 [shape = 'f32[32,256]{1,0:T(8,128)}', space=vmem, size = 0x8000, scoped, tag = 'scratch operand']
  #allocation4 [shape = 'f32[32,256]{1,0:T(8,128)}', space=vmem, size = 0x8000, scoped, tag = 'scratch operand']
  %s0 = inlined_call_operand.vmem [shape: f32[32,256], index: 0, kind: input, shape index: {}]
  %s1 = inlined_call_operand.vmem [shape: f32[32,256], index: 1, kind: input, shape index: {}]
  %s2 = inlined_call_operand.vmem [shape: f32[256,512], index: 2, kind: input, shape index: {}]
  %s3 = inlined_call_operand.vmem [shape: f32[8,128], index: 3, kind: output, shape index: {0}]
  %s4 = inlined_call_operand.vmem [shape: f32[8,128], index: 4, kind: output, shape index: {1}]
  %s5 = inlined_call_operand.vmem [shape: f32[8,128], index: 5, kind: output, shape index: {2}]
  %6 = xla_tuple %s3, %s4, %s5
  %s7 = sld [smem:[#allocation0]]
  $region46: #{multi_resolution_stft_loss.4} parent=0
    _
  %s9 = ssub.s32 1, %s7
  %s10 = scalar_select 0, %s9, %s7
  // Predicated region
  $region2: #{multi_resolution_stft_loss.4} parent=0 // pred_check
    _
  $region3: #{multi_resolution_stft_loss.4} parent=0 // pred_check_branch
    %12 = sbr.rel (0) target = $region5
  $region4: #{multi_resolution_stft_loss.4} parent=0 // pred_region
    _
  $region5: #{multi_resolution_stft_loss.4} parent=0 // pred_fallthru
    _
  // Predicated region
  $region6: #{multi_resolution_stft_loss.4} parent=0 // pred_check
    _
  $region7: #{multi_resolution_stft_loss.4} parent=0 // pred_check_branch
    %14 = sbr.rel (0) target = $region9
  $region8: #{multi_resolution_stft_loss.4} parent=0 // pred_region
    _
  $region9: #{multi_resolution_stft_loss.4} parent=0 // pred_fallthru
    _
  // Predicated region
  $region10: #{multi_resolution_stft_loss.4} parent=0 // pred_check
    _
  $region11: #{multi_resolution_stft_loss.4} parent=0 // pred_check_branch
    %16 = sbr.rel (0) target = $region13
  $region12: #{multi_resolution_stft_loss.4} parent=0 // pred_region
    _
  $region13: #{multi_resolution_stft_loss.4} parent=0 // pred_fallthru
    _
  %p17 = scmp.eq.s32.totalorder 0, 0
  // Predicated region
  $region14: #{multi_resolution_stft_loss.4} parent=0 // pred_check
    %p18 = pneg %p17
  $region15: #{multi_resolution_stft_loss.4} parent=0 // pred_check_branch
    %20 = sbr.rel (%p18) target = $region17
  $region16: #{multi_resolution_stft_loss.4} parent=0 // pred_region
    %21 = vst [vmem:[#allocation2] sm:$0xff] 0.0
    %22 = vst [vmem:[#allocation2 + $0x8] sm:$0xff] 0.0
    %23 = vst [vmem:[#allocation2 + $0x10] sm:$0xff] 0.0
    %24 = vst [vmem:[#allocation2 + $0x18] sm:$0xff] 0.0
    %25 = vst [vmem:[#allocation2 + $0x20] sm:$0xff] 0.0
    %26 = vst [vmem:[#allocation2 + $0x28] sm:$0xff] 0.0
    %27 = vst [vmem:[#allocation2 + $0x30] sm:$0xff] 0.0
    %28 = vst [vmem:[#allocation2 + $0x38] sm:$0xff] 0.0
    %29 = vst [vmem:[#allocation3] sm:$0xff] 0.0
    %30 = vst [vmem:[#allocation3 + $0x8] sm:$0xff] 0.0
    %31 = vst [vmem:[#allocation3 + $0x10] sm:$0xff] 0.0
    %32 = vst [vmem:[#allocation3 + $0x18] sm:$0xff] 0.0
    %33 = vst [vmem:[#allocation3 + $0x20] sm:$0xff] 0.0
    %34 = vst [vmem:[#allocation3 + $0x28] sm:$0xff] 0.0
    %35 = vst [vmem:[#allocation3 + $0x30] sm:$0xff] 0.0
    %36 = vst [vmem:[#allocation3 + $0x38] sm:$0xff] 0.0
    %37 = vst [vmem:[#allocation4] sm:$0xff] 0.0
    %38 = vst [vmem:[#allocation4 + $0x8] sm:$0xff] 0.0
    %39 = vst [vmem:[#allocation4 + $0x10] sm:$0xff] 0.0
    %40 = vst [vmem:[#allocation4 + $0x18] sm:$0xff] 0.0
    %41 = vst [vmem:[#allocation4 + $0x20] sm:$0xff] 0.0
    %42 = vst [vmem:[#allocation4 + $0x28] sm:$0xff] 0.0
    %43 = vst [vmem:[#allocation4 + $0x30] sm:$0xff] 0.0
    %44 = vst [vmem:[#allocation4 + $0x38] sm:$0xff] 0.0
  $region17: #{multi_resolution_stft_loss.4} parent=0 // pred_fallthru
    _
  %v45 = vld [vmem:[%s2] sm:$0xff]
  %v46 = vld [vmem:[%s2 + $0x8] sm:$0xff]
  %v47 = vld [vmem:[%s2 + $0x10] sm:$0xff]
  %v48 = vld [vmem:[%s2 + $0x18] sm:$0xff]
  %v49 = vld [vmem:[%s2 + $0x20] sm:$0xff]
  %v50 = vld [vmem:[%s2 + $0x28] sm:$0xff]
  %v51 = vld [vmem:[%s2 + $0x30] sm:$0xff]
  %v52 = vld [vmem:[%s2 + $0x38] sm:$0xff]
  %v53 = vld [vmem:[%s2 + $0x40] sm:$0xff]
  %v54 = vld [vmem:[%s2 + $0x48] sm:$0xff]
  %v55 = vld [vmem:[%s2 + $0x50] sm:$0xff]
  %v56 = vld [vmem:[%s2 + $0x58] sm:$0xff]
  %v57 = vld [vmem:[%s2 + $0x60] sm:$0xff]
  %v58 = vld [vmem:[%s2 + $0x68] sm:$0xff]
  %v59 = vld [vmem:[%s2 + $0x70] sm:$0xff]
  %v60 = vld [vmem:[%s2 + $0x78] sm:$0xff]
  %v61 = vld [vmem:[%s2 + $0x80] sm:$0xff]
  %v62 = vld [vmem:[%s2 + $0x88] sm:$0xff]
  %v63 = vld [vmem:[%s2 + $0x90] sm:$0xff]
  %v64 = vld [vmem:[%s2 + $0x98] sm:$0xff]
  %v65 = vld [vmem:[%s2 + $0xa0] sm:$0xff]
  %v66 = vld [vmem:[%s2 + $0xa8] sm:$0xff]
  %v67 = vld [vmem:[%s2 + $0xb0] sm:$0xff]
  %v68 = vld [vmem:[%s2 + $0xb8] sm:$0xff]
  %v69 = vld [vmem:[%s2 + $0xc0] sm:$0xff]
  %v70 = vld [vmem:[%s2 + $0xc8] sm:$0xff]
  %v71 = vld [vmem:[%s2 + $0xd0] sm:$0xff]
  %v72 = vld [vmem:[%s2 + $0xd8] sm:$0xff]
  %v73 = vld [vmem:[%s2 + $0xe0] sm:$0xff]
  %v74 = vld [vmem:[%s2 + $0xe8] sm:$0xff]
  %v75 = vld [vmem:[%s2 + $0xf0] sm:$0xff]
  %v76 = vld [vmem:[%s2 + $0xf8] sm:$0xff]
  %v77 = vld [vmem:[%s2 + $0x100] sm:$0xff]
  %v78 = vld [vmem:[%s2 + $0x108] sm:$0xff]
  %v79 = vld [vmem:[%s2 + $0x110] sm:$0xff]
  %v80 = vld [vmem:[%s2 + $0x118] sm:$0xff]
  %v81 = vld [vmem:[%s2 + $0x120] sm:$0xff]
  %v82 = vld [vmem:[%s2 + $0x128] sm:$0xff]
  %v83 = vld [vmem:[%s2 + $0x130] sm:$0xff]
  %v84 = vld [vmem:[%s2 + $0x138] sm:$0xff]
  %v85 = vld [vmem:[%s2 + $0x140] sm:$0xff]
  %v86 = vld [vmem:[%s2 + $0x148] sm:$0xff]
  %v87 = vld [vmem:[%s2 + $0x150] sm:$0xff]
  %v88 = vld [vmem:[%s2 + $0x158] sm:$0xff]
  %v89 = vld [vmem:[%s2 + $0x160] sm:$0xff]
  %v90 = vld [vmem:[%s2 + $0x168] sm:$0xff]
  %v91 = vld [vmem:[%s2 + $0x170] sm:$0xff]
  %v92 = vld [vmem:[%s2 + $0x178] sm:$0xff]
  %v93 = vld [vmem:[%s2 + $0x180] sm:$0xff]
  %v94 = vld [vmem:[%s2 + $0x188] sm:$0xff]
  %v95 = vld [vmem:[%s2 + $0x190] sm:$0xff]
  %v96 = vld [vmem:[%s2 + $0x198] sm:$0xff]
  %v97 = vld [vmem:[%s2 + $0x1a0] sm:$0xff]
  %v98 = vld [vmem:[%s2 + $0x1a8] sm:$0xff]
  %v99 = vld [vmem:[%s2 + $0x1b0] sm:$0xff]
  %v100 = vld [vmem:[%s2 + $0x1b8] sm:$0xff]
  %v101 = vld [vmem:[%s2 + $0x1c0] sm:$0xff]
  %v102 = vld [vmem:[%s2 + $0x1c8] sm:$0xff]
  %v103 = vld [vmem:[%s2 + $0x1d0] sm:$0xff]
  %v104 = vld [vmem:[%s2 + $0x1d8] sm:$0xff]
  %v105 = vld [vmem:[%s2 + $0x1e0] sm:$0xff]
  %v106 = vld [vmem:[%s2 + $0x1e8] sm:$0xff]
  %v107 = vld [vmem:[%s2 + $0x1f0] sm:$0xff]
  %v108 = vld [vmem:[%s2 + $0x1f8] sm:$0xff]
  %v109 = vld [vmem:[%s2 + $0x200] sm:$0xff]
  %v110 = vld [vmem:[%s2 + $0x208] sm:$0xff]
  %v111 = vld [vmem:[%s2 + $0x210] sm:$0xff]
  %v112 = vld [vmem:[%s2 + $0x218] sm:$0xff]
  %v113 = vld [vmem:[%s2 + $0x220] sm:$0xff]
  %v114 = vld [vmem:[%s2 + $0x228] sm:$0xff]
  %v115 = vld [vmem:[%s2 + $0x230] sm:$0xff]
  %v116 = vld [vmem:[%s2 + $0x238] sm:$0xff]
  %v117 = vld [vmem:[%s2 + $0x240] sm:$0xff]
  %v118 = vld [vmem:[%s2 + $0x248] sm:$0xff]
  %v119 = vld [vmem:[%s2 + $0x250] sm:$0xff]
  %v120 = vld [vmem:[%s2 + $0x258] sm:$0xff]
  %v121 = vld [vmem:[%s2 + $0x260] sm:$0xff]
  %v122 = vld [vmem:[%s2 + $0x268] sm:$0xff]
  %v123 = vld [vmem:[%s2 + $0x270] sm:$0xff]
  %v124 = vld [vmem:[%s2 + $0x278] sm:$0xff]
  %v125 = vld [vmem:[%s2 + $0x280] sm:$0xff]
  %v126 = vld [vmem:[%s2 + $0x288] sm:$0xff]
  %v127 = vld [vmem:[%s2 + $0x290] sm:$0xff]
  %v128 = vld [vmem:[%s2 + $0x298] sm:$0xff]
  %v129 = vld [vmem:[%s2 + $0x2a0] sm:$0xff]
  %v130 = vld [vmem:[%s2 + $0x2a8] sm:$0xff]
  %v131 = vld [vmem:[%s2 + $0x2b0] sm:$0xff]
  %v132 = vld [vmem:[%s2 + $0x2b8] sm:$0xff]
  %v133 = vld [vmem:[%s2 + $0x2c0] sm:$0xff]
  %v134 = vld [vmem:[%s2 + $0x2c8] sm:$0xff]
  %v135 = vld [vmem:[%s2 + $0x2d0] sm:$0xff]
  %v136 = vld [vmem:[%s2 + $0x2d8] sm:$0xff]
  %v137 = vld [vmem:[%s2 + $0x2e0] sm:$0xff]
  %v138 = vld [vmem:[%s2 + $0x2e8] sm:$0xff]
  %v139 = vld [vmem:[%s2 + $0x2f0] sm:$0xff]
  %v140 = vld [vmem:[%s2 + $0x2f8] sm:$0xff]
  %v141 = vld [vmem:[%s2 + $0x300] sm:$0xff]
  %v142 = vld [vmem:[%s2 + $0x308] sm:$0xff]
  %v143 = vld [vmem:[%s2 + $0x310] sm:$0xff]
  %v144 = vld [vmem:[%s2 + $0x318] sm:$0xff]
  %v145 = vld [vmem:[%s2 + $0x320] sm:$0xff]
  %v146 = vld [vmem:[%s2 + $0x328] sm:$0xff]
  %v147 = vld [vmem:[%s2 + $0x330] sm:$0xff]
  %v148 = vld [vmem:[%s2 + $0x338] sm:$0xff]
  %v149 = vld [vmem:[%s2 + $0x340] sm:$0xff]
  %v150 = vld [vmem:[%s2 + $0x348] sm:$0xff]
  %v151 = vld [vmem:[%s2 + $0x350] sm:$0xff]
  %v152 = vld [vmem:[%s2 + $0x358] sm:$0xff]
  %v153 = vld [vmem:[%s2 + $0x360] sm:$0xff]
  %v154 = vld [vmem:[%s2 + $0x368] sm:$0xff]
  %v155 = vld [vmem:[%s2 + $0x370] sm:$0xff]
  %v156 = vld [vmem:[%s2 + $0x378] sm:$0xff]
  %v157 = vld [vmem:[%s2 + $0x380] sm:$0xff]
  %v158 = vld [vmem:[%s2 + $0x388] sm:$0xff]
  %v159 = vld [vmem:[%s2 + $0x390] sm:$0xff]
  %v160 = vld [vmem:[%s2 + $0x398] sm:$0xff]
  %v161 = vld [vmem:[%s2 + $0x3a0] sm:$0xff]
  %v162 = vld [vmem:[%s2 + $0x3a8] sm:$0xff]
  %v163 = vld [vmem:[%s2 + $0x3b0] sm:$0xff]
  %v164 = vld [vmem:[%s2 + $0x3b8] sm:$0xff]
  %v165 = vld [vmem:[%s2 + $0x3c0] sm:$0xff]
  %v166 = vld [vmem:[%s2 + $0x3c8] sm:$0xff]
  %v167 = vld [vmem:[%s2 + $0x3d0] sm:$0xff]
  %v168 = vld [vmem:[%s2 + $0x3d8] sm:$0xff]
  %v169 = vld [vmem:[%s2 + $0x3e0] sm:$0xff]
  %v170 = vld [vmem:[%s2 + $0x3e8] sm:$0xff]
  %v171 = vld [vmem:[%s2 + $0x3f0] sm:$0xff]
  %v172 = vld [vmem:[%s2 + $0x3f8] sm:$0xff]
  %v173 = vld [vmem:[%s0] sm:$0xff]
  %v174 = vld [vmem:[%s0 + $0x8] sm:$0xff]
  %v175 = vld [vmem:[%s0 + $0x10] sm:$0xff]
  %v176 = vld [vmem:[%s0 + $0x18] sm:$0xff]
  %v177 = vld [vmem:[%s0 + $0x20] sm:$0xff]
  %v178 = vld [vmem:[%s0 + $0x28] sm:$0xff]
  %v179 = vld [vmem:[%s0 + $0x30] sm:$0xff]
  %v180 = vld [vmem:[%s0 + $0x38] sm:$0xff]
  %181 = vmatpush.msra.mxu0 %v105
  %182 = vmatpush.msra.mxu0 %v101
  %183 = vmatpush.msra.mxu0 %v97
  %184 = vmatpush.msra.mxu0 %v93
  %185 = vmatpush.msra.mxu0 %v89
  %186 = vmatpush.msra.mxu0 %v85
  %187 = vmatpush.msra.mxu0 %v81
  %188 = vmatpush.msra.mxu0 %v77
  %189 = vmatpush.msra.mxu0 %v73
  %190 = vmatpush.msra.mxu0 %v69
  %191 = vmatpush.msra.mxu0 %v65
  %192 = vmatpush.msra.mxu0 %v61
  %193 = vmatpush.msra.mxu0 %v57
  %194 = vmatpush.msra.mxu0 %v53
  %195 = vmatpush.msra.mxu0 %v49
  %196 = vmatpush.msra.mxu0 %v45
  %197 = vmatmul.f32.gmra.mxu0 %v173
  %v198 = vpop.f32.mrf.mxu0
  %v199 = vadd.f32 0.0, %v198
  %200 = vmatmul.f32.gmra.mxu0 %v175
  %v201 = vpop.f32.mrf.mxu0
  %v202 = vadd.f32 0.0, %v201
  %203 = vmatmul.f32.gmra.mxu0 %v177
  %v204 = vpop.f32.mrf.mxu0
  %v205 = vadd.f32 0.0, %v204
  %206 = vmatmul.f32.gmra.mxu0 %v179
  %v207 = vpop.f32.mrf.mxu0
  %v208 = vadd.f32 0.0, %v207
  %209 = vdwg.mxu0
  %210 = vmatpush.msra.mxu0 %v169
  %211 = vmatpush.msra.mxu0 %v165
  %212 = vmatpush.msra.mxu0 %v161
  %213 = vmatpush.msra.mxu0 %v157
  %214 = vmatpush.msra.mxu0 %v153
  %215 = vmatpush.msra.mxu0 %v149
  %216 = vmatpush.msra.mxu0 %v145
  %217 = vmatpush.msra.mxu0 %v141
  %218 = vmatpush.msra.mxu0 %v137
  %219 = vmatpush.msra.mxu0 %v133
  %220 = vmatpush.msra.mxu0 %v129
  %221 = vmatpush.msra.mxu0 %v125
  %222 = vmatpush.msra.mxu0 %v121
  %223 = vmatpush.msra.mxu0 %v117
  %224 = vmatpush.msra.mxu0 %v113
  %225 = vmatpush.msra.mxu0 %v109
  %226 = vmatmul.f32.gmra.mxu0 %v174
  %v227 = vpop.f32.mrf.mxu0
  %v228 = vadd.f32 %v199, %v227
  %229 = vmatmul.f32.gmra.mxu0 %v176
  %v230 = vpop.f32.mrf.mxu0
  %v231 = vadd.f32 %v202, %v230
  %232 = vmatmul.f32.gmra.mxu0 %v178
  %v233 = vpop.f32.mrf.mxu0
  %v234 = vadd.f32 %v205, %v233
  %235 = vmatmul.f32.gmra.mxu0 %v180
  %v236 = vpop.f32.mrf.mxu0
  %v237 = vadd.f32 %v208, %v236
  %238 = vdwg.mxu0
  %239 = vmatpush.msra.mxu0 %v106
  %240 = vmatpush.msra.mxu0 %v102
  %241 = vmatpush.msra.mxu0 %v98
  %242 = vmatpush.msra.mxu0 %v94
  %243 = vmatpush.msra.mxu0 %v90
  %244 = vmatpush.msra.mxu0 %v86
  %245 = vmatpush.msra.mxu0 %v82
  %246 = vmatpush.msra.mxu0 %v78
  %247 = vmatpush.msra.mxu0 %v74
  %248 = vmatpush.msra.mxu0 %v70
  %249 = vmatpush.msra.mxu0 %v66
  %250 = vmatpush.msra.mxu0 %v62
  %251 = vmatpush.msra.mxu0 %v58
  %252 = vmatpush.msra.mxu0 %v54
  %253 = vmatpush.msra.mxu0 %v50
  %254 = vmatpush.msra.mxu0 %v46
  %255 = vmatmul.f32.gmra.mxu0 %v173
  %v256 = vpop.f32.mrf.mxu0
  %v257 = vadd.f32 0.0, %v256
  %258 = vmatmul.f32.gmra.mxu0 %v175
  %v259 = vpop.f32.mrf.mxu0
  %v260 = vadd.f32 0.0, %v259
  %261 = vmatmul.f32.gmra.mxu0 %v177
  %v262 = vpop.f32.mrf.mxu0
  %v263 = vadd.f32 0.0, %v262
  %264 = vmatmul.f32.gmra.mxu0 %v179
  %v265 = vpop.f32.mrf.mxu0
  %v266 = vadd.f32 0.0, %v265
  %267 = vdwg.mxu0
  %268 = vmatpush.msra.mxu0 %v170
  %269 = vmatpush.msra.mxu0 %v166
  %270 = vmatpush.msra.mxu0 %v162
  %271 = vmatpush.msra.mxu0 %v158
  %272 = vmatpush.msra.mxu0 %v154
  %273 = vmatpush.msra.mxu0 %v150
  %274 = vmatpush.msra.mxu0 %v146
  %275 = vmatpush.msra.mxu0 %v142
  %276 = vmatpush.msra.mxu0 %v138
  %277 = vmatpush.msra.mxu0 %v134
  %278 = vmatpush.msra.mxu0 %v130
  %279 = vmatpush.msra.mxu0 %v126
  %280 = vmatpush.msra.mxu0 %v122
  %281 = vmatpush.msra.mxu0 %v118
  %282 = vmatpush.msra.mxu0 %v114
  %283 = vmatpush.msra.mxu0 %v110
  %284 = vmatmul.f32.gmra.mxu0 %v174
  %v285 = vpop.f32.mrf.mxu0
  %v286 = vadd.f32 %v257, %v285
  %287 = vmatmul.f32.gmra.mxu0 %v176
  %v288 = vpop.f32.mrf.mxu0
  %v289 = vadd.f32 %v260, %v288
  %290 = vmatmul.f32.gmra.mxu0 %v178
  %v291 = vpop.f32.mrf.mxu0
  %v292 = vadd.f32 %v263, %v291
  %293 = vmatmul.f32.gmra.mxu0 %v180
  %v294 = vpop.f32.mrf.mxu0
  %v295 = vadd.f32 %v266, %v294
  %296 = vdwg.mxu0
  %297 = vmatpush.msra.mxu0 %v107
  %298 = vmatpush.msra.mxu0 %v103
  %299 = vmatpush.msra.mxu0 %v99
  %300 = vmatpush.msra.mxu0 %v95
  %301 = vmatpush.msra.mxu0 %v91
  %302 = vmatpush.msra.mxu0 %v87
  %303 = vmatpush.msra.mxu0 %v83
  %304 = vmatpush.msra.mxu0 %v79
  %305 = vmatpush.msra.mxu0 %v75
  %306 = vmatpush.msra.mxu0 %v71
  %307 = vmatpush.msra.mxu0 %v67
  %308 = vmatpush.msra.mxu0 %v63
  %309 = vmatpush.msra.mxu0 %v59
  %310 = vmatpush.msra.mxu0 %v55
  %311 = vmatpush.msra.mxu0 %v51
  %312 = vmatpush.msra.mxu0 %v47
  %313 = vmatmul.f32.gmra.mxu0 %v173
  %v314 = vpop.f32.mrf.mxu0
  %v315 = vadd.f32 0.0, %v314
  %316 = vmatmul.f32.gmra.mxu0 %v175
  %v317 = vpop.f32.mrf.mxu0
  %v318 = vadd.f32 0.0, %v317
  %319 = vmatmul.f32.gmra.mxu0 %v177
  %v320 = vpop.f32.mrf.mxu0
  %v321 = vadd.f32 0.0, %v320
  %322 = vmatmul.f32.gmra.mxu0 %v179
  %v323 = vpop.f32.mrf.mxu0
  %v324 = vadd.f32 0.0, %v323
  %325 = vdwg.mxu0
  %326 = vmatpush.msra.mxu0 %v171
  %327 = vmatpush.msra.mxu0 %v167
  %328 = vmatpush.msra.mxu0 %v163
  %329 = vmatpush.msra.mxu0 %v159
  %330 = vmatpush.msra.mxu0 %v155
  %331 = vmatpush.msra.mxu0 %v151
  %332 = vmatpush.msra.mxu0 %v147
  %333 = vmatpush.msra.mxu0 %v143
  %334 = vmatpush.msra.mxu0 %v139
  %335 = vmatpush.msra.mxu0 %v135
  %336 = vmatpush.msra.mxu0 %v131
  %337 = vmatpush.msra.mxu0 %v127
  %338 = vmatpush.msra.mxu0 %v123
  %339 = vmatpush.msra.mxu0 %v119
  %340 = vmatpush.msra.mxu0 %v115
  %341 = vmatpush.msra.mxu0 %v111
  %342 = vmatmul.f32.gmra.mxu0 %v174
  %v343 = vpop.f32.mrf.mxu0
  %v344 = vadd.f32 %v315, %v343
  %345 = vmatmul.f32.gmra.mxu0 %v176
  %v346 = vpop.f32.mrf.mxu0
  %v347 = vadd.f32 %v318, %v346
  %348 = vmatmul.f32.gmra.mxu0 %v178
  %v349 = vpop.f32.mrf.mxu0
  %v350 = vadd.f32 %v321, %v349
  %351 = vmatmul.f32.gmra.mxu0 %v180
  %v352 = vpop.f32.mrf.mxu0
  %v353 = vadd.f32 %v324, %v352
  %354 = vdwg.mxu0
  %355 = vmatpush.msra.mxu0 %v108
  %356 = vmatpush.msra.mxu0 %v104
  %357 = vmatpush.msra.mxu0 %v100
  %358 = vmatpush.msra.mxu0 %v96
  %359 = vmatpush.msra.mxu0 %v92
  %360 = vmatpush.msra.mxu0 %v88
  %361 = vmatpush.msra.mxu0 %v84
  %362 = vmatpush.msra.mxu0 %v80
  %363 = vmatpush.msra.mxu0 %v76
  %364 = vmatpush.msra.mxu0 %v72
  %365 = vmatpush.msra.mxu0 %v68
  %366 = vmatpush.msra.mxu0 %v64
  %367 = vmatpush.msra.mxu0 %v60
  %368 = vmatpush.msra.mxu0 %v56
  %369 = vmatpush.msra.mxu0 %v52
  %370 = vmatpush.msra.mxu0 %v48
  %371 = vmatmul.f32.gmra.mxu0 %v173
  %v372 = vpop.f32.mrf.mxu0
  %v373 = vadd.f32 0.0, %v372
  %374 = vmatmul.f32.gmra.mxu0 %v175
  %v375 = vpop.f32.mrf.mxu0
  %v376 = vadd.f32 0.0, %v375
  %377 = vmatmul.f32.gmra.mxu0 %v177
  %v378 = vpop.f32.mrf.mxu0
  %v379 = vadd.f32 0.0, %v378
  %380 = vmatmul.f32.gmra.mxu0 %v179
  %v381 = vpop.f32.mrf.mxu0
  %v382 = vadd.f32 0.0, %v381
  %383 = vdwg.mxu0
  %384 = vmatpush.msra.mxu0 %v172
  %385 = vmatpush.msra.mxu0 %v168
  %386 = vmatpush.msra.mxu0 %v164
  %387 = vmatpush.msra.mxu0 %v160
  %388 = vmatpush.msra.mxu0 %v156
  %389 = vmatpush.msra.mxu0 %v152
  %390 = vmatpush.msra.mxu0 %v148
  %391 = vmatpush.msra.mxu0 %v144
  %392 = vmatpush.msra.mxu0 %v140
  %393 = vmatpush.msra.mxu0 %v136
  %394 = vmatpush.msra.mxu0 %v132
  %395 = vmatpush.msra.mxu0 %v128
  %396 = vmatpush.msra.mxu0 %v124
  %397 = vmatpush.msra.mxu0 %v120
  %398 = vmatpush.msra.mxu0 %v116
  %399 = vmatpush.msra.mxu0 %v112
  %400 = vmatmul.f32.gmra.mxu0 %v174
  %v401 = vpop.f32.mrf.mxu0
  %v402 = vadd.f32 %v373, %v401
  %403 = vmatmul.f32.gmra.mxu0 %v176
  %v404 = vpop.f32.mrf.mxu0
  %v405 = vadd.f32 %v376, %v404
  %406 = vmatmul.f32.gmra.mxu0 %v178
  %v407 = vpop.f32.mrf.mxu0
  %v408 = vadd.f32 %v379, %v407
  %409 = vmatmul.f32.gmra.mxu0 %v180
  %v410 = vpop.f32.mrf.mxu0
  %v411 = vadd.f32 %v382, %v410
  %412 = vdwg.mxu0
  %v413 = vld [vmem:[%s1] sm:$0xff]
  %v414 = vld [vmem:[%s1 + $0x8] sm:$0xff]
  %v415 = vld [vmem:[%s1 + $0x10] sm:$0xff]
  %v416 = vld [vmem:[%s1 + $0x18] sm:$0xff]
  %v417 = vld [vmem:[%s1 + $0x20] sm:$0xff]
  %v418 = vld [vmem:[%s1 + $0x28] sm:$0xff]
  %v419 = vld [vmem:[%s1 + $0x30] sm:$0xff]
  %v420 = vld [vmem:[%s1 + $0x38] sm:$0xff]
  %421 = vmatpush.msra.mxu0 %v105
  %422 = vmatpush.msra.mxu0 %v101
  %423 = vmatpush.msra.mxu0 %v97
  %424 = vmatpush.msra.mxu0 %v93
  %425 = vmatpush.msra.mxu0 %v89
  %426 = vmatpush.msra.mxu0 %v85
  %427 = vmatpush.msra.mxu0 %v81
  %428 = vmatpush.msra.mxu0 %v77
  %429 = vmatpush.msra.mxu0 %v73
  %430 = vmatpush.msra.mxu0 %v69
  %431 = vmatpush.msra.mxu0 %v65
  %432 = vmatpush.msra.mxu0 %v61
  %433 = vmatpush.msra.mxu0 %v57
  %434 = vmatpush.msra.mxu0 %v53
  %435 = vmatpush.msra.mxu0 %v49
  %436 = vmatpush.msra.mxu0 %v45
  %437 = vmatmul.f32.gmra.mxu0 %v413
  %v438 = vpop.f32.mrf.mxu0
  %v439 = vadd.f32 0.0, %v438
  %440 = vmatmul.f32.gmra.mxu0 %v415
  %v441 = vpop.f32.mrf.mxu0
  %v442 = vadd.f32 0.0, %v441
  %443 = vmatmul.f32.gmra.mxu0 %v417
  %v444 = vpop.f32.mrf.mxu0
  %v445 = vadd.f32 0.0, %v444
  %446 = vmatmul.f32.gmra.mxu0 %v419
  %v447 = vpop.f32.mrf.mxu0
  %v448 = vadd.f32 0.0, %v447
  %449 = vdwg.mxu0
  %450 = vmatpush.msra.mxu0 %v169
  %451 = vmatpush.msra.mxu0 %v165
  %452 = vmatpush.msra.mxu0 %v161
  %453 = vmatpush.msra.mxu0 %v157
  %454 = vmatpush.msra.mxu0 %v153
  %455 = vmatpush.msra.mxu0 %v149
  %456 = vmatpush.msra.mxu0 %v145
  %457 = vmatpush.msra.mxu0 %v141
  %458 = vmatpush.msra.mxu0 %v137
  %459 = vmatpush.msra.mxu0 %v133
  %460 = vmatpush.msra.mxu0 %v129
  %461 = vmatpush.msra.mxu0 %v125
  %462 = vmatpush.msra.mxu0 %v121
  %463 = vmatpush.msra.mxu0 %v117
  %464 = vmatpush.msra.mxu0 %v113
  %465 = vmatpush.msra.mxu0 %v109
  %466 = vmatmul.f32.gmra.mxu0 %v414
  %v467 = vpop.f32.mrf.mxu0
  %v468 = vadd.f32 %v439, %v467
  %469 = vmatmul.f32.gmra.mxu0 %v416
  %v470 = vpop.f32.mrf.mxu0
  %v471 = vadd.f32 %v442, %v470
  %472 = vmatmul.f32.gmra.mxu0 %v418
  %v473 = vpop.f32.mrf.mxu0
  %v474 = vadd.f32 %v445, %v473
  %475 = vmatmul.f32.gmra.mxu0 %v420
  %v476 = vpop.f32.mrf.mxu0
  %v477 = vadd.f32 %v448, %v476
  %478 = vdwg.mxu0
  %479 = vmatpush.msra.mxu0 %v106
  %480 = vmatpush.msra.mxu0 %v102
  %481 = vmatpush.msra.mxu0 %v98
  %482 = vmatpush.msra.mxu0 %v94
  %483 = vmatpush.msra.mxu0 %v90
  %484 = vmatpush.msra.mxu0 %v86
  %485 = vmatpush.msra.mxu0 %v82
  %486 = vmatpush.msra.mxu0 %v78
  %487 = vmatpush.msra.mxu0 %v74
  %488 = vmatpush.msra.mxu0 %v70
  %489 = vmatpush.msra.mxu0 %v66
  %490 = vmatpush.msra.mxu0 %v62
  %491 = vmatpush.msra.mxu0 %v58
  %492 = vmatpush.msra.mxu0 %v54
  %493 = vmatpush.msra.mxu0 %v50
  %494 = vmatpush.msra.mxu0 %v46
  %495 = vmatmul.f32.gmra.mxu0 %v413
  %v496 = vpop.f32.mrf.mxu0
  %v497 = vadd.f32 0.0, %v496
  %498 = vmatmul.f32.gmra.mxu0 %v415
  %v499 = vpop.f32.mrf.mxu0
  %v500 = vadd.f32 0.0, %v499
  %501 = vmatmul.f32.gmra.mxu0 %v417
  %v502 = vpop.f32.mrf.mxu0
  %v503 = vadd.f32 0.0, %v502
  %504 = vmatmul.f32.gmra.mxu0 %v419
  %v505 = vpop.f32.mrf.mxu0
  %v506 = vadd.f32 0.0, %v505
  %507 = vdwg.mxu0
  %508 = vmatpush.msra.mxu0 %v170
  %509 = vmatpush.msra.mxu0 %v166
  %510 = vmatpush.msra.mxu0 %v162
  %511 = vmatpush.msra.mxu0 %v158
  %512 = vmatpush.msra.mxu0 %v154
  %513 = vmatpush.msra.mxu0 %v150
  %514 = vmatpush.msra.mxu0 %v146
  %515 = vmatpush.msra.mxu0 %v142
  %516 = vmatpush.msra.mxu0 %v138
  %517 = vmatpush.msra.mxu0 %v134
  %518 = vmatpush.msra.mxu0 %v130
  %519 = vmatpush.msra.mxu0 %v126
  %520 = vmatpush.msra.mxu0 %v122
  %521 = vmatpush.msra.mxu0 %v118
  %522 = vmatpush.msra.mxu0 %v114
  %523 = vmatpush.msra.mxu0 %v110
  %524 = vmatmul.f32.gmra.mxu0 %v414
  %v525 = vpop.f32.mrf.mxu0
  %v526 = vadd.f32 %v497, %v525
  %527 = vmatmul.f32.gmra.mxu0 %v416
  %v528 = vpop.f32.mrf.mxu0
  %v529 = vadd.f32 %v500, %v528
  %530 = vmatmul.f32.gmra.mxu0 %v418
  %v531 = vpop.f32.mrf.mxu0
  %v532 = vadd.f32 %v503, %v531
  %533 = vmatmul.f32.gmra.mxu0 %v420
  %v534 = vpop.f32.mrf.mxu0
  %v535 = vadd.f32 %v506, %v534
  %536 = vdwg.mxu0
  %537 = vmatpush.msra.mxu0 %v107
  %538 = vmatpush.msra.mxu0 %v103
  %539 = vmatpush.msra.mxu0 %v99
  %540 = vmatpush.msra.mxu0 %v95
  %541 = vmatpush.msra.mxu0 %v91
  %542 = vmatpush.msra.mxu0 %v87
  %543 = vmatpush.msra.mxu0 %v83
  %544 = vmatpush.msra.mxu0 %v79
  %545 = vmatpush.msra.mxu0 %v75
  %546 = vmatpush.msra.mxu0 %v71
  %547 = vmatpush.msra.mxu0 %v67
  %548 = vmatpush.msra.mxu0 %v63
  %549 = vmatpush.msra.mxu0 %v59
  %550 = vmatpush.msra.mxu0 %v55
  %551 = vmatpush.msra.mxu0 %v51
  %552 = vmatpush.msra.mxu0 %v47
  %553 = vmatmul.f32.gmra.mxu0 %v413
  %v554 = vpop.f32.mrf.mxu0
  %v555 = vadd.f32 0.0, %v554
  %556 = vmatmul.f32.gmra.mxu0 %v415
  %v557 = vpop.f32.mrf.mxu0
  %v558 = vadd.f32 0.0, %v557
  %559 = vmatmul.f32.gmra.mxu0 %v417
  %v560 = vpop.f32.mrf.mxu0
  %v561 = vadd.f32 0.0, %v560
  %562 = vmatmul.f32.gmra.mxu0 %v419
  %v563 = vpop.f32.mrf.mxu0
  %v564 = vadd.f32 0.0, %v563
  %565 = vdwg.mxu0
  %566 = vmatpush.msra.mxu0 %v171
  %567 = vmatpush.msra.mxu0 %v167
  %568 = vmatpush.msra.mxu0 %v163
  %569 = vmatpush.msra.mxu0 %v159
  %570 = vmatpush.msra.mxu0 %v155
  %571 = vmatpush.msra.mxu0 %v151
  %572 = vmatpush.msra.mxu0 %v147
  %573 = vmatpush.msra.mxu0 %v143
  %574 = vmatpush.msra.mxu0 %v139
  %575 = vmatpush.msra.mxu0 %v135
  %576 = vmatpush.msra.mxu0 %v131
  %577 = vmatpush.msra.mxu0 %v127
  %578 = vmatpush.msra.mxu0 %v123
  %579 = vmatpush.msra.mxu0 %v119
  %580 = vmatpush.msra.mxu0 %v115
  %581 = vmatpush.msra.mxu0 %v111
  %582 = vmatmul.f32.gmra.mxu0 %v414
  %v583 = vpop.f32.mrf.mxu0
  %v584 = vadd.f32 %v555, %v583
  %585 = vmatmul.f32.gmra.mxu0 %v416
  %v586 = vpop.f32.mrf.mxu0
  %v587 = vadd.f32 %v558, %v586
  %588 = vmatmul.f32.gmra.mxu0 %v418
  %v589 = vpop.f32.mrf.mxu0
  %v590 = vadd.f32 %v561, %v589
  %591 = vmatmul.f32.gmra.mxu0 %v420
  %v592 = vpop.f32.mrf.mxu0
  %v593 = vadd.f32 %v564, %v592
  %594 = vdwg.mxu0
  %595 = vmatpush.msra.mxu0 %v108
  %596 = vmatpush.msra.mxu0 %v104
  %597 = vmatpush.msra.mxu0 %v100
  %598 = vmatpush.msra.mxu0 %v96
  %599 = vmatpush.msra.mxu0 %v92
  %600 = vmatpush.msra.mxu0 %v88
  %601 = vmatpush.msra.mxu0 %v84
  %602 = vmatpush.msra.mxu0 %v80
  %603 = vmatpush.msra.mxu0 %v76
  %604 = vmatpush.msra.mxu0 %v72
  %605 = vmatpush.msra.mxu0 %v68
  %606 = vmatpush.msra.mxu0 %v64
  %607 = vmatpush.msra.mxu0 %v60
  %608 = vmatpush.msra.mxu0 %v56
  %609 = vmatpush.msra.mxu0 %v52
  %610 = vmatpush.msra.mxu0 %v48
  %611 = vmatmul.f32.gmra.mxu0 %v413
  %v612 = vpop.f32.mrf.mxu0
  %v613 = vadd.f32 0.0, %v612
  %614 = vmatmul.f32.gmra.mxu0 %v415
  %v615 = vpop.f32.mrf.mxu0
  %v616 = vadd.f32 0.0, %v615
  %617 = vmatmul.f32.gmra.mxu0 %v417
  %v618 = vpop.f32.mrf.mxu0
  %v619 = vadd.f32 0.0, %v618
  %620 = vmatmul.f32.gmra.mxu0 %v419
  %v621 = vpop.f32.mrf.mxu0
  %v622 = vadd.f32 0.0, %v621
  %623 = vdwg.mxu0
  %624 = vmatpush.msra.mxu0 %v172
  %625 = vmatpush.msra.mxu0 %v168
  %626 = vmatpush.msra.mxu0 %v164
  %627 = vmatpush.msra.mxu0 %v160
  %628 = vmatpush.msra.mxu0 %v156
  %629 = vmatpush.msra.mxu0 %v152
  %630 = vmatpush.msra.mxu0 %v148
  %631 = vmatpush.msra.mxu0 %v144
  %632 = vmatpush.msra.mxu0 %v140
  %633 = vmatpush.msra.mxu0 %v136
  %634 = vmatpush.msra.mxu0 %v132
  %635 = vmatpush.msra.mxu0 %v128
  %636 = vmatpush.msra.mxu0 %v124
  %637 = vmatpush.msra.mxu0 %v120
  %638 = vmatpush.msra.mxu0 %v116
  %639 = vmatpush.msra.mxu0 %v112
  %640 = vmatmul.f32.gmra.mxu0 %v414
  %v641 = vpop.f32.mrf.mxu0
  %v642 = vadd.f32 %v613, %v641
  %643 = vmatmul.f32.gmra.mxu0 %v416
  %v644 = vpop.f32.mrf.mxu0
  %v645 = vadd.f32 %v616, %v644
  %646 = vmatmul.f32.gmra.mxu0 %v418
  %v647 = vpop.f32.mrf.mxu0
  %v648 = vadd.f32 %v619, %v647
  %649 = vmatmul.f32.gmra.mxu0 %v420
  %v650 = vpop.f32.mrf.mxu0
  %v651 = vadd.f32 %v622, %v650
  %652 = vdwg.mxu0
  %v653 = vmul.f32 %v228, %v228
  %v654 = vmul.f32 %v286, %v286
  %v655 = vmul.f32 %v231, %v231
  %v656 = vmul.f32 %v289, %v289
  %v657 = vmul.f32 %v234, %v234
  %v658 = vmul.f32 %v292, %v292
  %v659 = vmul.f32 %v237, %v237
  %v660 = vmul.f32 %v295, %v295
  %v661 = vmul.f32 %v344, %v344
  %v662 = vmul.f32 %v402, %v402
  %v663 = vmul.f32 %v347, %v347
  %v664 = vmul.f32 %v405, %v405
  %v665 = vmul.f32 %v350, %v350
  %v666 = vmul.f32 %v408, %v408
  %v667 = vmul.f32 %v353, %v353
  %v668 = vmul.f32 %v411, %v411
  %v669 = vadd.f32 %v653, %v661
  %v670 = vadd.f32 %v654, %v662
  %v671 = vadd.f32 %v655, %v663
  %v672 = vadd.f32 %v656, %v664
  %v673 = vadd.f32 %v657, %v665
  %v674 = vadd.f32 %v658, %v666
  %v675 = vadd.f32 %v659, %v667
  %v676 = vadd.f32 %v660, %v668
  %v677 = vmax.f32 %v669, 1e-07
  %v678 = vmax.f32 %v670, 1e-07
  %v679 = vmax.f32 %v671, 1e-07
  %v680 = vmax.f32 %v672, 1e-07
  %v681 = vmax.f32 %v673, 1e-07
  %v682 = vmax.f32 %v674, 1e-07
  %v683 = vmax.f32 %v675, 1e-07
  %v684 = vmax.f32 %v676, 1e-07
  %v685 = vmul.f32 %v468, %v468
  %v686 = vmul.f32 %v526, %v526
  %v687 = vmul.f32 %v471, %v471
  %v688 = vmul.f32 %v529, %v529
  %v689 = vmul.f32 %v474, %v474
  %v690 = vmul.f32 %v532, %v532
  %v691 = vmul.f32 %v477, %v477
  %v692 = vmul.f32 %v535, %v535
  %v693 = vmul.f32 %v584, %v584
  %v694 = vmul.f32 %v642, %v642
  %v695 = vmul.f32 %v587, %v587
  %v696 = vmul.f32 %v645, %v645
  %v697 = vmul.f32 %v590, %v590
  %v698 = vmul.f32 %v648, %v648
  %v699 = vmul.f32 %v593, %v593
  %v700 = vmul.f32 %v651, %v651
  %v701 = vadd.f32 %v685, %v693
  %v702 = vadd.f32 %v686, %v694
  %v703 = vadd.f32 %v687, %v695
  %v704 = vadd.f32 %v688, %v696
  %v705 = vadd.f32 %v689, %v697
  %v706 = vadd.f32 %v690, %v698
  %v707 = vadd.f32 %v691, %v699
  %v708 = vadd.f32 %v692, %v700
  %v709 = vmax.f32 %v701, 1e-07
  %v710 = vmax.f32 %v702, 1e-07
  %v711 = vmax.f32 %v703, 1e-07
  %v712 = vmax.f32 %v704, 1e-07
  %v713 = vmax.f32 %v705, 1e-07
  %v714 = vmax.f32 %v706, 1e-07
  %v715 = vmax.f32 %v707, 1e-07
  %v716 = vmax.f32 %v708, 1e-07
  %v717 = vadd.f32 %v677, %v709
  %v718 = vadd.f32 %v678, %v710
  %v719 = vadd.f32 %v679, %v711
  %v720 = vadd.f32 %v680, %v712
  %v721 = vadd.f32 %v681, %v713
  %v722 = vadd.f32 %v682, %v714
  %v723 = vadd.f32 %v683, %v715
  %v724 = vadd.f32 %v684, %v716
  %v725 = vmul.f32 %v677, %v709
  %v726 = vmul.f32 %v678, %v710
  %v727 = vmul.f32 %v679, %v711
  %v728 = vmul.f32 %v680, %v712
  %v729 = vmul.f32 %v681, %v713
  %v730 = vmul.f32 %v682, %v714
  %v731 = vmul.f32 %v683, %v715
  %v732 = vmul.f32 %v684, %v716
  %v733 = vrsqrt.pop %v725
  %v734 = vmul.f32 %v733, %v725
  %v735 = vmul.f32 %v734, %v733
  %v736 = vmul.f32 0.5, %v735
  %v737 = vsub.f32 1.5, %v736
  %v738 = vmul.f32 %v733, %v737
  %v739 = vmul.f32 %v725, %v738
  %vm740 = vcmp.eq.f32.partialorder %v725, inf
  %v741 = vsel %vm740, %v725, %v739
  %vm742 = vcmp.eq.f32.partialorder %v725, 0.0
  %v743 = vand.u32 %v725, 2147483648
  %v744 = vsel %vm742, %v743, %v741
  %v745 = vrsqrt.pop %v726
  %v746 = vmul.f32 %v745, %v726
  %v747 = vmul.f32 %v746, %v745
  %v748 = vmul.f32 0.5, %v747
  %v749 = vsub.f32 1.5, %v748
  %v750 = vmul.f32 %v745, %v749
  %v751 = vmul.f32 %v726, %v750
  %vm752 = vcmp.eq.f32.partialorder %v726, inf
  %v753 = vsel %vm752, %v726, %v751
  %vm754 = vcmp.eq.f32.partialorder %v726, 0.0
  %v755 = vand.u32 %v726, 2147483648
  %v756 = vsel %vm754, %v755, %v753
  %v757 = vrsqrt.pop %v727
  %v758 = vmul.f32 %v757, %v727
  %v759 = vmul.f32 %v758, %v757
  %v760 = vmul.f32 0.5, %v759
  %v761 = vsub.f32 1.5, %v760
  %v762 = vmul.f32 %v757, %v761
  %v763 = vmul.f32 %v727, %v762
  %vm764 = vcmp.eq.f32.partialorder %v727, inf
  %v765 = vsel %vm764, %v727, %v763
  %vm766 = vcmp.eq.f32.partialorder %v727, 0.0
  %v767 = vand.u32 %v727, 2147483648
  %v768 = vsel %vm766, %v767, %v765
  %v769 = vrsqrt.pop %v728
  %v770 = vmul.f32 %v769, %v728
  %v771 = vmul.f32 %v770, %v769
  %v772 = vmul.f32 0.5, %v771
  %v773 = vsub.f32 1.5, %v772
  %v774 = vmul.f32 %v769, %v773
  %v775 = vmul.f32 %v728, %v774
  %vm776 = vcmp.eq.f32.partialorder %v728, inf
  %v777 = vsel %vm776, %v728, %v775
  %vm778 = vcmp.eq.f32.partialorder %v728, 0.0
  %v779 = vand.u32 %v728, 2147483648
  %v780 = vsel %vm778, %v779, %v777
  %v781 = vrsqrt.pop %v729
  %v782 = vmul.f32 %v781, %v729
  %v783 = vmul.f32 %v782, %v781
  %v784 = vmul.f32 0.5, %v783
  %v785 = vsub.f32 1.5, %v784
  %v786 = vmul.f32 %v781, %v785
  %v787 = vmul.f32 %v729, %v786
  %vm788 = vcmp.eq.f32.partialorder %v729, inf
  %v789 = vsel %vm788, %v729, %v787
  %vm790 = vcmp.eq.f32.partialorder %v729, 0.0
  %v791 = vand.u32 %v729, 2147483648
  %v792 = vsel %vm790, %v791, %v789
  %v793 = vrsqrt.pop %v730
  %v794 = vmul.f32 %v793, %v730
  %v795 = vmul.f32 %v794, %v793
  %v796 = vmul.f32 0.5, %v795
  %v797 = vsub.f32 1.5, %v796
  %v798 = vmul.f32 %v793, %v797
  %v799 = vmul.f32 %v730, %v798
  %vm800 = vcmp.eq.f32.partialorder %v730, inf
  %v801 = vsel %vm800, %v730, %v799
  %vm802 = vcmp.eq.f32.partialorder %v730, 0.0
  %v803 = vand.u32 %v730, 2147483648
  %v804 = vsel %vm802, %v803, %v801
  %v805 = vrsqrt.pop %v731
  %v806 = vmul.f32 %v805, %v731
  %v807 = vmul.f32 %v806, %v805
  %v808 = vmul.f32 0.5, %v807
  %v809 = vsub.f32 1.5, %v808
  %v810 = vmul.f32 %v805, %v809
  %v811 = vmul.f32 %v731, %v810
  %vm812 = vcmp.eq.f32.partialorder %v731, inf
  %v813 = vsel %vm812, %v731, %v811
  %vm814 = vcmp.eq.f32.partialorder %v731, 0.0
  %v815 = vand.u32 %v731, 2147483648
  %v816 = vsel %vm814, %v815, %v813
  %v817 = vrsqrt.pop %v732
  %v818 = vmul.f32 %v817, %v732
  %v819 = vmul.f32 %v818, %v817
  %v820 = vmul.f32 0.5, %v819
  %v821 = vsub.f32 1.5, %v820
  %v822 = vmul.f32 %v817, %v821
  %v823 = vmul.f32 %v732, %v822
  %vm824 = vcmp.eq.f32.partialorder %v732, inf
  %v825 = vsel %vm824, %v732, %v823
  %vm826 = vcmp.eq.f32.partialorder %v732, 0.0
  %v827 = vand.u32 %v732, 2147483648
  %v828 = vsel %vm826, %v827, %v825
  %v829 = vmul.f32 %v744, 2.0
  %v830 = vmul.f32 %v756, 2.0
  %v831 = vmul.f32 %v768, 2.0
  %v832 = vmul.f32 %v780, 2.0
  %v833 = vmul.f32 %v792, 2.0
  %v834 = vmul.f32 %v804, 2.0
  %v835 = vmul.f32 %v816, 2.0
  %v836 = vmul.f32 %v828, 2.0
  %v837 = vsub.f32 %v717, %v829
  %v838 = vsub.f32 %v718, %v830
  %v839 = vsub.f32 %v719, %v831
  %v840 = vsub.f32 %v720, %v832
  %v841 = vsub.f32 %v721, %v833
  %v842 = vsub.f32 %v722, %v834
  %v843 = vsub.f32 %v723, %v835
  %v844 = vsub.f32 %v724, %v836
  %v845 = vmax.f32 %v837, 0.0
  %v846 = vmax.f32 %v838, 0.0
  %v847 = vmax.f32 %v839, 0.0
  %v848 = vmax.f32 %v840, 0.0
  %v849 = vmax.f32 %v841, 0.0
  %v850 = vmax.f32 %v842, 0.0
  %v851 = vmax.f32 %v843, 0.0
  %v852 = vmax.f32 %v844, 0.0
  %v853 = vlog2.pop %v709
  %v854 = vmul.f32 %v853, 0.6931472
  %v855 = vlog2.pop %v710
  %v856 = vmul.f32 %v855, 0.6931472
  %v857 = vlog2.pop %v711
  %v858 = vmul.f32 %v857, 0.6931472
  %v859 = vlog2.pop %v712
  %v860 = vmul.f32 %v859, 0.6931472
  %v861 = vlog2.pop %v713
  %v862 = vmul.f32 %v861, 0.6931472
  %v863 = vlog2.pop %v714
  %v864 = vmul.f32 %v863, 0.6931472
  %v865 = vlog2.pop %v715
  %v866 = vmul.f32 %v865, 0.6931472
  %v867 = vlog2.pop %v716
  %v868 = vmul.f32 %v867, 0.6931472
  %v869 = vlog2.pop %v677
  %v870 = vmul.f32 %v869, 0.6931472
  %v871 = vlog2.pop %v678
  %v872 = vmul.f32 %v871, 0.6931472
  %v873 = vlog2.pop %v679
  %v874 = vmul.f32 %v873, 0.6931472
  %v875 = vlog2.pop %v680
  %v876 = vmul.f32 %v875, 0.6931472
  %v877 = vlog2.pop %v681
  %v878 = vmul.f32 %v877, 0.6931472
  %v879 = vlog2.pop %v682
  %v880 = vmul.f32 %v879, 0.6931472
  %v881 = vlog2.pop %v683
  %v882 = vmul.f32 %v881, 0.6931472
  %v883 = vlog2.pop %v684
  %v884 = vmul.f32 %v883, 0.6931472
  %v885 = vsub.f32 %v854, %v870
  %v886 = vsub.f32 %v856, %v872
  %v887 = vsub.f32 %v858, %v874
  %v888 = vsub.f32 %v860, %v876
  %v889 = vsub.f32 %v862, %v878
  %v890 = vsub.f32 %v864, %v880
  %v891 = vsub.f32 %v866, %v882
  %v892 = vsub.f32 %v868, %v884
  %v893 = vand.u32 2147483647, %v885
  %v894 = vand.u32 2147483647, %v886
  %v895 = vand.u32 2147483647, %v887
  %v896 = vand.u32 2147483647, %v888
  %v897 = vand.u32 2147483647, %v889
  %v898 = vand.u32 2147483647, %v890
  %v899 = vand.u32 2147483647, %v891
  %v900 = vand.u32 2147483647, %v892
  %v901 = vmul.f32 %v893, 0.5
  %v902 = vmul.f32 %v894, 0.5
  %v903 = vmul.f32 %v895, 0.5
  %v904 = vmul.f32 %v896, 0.5
  %v905 = vmul.f32 %v897, 0.5
  %v906 = vmul.f32 %v898, 0.5
  %v907 = vmul.f32 %v899, 0.5
  %v908 = vmul.f32 %v900, 0.5
  %v909 = vld [vmem:[#allocation2] sm:$0xff]
  %v910 = vld [vmem:[#allocation2 + $0x8] sm:$0xff]
  %v911 = vld [vmem:[#allocation2 + $0x10] sm:$0xff]
  %v912 = vld [vmem:[#allocation2 + $0x18] sm:$0xff]
  %v913 = vld [vmem:[#allocation2 + $0x20] sm:$0xff]
  %v914 = vld [vmem:[#allocation2 + $0x28] sm:$0xff]
  %v915 = vld [vmem:[#allocation2 + $0x30] sm:$0xff]
  %v916 = vld [vmem:[#allocation2 + $0x38] sm:$0xff]
  %v917 = vadd.f32 %v909, %v845
  %v918 = vadd.f32 %v910, %v846
  %v919 = vadd.f32 %v911, %v847
  %v920 = vadd.f32 %v912, %v848
  %v921 = vadd.f32 %v913, %v849
  %v922 = vadd.f32 %v914, %v850
  %v923 = vadd.f32 %v915, %v851
  %v924 = vadd.f32 %v916, %v852
  %925 = vst [vmem:[#allocation2] sm:$0xff] %v917
  %926 = vst [vmem:[#allocation2 + $0x8] sm:$0xff] %v918
  %927 = vst [vmem:[#allocation2 + $0x10] sm:$0xff] %v919
  %928 = vst [vmem:[#allocation2 + $0x18] sm:$0xff] %v920
  %929 = vst [vmem:[#allocation2 + $0x20] sm:$0xff] %v921
  %930 = vst [vmem:[#allocation2 + $0x28] sm:$0xff] %v922
  %931 = vst [vmem:[#allocation2 + $0x30] sm:$0xff] %v923
  %932 = vst [vmem:[#allocation2 + $0x38] sm:$0xff] %v924
  %v933 = vld [vmem:[#allocation3] sm:$0xff]
  %v934 = vld [vmem:[#allocation3 + $0x8] sm:$0xff]
  %v935 = vld [vmem:[#allocation3 + $0x10] sm:$0xff]
  %v936 = vld [vmem:[#allocation3 + $0x18] sm:$0xff]
  %v937 = vld [vmem:[#allocation3 + $0x20] sm:$0xff]
  %v938 = vld [vmem:[#allocation3 + $0x28] sm:$0xff]
  %v939 = vld [vmem:[#allocation3 + $0x30] sm:$0xff]
  %v940 = vld [vmem:[#allocation3 + $0x38] sm:$0xff]
  %v941 = vadd.f32 %v933, %v709
  %v942 = vadd.f32 %v934, %v710
  %v943 = vadd.f32 %v935, %v711
  %v944 = vadd.f32 %v936, %v712
  %v945 = vadd.f32 %v937, %v713
  %v946 = vadd.f32 %v938, %v714
  %v947 = vadd.f32 %v939, %v715
  %v948 = vadd.f32 %v940, %v716
  %949 = vst [vmem:[#allocation3] sm:$0xff] %v941
  %950 = vst [vmem:[#allocation3 + $0x8] sm:$0xff] %v942
  %951 = vst [vmem:[#allocation3 + $0x10] sm:$0xff] %v943
  %952 = vst [vmem:[#allocation3 + $0x18] sm:$0xff] %v944
  %953 = vst [vmem:[#allocation3 + $0x20] sm:$0xff] %v945
  %954 = vst [vmem:[#allocation3 + $0x28] sm:$0xff] %v946
  %955 = vst [vmem:[#allocation3 + $0x30] sm:$0xff] %v947
  %956 = vst [vmem:[#allocation3 + $0x38] sm:$0xff] %v948
  %v957 = vld [vmem:[#allocation4] sm:$0xff]
  %v958 = vld [vmem:[#allocation4 + $0x8] sm:$0xff]
  %v959 = vld [vmem:[#allocation4 + $0x10] sm:$0xff]
  %v960 = vld [vmem:[#allocation4 + $0x18] sm:$0xff]
  %v961 = vld [vmem:[#allocation4 + $0x20] sm:$0xff]
  %v962 = vld [vmem:[#allocation4 + $0x28] sm:$0xff]
  %v963 = vld [vmem:[#allocation4 + $0x30] sm:$0xff]
  %v964 = vld [vmem:[#allocation4 + $0x38] sm:$0xff]
  %v965 = vadd.f32 %v957, %v901
  %v966 = vadd.f32 %v958, %v902
  %v967 = vadd.f32 %v959, %v903
  %v968 = vadd.f32 %v960, %v904
  %v969 = vadd.f32 %v961, %v905
  %v970 = vadd.f32 %v962, %v906
  %v971 = vadd.f32 %v963, %v907
  %v972 = vadd.f32 %v964, %v908
  %973 = vst [vmem:[#allocation4] sm:$0xff] %v965
  %974 = vst [vmem:[#allocation4 + $0x8] sm:$0xff] %v966
  %975 = vst [vmem:[#allocation4 + $0x10] sm:$0xff] %v967
  %976 = vst [vmem:[#allocation4 + $0x18] sm:$0xff] %v968
  %977 = vst [vmem:[#allocation4 + $0x20] sm:$0xff] %v969
  %978 = vst [vmem:[#allocation4 + $0x28] sm:$0xff] %v970
  %979 = vst [vmem:[#allocation4 + $0x30] sm:$0xff] %v971
  %980 = vst [vmem:[#allocation4 + $0x38] sm:$0xff] %v972
  // Predicated region
  $region18: #{multi_resolution_stft_loss.4} parent=0 // pred_check
    %p981 = pneg %p17
  $region19: #{multi_resolution_stft_loss.4} parent=0 // pred_check_branch
    %983 = sbr.rel (%p981) target = $region21
  $region20: #{multi_resolution_stft_loss.4} parent=0 // pred_region
    %v984 = vlaneseq
    %v985 = vshrl.u32 %v984, 7
    %v986 = vlaneseq
    %v987 = vand.u32 %v986, 127
    %vm988 = vcmp.eq.s32.totalorder %v985, 0
    %vm989 = vcmp.eq.s32.totalorder %v987, 0
    %vm990 = vmand %vm988, %vm989
    %v991 = vld [vmem:[#allocation2] sm:$0xff]
    %v992 = vld [vmem:[#allocation2 + $0x8] sm:$0xff]
    %v993 = vld [vmem:[#allocation2 + $0x10] sm:$0xff]
    %v994 = vld [vmem:[#allocation2 + $0x18] sm:$0xff]
    %v995 = vld [vmem:[#allocation2 + $0x20] sm:$0xff]
    %v996 = vld [vmem:[#allocation2 + $0x28] sm:$0xff]
    %v997 = vld [vmem:[#allocation2 + $0x30] sm:$0xff]
    %v998 = vld [vmem:[#allocation2 + $0x38] sm:$0xff]
    %v999 = vadd.f32 %v991, %v992
    %v1000 = vadd.f32 %v999, %v993
    %v1001 = vadd.f32 %v1000, %v994
    %v1002 = vadd.f32 %v1001, %v995
    %v1003 = vadd.f32 %v1002, %v996
    %v1004 = vadd.f32 %v1003, %v997
    %v1005 = vadd.f32 %v1004, %v998
    %1006 = vadd.xlane.f32.xlu0 %v1005
    %v1007 = vpop.xlane.xlu0 %1006
    %v1008 = vrot.slane %v1007, 4
    %v1009 = vadd.f32 %v1007, %v1008
    %v1010 = vrot.slane %v1009, 2
    %v1011 = vadd.f32 %v1009, %v1010
    %v1012 = vrot.slane %v1011, 1
    %v1013 = vadd.f32 %v1011, %v1012
    %s1014 = vtos %v1013
    %v1015 = vstv %s1014
    %v1016 = vsel %vm990, %v1015, 0.0
    %1017 = vst [vmem:[%s3] sm:$0xff] %v1016
    %v1018 = vld [vmem:[#allocation3] sm:$0xff]
    %v1019 = vld [vmem:[#allocation3 + $0x8] sm:$0xff]
    %v1020 = vld [vmem:[#allocation3 + $0x10] sm:$0xff]
    %v1021 = vld [vmem:[#allocation3 + $0x18] sm:$0xff]
    %v1022 = vld [vmem:[#allocation3 + $0x20] sm:$0xff]
    %v1023 = vld [vmem:[#allocation3 + $0x28] sm:$0xff]
    %v1024 = vld [vmem:[#allocation3 + $0x30] sm:$0xff]
    %v1025 = vld [vmem:[#allocation3 + $0x38] sm:$0xff]
    %v1026 = vadd.f32 %v1018, %v1019
    %v1027 = vadd.f32 %v1026, %v1020
    %v1028 = vadd.f32 %v1027, %v1021
    %v1029 = vadd.f32 %v1028, %v1022
    %v1030 = vadd.f32 %v1029, %v1023
    %v1031 = vadd.f32 %v1030, %v1024
    %v1032 = vadd.f32 %v1031, %v1025
    %1033 = vadd.xlane.f32.xlu0 %v1032
    %v1034 = vpop.xlane.xlu0 %1033
    %v1035 = vrot.slane %v1034, 4
    %v1036 = vadd.f32 %v1034, %v1035
    %v1037 = vrot.slane %v1036, 2
    %v1038 = vadd.f32 %v1036, %v1037
    %v1039 = vrot.slane %v1038, 1
    %v1040 = vadd.f32 %v1038, %v1039
    %s1041 = vtos %v1040
    %v1042 = vstv %s1041
    %v1043 = vsel %vm990, %v1042, 0.0
    %1044 = vst [vmem:[%s4] sm:$0xff] %v1043
    %v1045 = vld [vmem:[#allocation4] sm:$0xff]
    %v1046 = vld [vmem:[#allocation4 + $0x8] sm:$0xff]
    %v1047 = vld [vmem:[#allocation4 + $0x10] sm:$0xff]
    %v1048 = vld [vmem:[#allocation4 + $0x18] sm:$0xff]
    %v1049 = vld [vmem:[#allocation4 + $0x20] sm:$0xff]
    %v1050 = vld [vmem:[#allocation4 + $0x28] sm:$0xff]
    %v1051 = vld [vmem:[#allocation4 + $0x30] sm:$0xff]
    %v1052 = vld [vmem:[#allocation4 + $0x38] sm:$0xff]
    %v1053 = vadd.f32 %v1045, %v1046
    %v1054 = vadd.f32 %v1053, %v1047
    %v1055 = vadd.f32 %v1054, %v1048
    %v1056 = vadd.f32 %v1055, %v1049
    %v1057 = vadd.f32 %v1056, %v1050
    %v1058 = vadd.f32 %v1057, %v1051
    %v1059 = vadd.f32 %v1058, %v1052
    %1060 = vadd.xlane.f32.xlu0 %v1059
    %v1061 = vpop.xlane.xlu0 %1060
    %v1062 = vrot.slane %v1061, 4
    %v1063 = vadd.f32 %v1061, %v1062
    %v1064 = vrot.slane %v1063, 2
    %v1065 = vadd.f32 %v1063, %v1064
    %v1066 = vrot.slane %v1065, 1
    %v1067 = vadd.f32 %v1065, %v1066
    %s1068 = vtos %v1067
    %v1069 = vstv %s1068
    %v1070 = vsel %vm990, %v1069, 0.0
    %1071 = vst [vmem:[%s5] sm:$0xff] %v1070
  $region21: #{multi_resolution_stft_loss.4} parent=0 // pred_fallthru
    _
  // Predicated region
  $region22: #{multi_resolution_stft_loss.4} parent=0 // pred_check
    _
  $region23: #{multi_resolution_stft_loss.4} parent=0 // pred_check_branch
    %1073 = sbr.rel (0) target = $region25
  $region24: #{multi_resolution_stft_loss.4} parent=0 // pred_region
    _
  $region25: #{multi_resolution_stft_loss.4} parent=0 // pred_fallthru
    _
  // Predicated region
  $region26: #{multi_resolution_stft_loss.4} parent=0 // pred_check
    _
  $region27: #{multi_resolution_stft_loss.4} parent=0 // pred_check_branch
    %1075 = sbr.rel (0) target = $region29
  $region28: #{multi_resolution_stft_loss.4} parent=0 // pred_region
    _
  $region29: #{multi_resolution_stft_loss.4} parent=0 // pred_fallthru
    _
  // Predicated region
  $region30: #{multi_resolution_stft_loss.4} parent=0 // pred_check
    _
  $region31: #{multi_resolution_stft_loss.4} parent=0 // pred_check_branch
    %1077 = sbr.rel (0) target = $region33
  $region32: #{multi_resolution_stft_loss.4} parent=0 // pred_region
    _
  $region33: #{multi_resolution_stft_loss.4} parent=0 // pred_fallthru
    _
  // Predicated region
  $region34: #{multi_resolution_stft_loss.4} parent=0 // pred_check
    _
  $region35: #{multi_resolution_stft_loss.4} parent=0 // pred_check_branch
    %1079 = sbr.rel (0) target = $region37
  $region36: #{multi_resolution_stft_loss.4} parent=0 // pred_region
    _
  $region37: #{multi_resolution_stft_loss.4} parent=0 // pred_fallthru
    _
  // Predicated region
  $region38: #{multi_resolution_stft_loss.4} parent=0 // pred_check
    _
  $region39: #{multi_resolution_stft_loss.4} parent=0 // pred_check_branch
    %1081 = sbr.rel (0) target = $region41
  $region40: #{multi_resolution_stft_loss.4} parent=0 // pred_region
    _
  $region41: #{multi_resolution_stft_loss.4} parent=0 // pred_fallthru
    _
  // Predicated region
  $region42: #{multi_resolution_stft_loss.4} parent=0 // pred_check
    _
  $region43: #{multi_resolution_stft_loss.4} parent=0 // pred_check_branch
    %1083 = sbr.rel (0) target = $region45
  $region44: #{multi_resolution_stft_loss.4} parent=0 // pred_region
    _
  $region45: #{multi_resolution_stft_loss.4} parent=0 // pred_fallthru
    _

// kernel: multi_resolution_stft_loss.3
$region0: #{multi_resolution_stft_loss.3}
  #allocation0 [shape = 'u32[]', space=smem, size = 0x4, offset = 0x4, fixed_abs, tag = 'smem constant byte address 0x4 - core index']
  #allocation1 [shape = 'u32[72,128]{1,0:T(1,128)}', space=vmem, size = 0x9000, scoped, tag = 'internal scratch']
  #allocation2 [shape = 'f32[48,128]{1,0:T(8,128)}', space=vmem, size = 0x6000, scoped, tag = 'scratch operand']
  #allocation3 [shape = 'f32[48,128]{1,0:T(8,128)}', space=vmem, size = 0x6000, scoped, tag = 'scratch operand']
  #allocation4 [shape = 'f32[48,128]{1,0:T(8,128)}', space=vmem, size = 0x6000, scoped, tag = 'scratch operand']
  %s0 = inlined_call_operand.vmem [shape: f32[48,128], index: 0, kind: input, shape index: {}]
  %s1 = inlined_call_operand.vmem [shape: f32[48,128], index: 1, kind: input, shape index: {}]
  %s2 = inlined_call_operand.vmem [shape: f32[128,256], index: 2, kind: input, shape index: {}]
  %s3 = inlined_call_operand.vmem [shape: f32[8,128], index: 3, kind: output, shape index: {0}]
  %s4 = inlined_call_operand.vmem [shape: f32[8,128], index: 4, kind: output, shape index: {1}]
  %s5 = inlined_call_operand.vmem [shape: f32[8,128], index: 5, kind: output, shape index: {2}]
  %6 = xla_tuple %s3, %s4, %s5
  %s7 = sld [smem:[#allocation0]]
  $region46: #{multi_resolution_stft_loss.3} parent=0
    _
  %s9 = ssub.s32 1, %s7
  %s10 = scalar_select 0, %s9, %s7
  // Predicated region
  $region2: #{multi_resolution_stft_loss.3} parent=0 // pred_check
    _
  $region3: #{multi_resolution_stft_loss.3} parent=0 // pred_check_branch
    %12 = sbr.rel (0) target = $region5
  $region4: #{multi_resolution_stft_loss.3} parent=0 // pred_region
    _
  $region5: #{multi_resolution_stft_loss.3} parent=0 // pred_fallthru
    _
  // Predicated region
  $region6: #{multi_resolution_stft_loss.3} parent=0 // pred_check
    _
  $region7: #{multi_resolution_stft_loss.3} parent=0 // pred_check_branch
    %14 = sbr.rel (0) target = $region9
  $region8: #{multi_resolution_stft_loss.3} parent=0 // pred_region
    _
  $region9: #{multi_resolution_stft_loss.3} parent=0 // pred_fallthru
    _
  // Predicated region
  $region10: #{multi_resolution_stft_loss.3} parent=0 // pred_check
    _
  $region11: #{multi_resolution_stft_loss.3} parent=0 // pred_check_branch
    %16 = sbr.rel (0) target = $region13
  $region12: #{multi_resolution_stft_loss.3} parent=0 // pred_region
    _
  $region13: #{multi_resolution_stft_loss.3} parent=0 // pred_fallthru
    _
  %p17 = scmp.eq.s32.totalorder 0, 0
  // Predicated region
  $region14: #{multi_resolution_stft_loss.3} parent=0 // pred_check
    %p18 = pneg %p17
  $region15: #{multi_resolution_stft_loss.3} parent=0 // pred_check_branch
    %20 = sbr.rel (%p18) target = $region17
  $region16: #{multi_resolution_stft_loss.3} parent=0 // pred_region
    %21 = vst [vmem:[#allocation2] sm:$0xff] 0.0
    %22 = vst [vmem:[#allocation2 + $0x8] sm:$0xff] 0.0
    %23 = vst [vmem:[#allocation2 + $0x10] sm:$0xff] 0.0
    %24 = vst [vmem:[#allocation2 + $0x18] sm:$0xff] 0.0
    %25 = vst [vmem:[#allocation2 + $0x20] sm:$0xff] 0.0
    %26 = vst [vmem:[#allocation2 + $0x28] sm:$0xff] 0.0
    %27 = vst [vmem:[#allocation3] sm:$0xff] 0.0
    %28 = vst [vmem:[#allocation3 + $0x8] sm:$0xff] 0.0
    %29 = vst [vmem:[#allocation3 + $0x10] sm:$0xff] 0.0
    %30 = vst [vmem:[#allocation3 + $0x18] sm:$0xff] 0.0
    %31 = vst [vmem:[#allocation3 + $0x20] sm:$0xff] 0.0
    %32 = vst [vmem:[#allocation3 + $0x28] sm:$0xff] 0.0
    %33 = vst [vmem:[#allocation4] sm:$0xff] 0.0
    %34 = vst [vmem:[#allocation4 + $0x8] sm:$0xff] 0.0
    %35 = vst [vmem:[#allocation4 + $0x10] sm:$0xff] 0.0
    %36 = vst [vmem:[#allocation4 + $0x18] sm:$0xff] 0.0
    %37 = vst [vmem:[#allocation4 + $0x20] sm:$0xff] 0.0
    %38 = vst [vmem:[#allocation4 + $0x28] sm:$0xff] 0.0
  $region17: #{multi_resolution_stft_loss.3} parent=0 // pred_fallthru
    _
  %v39 = vld [vmem:[%s2] sm:$0xff]
  %v40 = vld [vmem:[%s2 + $0x8] sm:$0xff]
  %v41 = vld [vmem:[%s2 + $0x10] sm:$0xff]
  %v42 = vld [vmem:[%s2 + $0x18] sm:$0xff]
  %v43 = vld [vmem:[%s2 + $0x20] sm:$0xff]
  %v44 = vld [vmem:[%s2 + $0x28] sm:$0xff]
  %v45 = vld [vmem:[%s2 + $0x30] sm:$0xff]
  %v46 = vld [vmem:[%s2 + $0x38] sm:$0xff]
  %v47 = vld [vmem:[%s2 + $0x40] sm:$0xff]
  %v48 = vld [vmem:[%s2 + $0x48] sm:$0xff]
  %v49 = vld [vmem:[%s2 + $0x50] sm:$0xff]
  %v50 = vld [vmem:[%s2 + $0x58] sm:$0xff]
  %v51 = vld [vmem:[%s2 + $0x60] sm:$0xff]
  %v52 = vld [vmem:[%s2 + $0x68] sm:$0xff]
  %v53 = vld [vmem:[%s2 + $0x70] sm:$0xff]
  %v54 = vld [vmem:[%s2 + $0x78] sm:$0xff]
  %v55 = vld [vmem:[%s2 + $0x80] sm:$0xff]
  %v56 = vld [vmem:[%s2 + $0x88] sm:$0xff]
  %v57 = vld [vmem:[%s2 + $0x90] sm:$0xff]
  %v58 = vld [vmem:[%s2 + $0x98] sm:$0xff]
  %v59 = vld [vmem:[%s2 + $0xa0] sm:$0xff]
  %v60 = vld [vmem:[%s2 + $0xa8] sm:$0xff]
  %v61 = vld [vmem:[%s2 + $0xb0] sm:$0xff]
  %v62 = vld [vmem:[%s2 + $0xb8] sm:$0xff]
  %v63 = vld [vmem:[%s2 + $0xc0] sm:$0xff]
  %v64 = vld [vmem:[%s2 + $0xc8] sm:$0xff]
  %v65 = vld [vmem:[%s2 + $0xd0] sm:$0xff]
  %v66 = vld [vmem:[%s2 + $0xd8] sm:$0xff]
  %v67 = vld [vmem:[%s2 + $0xe0] sm:$0xff]
  %v68 = vld [vmem:[%s2 + $0xe8] sm:$0xff]
  %v69 = vld [vmem:[%s2 + $0xf0] sm:$0xff]
  %v70 = vld [vmem:[%s2 + $0xf8] sm:$0xff]
  %v71 = vld [vmem:[%s0] sm:$0xff]
  %v72 = vld [vmem:[%s0 + $0x8] sm:$0xff]
  %v73 = vld [vmem:[%s0 + $0x10] sm:$0xff]
  %v74 = vld [vmem:[%s0 + $0x18] sm:$0xff]
  %v75 = vld [vmem:[%s0 + $0x20] sm:$0xff]
  %v76 = vld [vmem:[%s0 + $0x28] sm:$0xff]
  %77 = vmatpush.msra.mxu0 %v69
  %78 = vmatpush.msra.mxu0 %v67
  %79 = vmatpush.msra.mxu0 %v65
  %80 = vmatpush.msra.mxu0 %v63
  %81 = vmatpush.msra.mxu0 %v61
  %82 = vmatpush.msra.mxu0 %v59
  %83 = vmatpush.msra.mxu0 %v57
  %84 = vmatpush.msra.mxu0 %v55
  %85 = vmatpush.msra.mxu0 %v53
  %86 = vmatpush.msra.mxu0 %v51
  %87 = vmatpush.msra.mxu0 %v49
  %88 = vmatpush.msra.mxu0 %v47
  %89 = vmatpush.msra.mxu0 %v45
  %90 = vmatpush.msra.mxu0 %v43
  %91 = vmatpush.msra.mxu0 %v41
  %92 = vmatpush.msra.mxu0 %v39
  %93 = vmatmul.f32.gmra.mxu0 %v71
  %v94 = vpop.f32.mrf.mxu0
  %v95 = vadd.f32 0.0, %v94
  %96 = vmatmul.f32.gmra.mxu0 %v72
  %v97 = vpop.f32.mrf.mxu0
  %v98 = vadd.f32 0.0, %v97
  %99 = vmatmul.f32.gmra.mxu0 %v73
  %v100 = vpop.f32.mrf.mxu0
  %v101 = vadd.f32 0.0, %v100
  %102 = vmatmul.f32.gmra.mxu0 %v74
  %v103 = vpop.f32.mrf.mxu0
  %v104 = vadd.f32 0.0, %v103
  %105 = vmatmul.f32.gmra.mxu0 %v75
  %v106 = vpop.f32.mrf.mxu0
  %v107 = vadd.f32 0.0, %v106
  %108 = vmatmul.f32.gmra.mxu0 %v76
  %v109 = vpop.f32.mrf.mxu0
  %v110 = vadd.f32 0.0, %v109
  %111 = vdwg.mxu0
  %112 = vmatpush.msra.mxu0 %v70
  %113 = vmatpush.msra.mxu0 %v68
  %114 = vmatpush.msra.mxu0 %v66
  %115 = vmatpush.msra.mxu0 %v64
  %116 = vmatpush.msra.mxu0 %v62
  %117 = vmatpush.msra.mxu0 %v60
  %118 = vmatpush.msra.mxu0 %v58
  %119 = vmatpush.msra.mxu0 %v56
  %120 = vmatpush.msra.mxu0 %v54
  %121 = vmatpush.msra.mxu0 %v52
  %122 = vmatpush.msra.mxu0 %v50
  %123 = vmatpush.msra.mxu0 %v48
  %124 = vmatpush.msra.mxu0 %v46
  %125 = vmatpush.msra.mxu0 %v44
  %126 = vmatpush.msra.mxu0 %v42
  %127 = vmatpush.msra.mxu0 %v40
  %128 = vmatmul.f32.gmra.mxu0 %v71
  %v129 = vpop.f32.mrf.mxu0
  %v130 = vadd.f32 0.0, %v129
  %131 = vmatmul.f32.gmra.mxu0 %v72
  %v132 = vpop.f32.mrf.mxu0
  %v133 = vadd.f32 0.0, %v132
  %134 = vmatmul.f32.gmra.mxu0 %v73
  %v135 = vpop.f32.mrf.mxu0
  %v136 = vadd.f32 0.0, %v135
  %137 = vmatmul.f32.gmra.mxu0 %v74
  %v138 = vpop.f32.mrf.mxu0
  %v139 = vadd.f32 0.0, %v138
  %140 = vmatmul.f32.gmra.mxu0 %v75
  %v141 = vpop.f32.mrf.mxu0
  %v142 = vadd.f32 0.0, %v141
  %143 = vmatmul.f32.gmra.mxu0 %v76
  %v144 = vpop.f32.mrf.mxu0
  %v145 = vadd.f32 0.0, %v144
  %146 = vdwg.mxu0
  %v147 = vld [vmem:[%s1] sm:$0xff]
  %v148 = vld [vmem:[%s1 + $0x8] sm:$0xff]
  %v149 = vld [vmem:[%s1 + $0x10] sm:$0xff]
  %v150 = vld [vmem:[%s1 + $0x18] sm:$0xff]
  %v151 = vld [vmem:[%s1 + $0x20] sm:$0xff]
  %v152 = vld [vmem:[%s1 + $0x28] sm:$0xff]
  %153 = vmatpush.msra.mxu0 %v69
  %154 = vmatpush.msra.mxu0 %v67
  %155 = vmatpush.msra.mxu0 %v65
  %156 = vmatpush.msra.mxu0 %v63
  %157 = vmatpush.msra.mxu0 %v61
  %158 = vmatpush.msra.mxu0 %v59
  %159 = vmatpush.msra.mxu0 %v57
  %160 = vmatpush.msra.mxu0 %v55
  %161 = vmatpush.msra.mxu0 %v53
  %162 = vmatpush.msra.mxu0 %v51
  %163 = vmatpush.msra.mxu0 %v49
  %164 = vmatpush.msra.mxu0 %v47
  %165 = vmatpush.msra.mxu0 %v45
  %166 = vmatpush.msra.mxu0 %v43
  %167 = vmatpush.msra.mxu0 %v41
  %168 = vmatpush.msra.mxu0 %v39
  %169 = vmatmul.f32.gmra.mxu0 %v147
  %v170 = vpop.f32.mrf.mxu0
  %v171 = vadd.f32 0.0, %v170
  %172 = vmatmul.f32.gmra.mxu0 %v148
  %v173 = vpop.f32.mrf.mxu0
  %v174 = vadd.f32 0.0, %v173
  %175 = vmatmul.f32.gmra.mxu0 %v149
  %v176 = vpop.f32.mrf.mxu0
  %v177 = vadd.f32 0.0, %v176
  %178 = vmatmul.f32.gmra.mxu0 %v150
  %v179 = vpop.f32.mrf.mxu0
  %v180 = vadd.f32 0.0, %v179
  %181 = vmatmul.f32.gmra.mxu0 %v151
  %v182 = vpop.f32.mrf.mxu0
  %v183 = vadd.f32 0.0, %v182
  %184 = vmatmul.f32.gmra.mxu0 %v152
  %v185 = vpop.f32.mrf.mxu0
  %v186 = vadd.f32 0.0, %v185
  %187 = vdwg.mxu0
  %188 = vmatpush.msra.mxu0 %v70
  %189 = vmatpush.msra.mxu0 %v68
  %190 = vmatpush.msra.mxu0 %v66
  %191 = vmatpush.msra.mxu0 %v64
  %192 = vmatpush.msra.mxu0 %v62
  %193 = vmatpush.msra.mxu0 %v60
  %194 = vmatpush.msra.mxu0 %v58
  %195 = vmatpush.msra.mxu0 %v56
  %196 = vmatpush.msra.mxu0 %v54
  %197 = vmatpush.msra.mxu0 %v52
  %198 = vmatpush.msra.mxu0 %v50
  %199 = vmatpush.msra.mxu0 %v48
  %200 = vmatpush.msra.mxu0 %v46
  %201 = vmatpush.msra.mxu0 %v44
  %202 = vmatpush.msra.mxu0 %v42
  %203 = vmatpush.msra.mxu0 %v40
  %204 = vmatmul.f32.gmra.mxu0 %v147
  %v205 = vpop.f32.mrf.mxu0
  %v206 = vadd.f32 0.0, %v205
  %207 = vmatmul.f32.gmra.mxu0 %v148
  %v208 = vpop.f32.mrf.mxu0
  %v209 = vadd.f32 0.0, %v208
  %210 = vmatmul.f32.gmra.mxu0 %v149
  %v211 = vpop.f32.mrf.mxu0
  %v212 = vadd.f32 0.0, %v211
  %213 = vmatmul.f32.gmra.mxu0 %v150
  %v214 = vpop.f32.mrf.mxu0
  %v215 = vadd.f32 0.0, %v214
  %216 = vmatmul.f32.gmra.mxu0 %v151
  %v217 = vpop.f32.mrf.mxu0
  %v218 = vadd.f32 0.0, %v217
  %219 = vmatmul.f32.gmra.mxu0 %v152
  %v220 = vpop.f32.mrf.mxu0
  %v221 = vadd.f32 0.0, %v220
  %222 = vdwg.mxu0
  %v223 = vmul.f32 %v95, %v95
  %v224 = vmul.f32 %v98, %v98
  %v225 = vmul.f32 %v101, %v101
  %v226 = vmul.f32 %v104, %v104
  %v227 = vmul.f32 %v107, %v107
  %v228 = vmul.f32 %v110, %v110
  %v229 = vmul.f32 %v130, %v130
  %v230 = vmul.f32 %v133, %v133
  %v231 = vmul.f32 %v136, %v136
  %v232 = vmul.f32 %v139, %v139
  %v233 = vmul.f32 %v142, %v142
  %v234 = vmul.f32 %v145, %v145
  %v235 = vadd.f32 %v223, %v229
  %v236 = vadd.f32 %v224, %v230
  %v237 = vadd.f32 %v225, %v231
  %v238 = vadd.f32 %v226, %v232
  %v239 = vadd.f32 %v227, %v233
  %v240 = vadd.f32 %v228, %v234
  %v241 = vmax.f32 %v235, 1e-07
  %v242 = vmax.f32 %v236, 1e-07
  %v243 = vmax.f32 %v237, 1e-07
  %v244 = vmax.f32 %v238, 1e-07
  %v245 = vmax.f32 %v239, 1e-07
  %v246 = vmax.f32 %v240, 1e-07
  %v247 = vmul.f32 %v171, %v171
  %v248 = vmul.f32 %v174, %v174
  %v249 = vmul.f32 %v177, %v177
  %v250 = vmul.f32 %v180, %v180
  %v251 = vmul.f32 %v183, %v183
  %v252 = vmul.f32 %v186, %v186
  %v253 = vmul.f32 %v206, %v206
  %v254 = vmul.f32 %v209, %v209
  %v255 = vmul.f32 %v212, %v212
  %v256 = vmul.f32 %v215, %v215
  %v257 = vmul.f32 %v218, %v218
  %v258 = vmul.f32 %v221, %v221
  %v259 = vadd.f32 %v247, %v253
  %v260 = vadd.f32 %v248, %v254
  %v261 = vadd.f32 %v249, %v255
  %v262 = vadd.f32 %v250, %v256
  %v263 = vadd.f32 %v251, %v257
  %v264 = vadd.f32 %v252, %v258
  %v265 = vmax.f32 %v259, 1e-07
  %v266 = vmax.f32 %v260, 1e-07
  %v267 = vmax.f32 %v261, 1e-07
  %v268 = vmax.f32 %v262, 1e-07
  %v269 = vmax.f32 %v263, 1e-07
  %v270 = vmax.f32 %v264, 1e-07
  %v271 = vadd.f32 %v241, %v265
  %v272 = vadd.f32 %v242, %v266
  %v273 = vadd.f32 %v243, %v267
  %v274 = vadd.f32 %v244, %v268
  %v275 = vadd.f32 %v245, %v269
  %v276 = vadd.f32 %v246, %v270
  %v277 = vmul.f32 %v241, %v265
  %v278 = vmul.f32 %v242, %v266
  %v279 = vmul.f32 %v243, %v267
  %v280 = vmul.f32 %v244, %v268
  %v281 = vmul.f32 %v245, %v269
  %v282 = vmul.f32 %v246, %v270
  %v283 = vrsqrt.pop %v277
  %v284 = vmul.f32 %v283, %v277
  %v285 = vmul.f32 %v284, %v283
  %v286 = vmul.f32 0.5, %v285
  %v287 = vsub.f32 1.5, %v286
  %v288 = vmul.f32 %v283, %v287
  %v289 = vmul.f32 %v277, %v288
  %vm290 = vcmp.eq.f32.partialorder %v277, inf
  %v291 = vsel %vm290, %v277, %v289
  %vm292 = vcmp.eq.f32.partialorder %v277, 0.0
  %v293 = vand.u32 %v277, 2147483648
  %v294 = vsel %vm292, %v293, %v291
  %v295 = vrsqrt.pop %v278
  %v296 = vmul.f32 %v295, %v278
  %v297 = vmul.f32 %v296, %v295
  %v298 = vmul.f32 0.5, %v297
  %v299 = vsub.f32 1.5, %v298
  %v300 = vmul.f32 %v295, %v299
  %v301 = vmul.f32 %v278, %v300
  %vm302 = vcmp.eq.f32.partialorder %v278, inf
  %v303 = vsel %vm302, %v278, %v301
  %vm304 = vcmp.eq.f32.partialorder %v278, 0.0
  %v305 = vand.u32 %v278, 2147483648
  %v306 = vsel %vm304, %v305, %v303
  %v307 = vrsqrt.pop %v279
  %v308 = vmul.f32 %v307, %v279
  %v309 = vmul.f32 %v308, %v307
  %v310 = vmul.f32 0.5, %v309
  %v311 = vsub.f32 1.5, %v310
  %v312 = vmul.f32 %v307, %v311
  %v313 = vmul.f32 %v279, %v312
  %vm314 = vcmp.eq.f32.partialorder %v279, inf
  %v315 = vsel %vm314, %v279, %v313
  %vm316 = vcmp.eq.f32.partialorder %v279, 0.0
  %v317 = vand.u32 %v279, 2147483648
  %v318 = vsel %vm316, %v317, %v315
  %v319 = vrsqrt.pop %v280
  %v320 = vmul.f32 %v319, %v280
  %v321 = vmul.f32 %v320, %v319
  %v322 = vmul.f32 0.5, %v321
  %v323 = vsub.f32 1.5, %v322
  %v324 = vmul.f32 %v319, %v323
  %v325 = vmul.f32 %v280, %v324
  %vm326 = vcmp.eq.f32.partialorder %v280, inf
  %v327 = vsel %vm326, %v280, %v325
  %vm328 = vcmp.eq.f32.partialorder %v280, 0.0
  %v329 = vand.u32 %v280, 2147483648
  %v330 = vsel %vm328, %v329, %v327
  %v331 = vrsqrt.pop %v281
  %v332 = vmul.f32 %v331, %v281
  %v333 = vmul.f32 %v332, %v331
  %v334 = vmul.f32 0.5, %v333
  %v335 = vsub.f32 1.5, %v334
  %v336 = vmul.f32 %v331, %v335
  %v337 = vmul.f32 %v281, %v336
  %vm338 = vcmp.eq.f32.partialorder %v281, inf
  %v339 = vsel %vm338, %v281, %v337
  %vm340 = vcmp.eq.f32.partialorder %v281, 0.0
  %v341 = vand.u32 %v281, 2147483648
  %v342 = vsel %vm340, %v341, %v339
  %v343 = vrsqrt.pop %v282
  %v344 = vmul.f32 %v343, %v282
  %v345 = vmul.f32 %v344, %v343
  %v346 = vmul.f32 0.5, %v345
  %v347 = vsub.f32 1.5, %v346
  %v348 = vmul.f32 %v343, %v347
  %v349 = vmul.f32 %v282, %v348
  %vm350 = vcmp.eq.f32.partialorder %v282, inf
  %v351 = vsel %vm350, %v282, %v349
  %vm352 = vcmp.eq.f32.partialorder %v282, 0.0
  %v353 = vand.u32 %v282, 2147483648
  %v354 = vsel %vm352, %v353, %v351
  %v355 = vmul.f32 %v294, 2.0
  %v356 = vmul.f32 %v306, 2.0
  %v357 = vmul.f32 %v318, 2.0
  %v358 = vmul.f32 %v330, 2.0
  %v359 = vmul.f32 %v342, 2.0
  %v360 = vmul.f32 %v354, 2.0
  %v361 = vsub.f32 %v271, %v355
  %v362 = vsub.f32 %v272, %v356
  %v363 = vsub.f32 %v273, %v357
  %v364 = vsub.f32 %v274, %v358
  %v365 = vsub.f32 %v275, %v359
  %v366 = vsub.f32 %v276, %v360
  %v367 = vmax.f32 %v361, 0.0
  %v368 = vmax.f32 %v362, 0.0
  %v369 = vmax.f32 %v363, 0.0
  %v370 = vmax.f32 %v364, 0.0
  %v371 = vmax.f32 %v365, 0.0
  %v372 = vmax.f32 %v366, 0.0
  %v373 = vlog2.pop %v265
  %v374 = vmul.f32 %v373, 0.6931472
  %v375 = vlog2.pop %v266
  %v376 = vmul.f32 %v375, 0.6931472
  %v377 = vlog2.pop %v267
  %v378 = vmul.f32 %v377, 0.6931472
  %v379 = vlog2.pop %v268
  %v380 = vmul.f32 %v379, 0.6931472
  %v381 = vlog2.pop %v269
  %v382 = vmul.f32 %v381, 0.6931472
  %v383 = vlog2.pop %v270
  %v384 = vmul.f32 %v383, 0.6931472
  %v385 = vlog2.pop %v241
  %v386 = vmul.f32 %v385, 0.6931472
  %v387 = vlog2.pop %v242
  %v388 = vmul.f32 %v387, 0.6931472
  %v389 = vlog2.pop %v243
  %v390 = vmul.f32 %v389, 0.6931472
  %v391 = vlog2.pop %v244
  %v392 = vmul.f32 %v391, 0.6931472
  %v393 = vlog2.pop %v245
  %v394 = vmul.f32 %v393, 0.6931472
  %v395 = vlog2.pop %v246
  %v396 = vmul.f32 %v395, 0.6931472
  %v397 = vsub.f32 %v374, %v386
  %v398 = vsub.f32 %v376, %v388
  %v399 = vsub.f32 %v378, %v390
  %v400 = vsub.f32 %v380, %v392
  %v401 = vsub.f32 %v382, %v394
  %v402 = vsub.f32 %v384, %v396
  %v403 = vand.u32 2147483647, %v397
  %v404 = vand.u32 2147483647, %v398
  %v405 = vand.u32 2147483647, %v399
  %v406 = vand.u32 2147483647, %v400
  %v407 = vand.u32 2147483647, %v401
  %v408 = vand.u32 2147483647, %v402
  %v409 = vmul.f32 %v403, 0.5
  %v410 = vmul.f32 %v404, 0.5
  %v411 = vmul.f32 %v405, 0.5
  %v412 = vmul.f32 %v406, 0.5
  %v413 = vmul.f32 %v407, 0.5
  %v414 = vmul.f32 %v408, 0.5
  %v415 = vld [vmem:[#allocation2] sm:$0xff]
  %v416 = vld [vmem:[#allocation2 + $0x8] sm:$0xff]
  %v417 = vld [vmem:[#allocation2 + $0x10] sm:$0xff]
  %v418 = vld [vmem:[#allocation2 + $0x18] sm:$0xff]
  %v419 = vld [vmem:[#allocation2 + $0x20] sm:$0xff]
  %v420 = vld [vmem:[#allocation2 + $0x28] sm:$0xff]
  %v421 = vadd.f32 %v415, %v367
  %v422 = vadd.f32 %v416, %v368
  %v423 = vadd.f32 %v417, %v369
  %v424 = vadd.f32 %v418, %v370
  %v425 = vadd.f32 %v419, %v371
  %v426 = vadd.f32 %v420, %v372
  %427 = vst [vmem:[#allocation2] sm:$0xff] %v421
  %428 = vst [vmem:[#allocation2 + $0x8] sm:$0xff] %v422
  %429 = vst [vmem:[#allocation2 + $0x10] sm:$0xff] %v423
  %430 = vst [vmem:[#allocation2 + $0x18] sm:$0xff] %v424
  %431 = vst [vmem:[#allocation2 + $0x20] sm:$0xff] %v425
  %432 = vst [vmem:[#allocation2 + $0x28] sm:$0xff] %v426
  %v433 = vld [vmem:[#allocation3] sm:$0xff]
  %v434 = vld [vmem:[#allocation3 + $0x8] sm:$0xff]
  %v435 = vld [vmem:[#allocation3 + $0x10] sm:$0xff]
  %v436 = vld [vmem:[#allocation3 + $0x18] sm:$0xff]
  %v437 = vld [vmem:[#allocation3 + $0x20] sm:$0xff]
  %v438 = vld [vmem:[#allocation3 + $0x28] sm:$0xff]
  %v439 = vadd.f32 %v433, %v265
  %v440 = vadd.f32 %v434, %v266
  %v441 = vadd.f32 %v435, %v267
  %v442 = vadd.f32 %v436, %v268
  %v443 = vadd.f32 %v437, %v269
  %v444 = vadd.f32 %v438, %v270
  %445 = vst [vmem:[#allocation3] sm:$0xff] %v439
  %446 = vst [vmem:[#allocation3 + $0x8] sm:$0xff] %v440
  %447 = vst [vmem:[#allocation3 + $0x10] sm:$0xff] %v441
  %448 = vst [vmem:[#allocation3 + $0x18] sm:$0xff] %v442
  %449 = vst [vmem:[#allocation3 + $0x20] sm:$0xff] %v443
  %450 = vst [vmem:[#allocation3 + $0x28] sm:$0xff] %v444
  %v451 = vld [vmem:[#allocation4] sm:$0xff]
  %v452 = vld [vmem:[#allocation4 + $0x8] sm:$0xff]
  %v453 = vld [vmem:[#allocation4 + $0x10] sm:$0xff]
  %v454 = vld [vmem:[#allocation4 + $0x18] sm:$0xff]
  %v455 = vld [vmem:[#allocation4 + $0x20] sm:$0xff]
  %v456 = vld [vmem:[#allocation4 + $0x28] sm:$0xff]
  %v457 = vadd.f32 %v451, %v409
  %v458 = vadd.f32 %v452, %v410
  %v459 = vadd.f32 %v453, %v411
  %v460 = vadd.f32 %v454, %v412
  %v461 = vadd.f32 %v455, %v413
  %v462 = vadd.f32 %v456, %v414
  %463 = vst [vmem:[#allocation4] sm:$0xff] %v457
  %464 = vst [vmem:[#allocation4 + $0x8] sm:$0xff] %v458
  %465 = vst [vmem:[#allocation4 + $0x10] sm:$0xff] %v459
  %466 = vst [vmem:[#allocation4 + $0x18] sm:$0xff] %v460
  %467 = vst [vmem:[#allocation4 + $0x20] sm:$0xff] %v461
  %468 = vst [vmem:[#allocation4 + $0x28] sm:$0xff] %v462
  // Predicated region
  $region18: #{multi_resolution_stft_loss.3} parent=0 // pred_check
    %p469 = pneg %p17
  $region19: #{multi_resolution_stft_loss.3} parent=0 // pred_check_branch
    %471 = sbr.rel (%p469) target = $region21
  $region20: #{multi_resolution_stft_loss.3} parent=0 // pred_region
    %v472 = vlaneseq
    %v473 = vshrl.u32 %v472, 7
    %v474 = vlaneseq
    %v475 = vand.u32 %v474, 127
    %vm476 = vcmp.eq.s32.totalorder %v473, 0
    %vm477 = vcmp.eq.s32.totalorder %v475, 0
    %vm478 = vmand %vm476, %vm477
    %v479 = vld [vmem:[#allocation2] sm:$0xff]
    %v480 = vld [vmem:[#allocation2 + $0x8] sm:$0xff]
    %v481 = vld [vmem:[#allocation2 + $0x10] sm:$0xff]
    %v482 = vld [vmem:[#allocation2 + $0x18] sm:$0xff]
    %v483 = vld [vmem:[#allocation2 + $0x20] sm:$0xff]
    %v484 = vld [vmem:[#allocation2 + $0x28] sm:$0xff]
    %v485 = vadd.f32 %v479, %v480
    %v486 = vadd.f32 %v485, %v481
    %v487 = vadd.f32 %v486, %v482
    %v488 = vadd.f32 %v487, %v483
    %v489 = vadd.f32 %v488, %v484
    %490 = vadd.xlane.f32.xlu0 %v489
    %v491 = vpop.xlane.xlu0 %490
    %v492 = vrot.slane %v491, 4
    %v493 = vadd.f32 %v491, %v492
    %v494 = vrot.slane %v493, 2
    %v495 = vadd.f32 %v493, %v494
    %v496 = vrot.slane %v495, 1
    %v497 = vadd.f32 %v495, %v496
    %s498 = vtos %v497
    %v499 = vstv %s498
    %v500 = vsel %vm478, %v499, 0.0
    %501 = vst [vmem:[%s3] sm:$0xff] %v500
    %v502 = vld [vmem:[#allocation3] sm:$0xff]
    %v503 = vld [vmem:[#allocation3 + $0x8] sm:$0xff]
    %v504 = vld [vmem:[#allocation3 + $0x10] sm:$0xff]
    %v505 = vld [vmem:[#allocation3 + $0x18] sm:$0xff]
    %v506 = vld [vmem:[#allocation3 + $0x20] sm:$0xff]
    %v507 = vld [vmem:[#allocation3 + $0x28] sm:$0xff]
    %v508 = vadd.f32 %v502, %v503
    %v509 = vadd.f32 %v508, %v504
    %v510 = vadd.f32 %v509, %v505
    %v511 = vadd.f32 %v510, %v506
    %v512 = vadd.f32 %v511, %v507
    %513 = vadd.xlane.f32.xlu0 %v512
    %v514 = vpop.xlane.xlu0 %513
    %v515 = vrot.slane %v514, 4
    %v516 = vadd.f32 %v514, %v515
    %v517 = vrot.slane %v516, 2
    %v518 = vadd.f32 %v516, %v517
    %v519 = vrot.slane %v518, 1
    %v520 = vadd.f32 %v518, %v519
    %s521 = vtos %v520
    %v522 = vstv %s521
    %v523 = vsel %vm478, %v522, 0.0
    %524 = vst [vmem:[%s4] sm:$0xff] %v523
    %v525 = vld [vmem:[#allocation4] sm:$0xff]
    %v526 = vld [vmem:[#allocation4 + $0x8] sm:$0xff]
    %v527 = vld [vmem:[#allocation4 + $0x10] sm:$0xff]
    %v528 = vld [vmem:[#allocation4 + $0x18] sm:$0xff]
    %v529 = vld [vmem:[#allocation4 + $0x20] sm:$0xff]
    %v530 = vld [vmem:[#allocation4 + $0x28] sm:$0xff]
    %v531 = vadd.f32 %v525, %v526
    %v532 = vadd.f32 %v531, %v527
    %v533 = vadd.f32 %v532, %v528
    %v534 = vadd.f32 %v533, %v529
    %v535 = vadd.f32 %v534, %v530
    %536 = vadd.xlane.f32.xlu0 %v535
    %v537 = vpop.xlane.xlu0 %536
    %v538 = vrot.slane %v537, 4
    %v539 = vadd.f32 %v537, %v538
    %v540 = vrot.slane %v539, 2
    %v541 = vadd.f32 %v539, %v540
    %v542 = vrot.slane %v541, 1
    %v543 = vadd.f32 %v541, %v542
    %s544 = vtos %v543
    %v545 = vstv %s544
    %v546 = vsel %vm478, %v545, 0.0
    %547 = vst [vmem:[%s5] sm:$0xff] %v546
  $region21: #{multi_resolution_stft_loss.3} parent=0 // pred_fallthru
    _
  // Predicated region
  $region22: #{multi_resolution_stft_loss.3} parent=0 // pred_check
    _
  $region23: #{multi_resolution_stft_loss.3} parent=0 // pred_check_branch
    %549 = sbr.rel (0) target = $region25
  $region24: #{multi_resolution_stft_loss.3} parent=0 // pred_region
    _
  $region25: #{multi_resolution_stft_loss.3} parent=0 // pred_fallthru
    _
  // Predicated region
  $region26: #{multi_resolution_stft_loss.3} parent=0 // pred_check
    _
  $region27: #{multi_resolution_stft_loss.3} parent=0 // pred_check_branch
    %551 = sbr.rel (0) target = $region29
  $region28: #{multi_resolution_stft_loss.3} parent=0 // pred_region
    _
  $region29: #{multi_resolution_stft_loss.3} parent=0 // pred_fallthru
    _
  // Predicated region
  $region30: #{multi_resolution_stft_loss.3} parent=0 // pred_check
    _
  $region31: #{multi_resolution_stft_loss.3} parent=0 // pred_check_branch
    %553 = sbr.rel (0) target = $region33
  $region32: #{multi_resolution_stft_loss.3} parent=0 // pred_region
    _
  $region33: #{multi_resolution_stft_loss.3} parent=0 // pred_fallthru
    _
  // Predicated region
  $region34: #{multi_resolution_stft_loss.3} parent=0 // pred_check
    _
  $region35: #{multi_resolution_stft_loss.3} parent=0 // pred_check_branch
    %555 = sbr.rel (0) target = $region37
  $region36: #{multi_resolution_stft_loss.3} parent=0 // pred_region
    _
  $region37: #{multi_resolution_stft_loss.3} parent=0 // pred_fallthru
    _
  // Predicated region
  $region38: #{multi_resolution_stft_loss.3} parent=0 // pred_check
    _
  $region39: #{multi_resolution_stft_loss.3} parent=0 // pred_check_branch
    %557 = sbr.rel (0) target = $region41
  $region40: #{multi_resolution_stft_loss.3} parent=0 // pred_region
    _
  $region41: #{multi_resolution_stft_loss.3} parent=0 // pred_fallthru
    _
  // Predicated region
  $region42: #{multi_resolution_stft_loss.3} parent=0 // pred_check
    _
  $region43: #{multi_resolution_stft_loss.3} parent=0 // pred_check_branch
    %559 = sbr.rel (0) target = $region45
  $region44: #{multi_resolution_stft_loss.3} parent=0 // pred_region
    _
  $region45: #{multi_resolution_stft_loss.3} parent=0 // pred_fallthru
    _

// kernel: multi_resolution_stft_loss.5
$region0: #{multi_resolution_stft_loss.5}
  #allocation0 [shape = 'u32[]', space=smem, size = 0x4, offset = 0x4, fixed_abs, tag = 'smem constant byte address 0x4 - core index']
  #allocation1 [shape = 'u32[72,128]{1,0:T(1,128)}', space=vmem, size = 0x9000, scoped, tag = 'internal scratch']
  #allocation2 [shape = 'f32[80,128]{1,0:T(8,128)}', space=vmem, size = 0xa000, scoped, tag = 'scratch operand']
  #allocation3 [shape = 'f32[80,128]{1,0:T(8,128)}', space=vmem, size = 0xa000, scoped, tag = 'scratch operand']
  #allocation4 [shape = 'f32[80,128]{1,0:T(8,128)}', space=vmem, size = 0xa000, scoped, tag = 'scratch operand']
  %s0 = inlined_call_operand.vmem [shape: f32[80,64], index: 0, kind: input, shape index: {}]
  %s1 = inlined_call_operand.vmem [shape: f32[80,64], index: 1, kind: input, shape index: {}]
  %s2 = inlined_call_operand.vmem [shape: f32[64,256], index: 2, kind: input, shape index: {}]
  %s3 = inlined_call_operand.vmem [shape: f32[8,128], index: 3, kind: output, shape index: {0}]
  %s4 = inlined_call_operand.vmem [shape: f32[8,128], index: 4, kind: output, shape index: {1}]
  %s5 = inlined_call_operand.vmem [shape: f32[8,128], index: 5, kind: output, shape index: {2}]
  %6 = xla_tuple %s3, %s4, %s5
  %s7 = sld [smem:[#allocation0]]
  $region46: #{multi_resolution_stft_loss.5} parent=0
    _
  %s9 = ssub.s32 1, %s7
  %s10 = scalar_select 0, %s9, %s7
  // Predicated region
  $region2: #{multi_resolution_stft_loss.5} parent=0 // pred_check
    _
  $region3: #{multi_resolution_stft_loss.5} parent=0 // pred_check_branch
    %12 = sbr.rel (0) target = $region5
  $region4: #{multi_resolution_stft_loss.5} parent=0 // pred_region
    _
  $region5: #{multi_resolution_stft_loss.5} parent=0 // pred_fallthru
    _
  // Predicated region
  $region6: #{multi_resolution_stft_loss.5} parent=0 // pred_check
    _
  $region7: #{multi_resolution_stft_loss.5} parent=0 // pred_check_branch
    %14 = sbr.rel (0) target = $region9
  $region8: #{multi_resolution_stft_loss.5} parent=0 // pred_region
    _
  $region9: #{multi_resolution_stft_loss.5} parent=0 // pred_fallthru
    _
  // Predicated region
  $region10: #{multi_resolution_stft_loss.5} parent=0 // pred_check
    _
  $region11: #{multi_resolution_stft_loss.5} parent=0 // pred_check_branch
    %16 = sbr.rel (0) target = $region13
  $region12: #{multi_resolution_stft_loss.5} parent=0 // pred_region
    _
  $region13: #{multi_resolution_stft_loss.5} parent=0 // pred_fallthru
    _
  %p17 = scmp.eq.s32.totalorder 0, 0
  // Predicated region
  $region14: #{multi_resolution_stft_loss.5} parent=0 // pred_check
    %p18 = pneg %p17
  $region15: #{multi_resolution_stft_loss.5} parent=0 // pred_check_branch
    %20 = sbr.rel (%p18) target = $region17
  $region16: #{multi_resolution_stft_loss.5} parent=0 // pred_region
    %21 = vst [vmem:[#allocation2] sm:$0xff] 0.0
    %22 = vst [vmem:[#allocation2 + $0x8] sm:$0xff] 0.0
    %23 = vst [vmem:[#allocation2 + $0x10] sm:$0xff] 0.0
    %24 = vst [vmem:[#allocation2 + $0x18] sm:$0xff] 0.0
    %25 = vst [vmem:[#allocation2 + $0x20] sm:$0xff] 0.0
    %26 = vst [vmem:[#allocation2 + $0x28] sm:$0xff] 0.0
    %27 = vst [vmem:[#allocation2 + $0x30] sm:$0xff] 0.0
    %28 = vst [vmem:[#allocation2 + $0x38] sm:$0xff] 0.0
    %29 = vst [vmem:[#allocation2 + $0x40] sm:$0xff] 0.0
    %30 = vst [vmem:[#allocation2 + $0x48] sm:$0xff] 0.0
    %31 = vst [vmem:[#allocation3] sm:$0xff] 0.0
    %32 = vst [vmem:[#allocation3 + $0x8] sm:$0xff] 0.0
    %33 = vst [vmem:[#allocation3 + $0x10] sm:$0xff] 0.0
    %34 = vst [vmem:[#allocation3 + $0x18] sm:$0xff] 0.0
    %35 = vst [vmem:[#allocation3 + $0x20] sm:$0xff] 0.0
    %36 = vst [vmem:[#allocation3 + $0x28] sm:$0xff] 0.0
    %37 = vst [vmem:[#allocation3 + $0x30] sm:$0xff] 0.0
    %38 = vst [vmem:[#allocation3 + $0x38] sm:$0xff] 0.0
    %39 = vst [vmem:[#allocation3 + $0x40] sm:$0xff] 0.0
    %40 = vst [vmem:[#allocation3 + $0x48] sm:$0xff] 0.0
    %41 = vst [vmem:[#allocation4] sm:$0xff] 0.0
    %42 = vst [vmem:[#allocation4 + $0x8] sm:$0xff] 0.0
    %43 = vst [vmem:[#allocation4 + $0x10] sm:$0xff] 0.0
    %44 = vst [vmem:[#allocation4 + $0x18] sm:$0xff] 0.0
    %45 = vst [vmem:[#allocation4 + $0x20] sm:$0xff] 0.0
    %46 = vst [vmem:[#allocation4 + $0x28] sm:$0xff] 0.0
    %47 = vst [vmem:[#allocation4 + $0x30] sm:$0xff] 0.0
    %48 = vst [vmem:[#allocation4 + $0x38] sm:$0xff] 0.0
    %49 = vst [vmem:[#allocation4 + $0x40] sm:$0xff] 0.0
    %50 = vst [vmem:[#allocation4 + $0x48] sm:$0xff] 0.0
  $region17: #{multi_resolution_stft_loss.5} parent=0 // pred_fallthru
    _
  %v51 = vld [vmem:[%s2] sm:$0xff]
  %v52 = vld [vmem:[%s2 + $0x8] sm:$0xff]
  %v53 = vld [vmem:[%s2 + $0x10] sm:$0xff]
  %v54 = vld [vmem:[%s2 + $0x18] sm:$0xff]
  %v55 = vld [vmem:[%s2 + $0x20] sm:$0xff]
  %v56 = vld [vmem:[%s2 + $0x28] sm:$0xff]
  %v57 = vld [vmem:[%s2 + $0x30] sm:$0xff]
  %v58 = vld [vmem:[%s2 + $0x38] sm:$0xff]
  %v59 = vld [vmem:[%s2 + $0x40] sm:$0xff]
  %v60 = vld [vmem:[%s2 + $0x48] sm:$0xff]
  %v61 = vld [vmem:[%s2 + $0x50] sm:$0xff]
  %v62 = vld [vmem:[%s2 + $0x58] sm:$0xff]
  %v63 = vld [vmem:[%s2 + $0x60] sm:$0xff]
  %v64 = vld [vmem:[%s2 + $0x68] sm:$0xff]
  %v65 = vld [vmem:[%s2 + $0x70] sm:$0xff]
  %v66 = vld [vmem:[%s2 + $0x78] sm:$0xff]
  %v67 = vld [vmem:[%s0] sm:$0xff]
  %v68 = vld [vmem:[%s0 + $0x8] sm:$0xff]
  %v69 = vld [vmem:[%s0 + $0x10] sm:$0xff]
  %v70 = vld [vmem:[%s0 + $0x18] sm:$0xff]
  %v71 = vld [vmem:[%s0 + $0x20] sm:$0xff]
  %v72 = vld [vmem:[%s0 + $0x28] sm:$0xff]
  %v73 = vld [vmem:[%s0 + $0x30] sm:$0xff]
  %v74 = vld [vmem:[%s0 + $0x38] sm:$0xff]
  %v75 = vld [vmem:[%s0 + $0x40] sm:$0xff]
  %v76 = vld [vmem:[%s0 + $0x48] sm:$0xff]
  %vm77 = vcmask 523264
  %v79 = vsel %vm77, %v67, 0
  %v82 = vsel %vm77, %v68, 0
  %v85 = vsel %vm77, %v69, 0
  %v88 = vsel %vm77, %v70, 0
  %v91 = vsel %vm77, %v71, 0
  %v94 = vsel %vm77, %v72, 0
  %v97 = vsel %vm77, %v73, 0
  %v100 = vsel %vm77, %v74, 0
  %v103 = vsel %vm77, %v75, 0
  %v106 = vsel %vm77, %v76, 0
  %108 = vmatpush.msra.mxu0 0.0
  %109 = vmatpush.msra.mxu0 0.0
  %110 = vmatpush.msra.mxu0 0.0
  %111 = vmatpush.msra.mxu0 0.0
  %112 = vmatpush.msra.mxu0 0.0
  %113 = vmatpush.msra.mxu0 0.0
  %114 = vmatpush.msra.mxu0 0.0
  %115 = vmatpush.msra.mxu0 0.0
  %116 = vmatpush.msra.mxu0 %v65
  %117 = vmatpush.msra.mxu0 %v63
  %118 = vmatpush.msra.mxu0 %v61
  %119 = vmatpush.msra.mxu0 %v59
  %120 = vmatpush.msra.mxu0 %v57
  %121 = vmatpush.msra.mxu0 %v55
  %122 = vmatpush.msra.mxu0 %v53
  %123 = vmatpush.msra.mxu0 %v51
  %124 = vmatmul.f32.gmra.mxu0 %v79
  %v125 = vpop.f32.mrf.mxu0
  %v126 = vadd.f32 0.0, %v125
  %127 = vmatmul.f32.gmra.mxu0 %v82
  %v128 = vpop.f32.mrf.mxu0
  %v129 = vadd.f32 0.0, %v128
  %130 = vmatmul.f32.gmra.mxu0 %v85
  %v131 = vpop.f32.mrf.mxu0
  %v132 = vadd.f32 0.0, %v131
  %133 = vmatmul.f32.gmra.mxu0 %v88
  %v134 = vpop.f32.mrf.mxu0
  %v135 = vadd.f32 0.0, %v134
  %136 = vmatmul.f32.gmra.mxu0 %v91
  %v137 = vpop.f32.mrf.mxu0
  %v138 = vadd.f32 0.0, %v137
  %139 = vmatmul.f32.gmra.mxu0 %v94
  %v140 = vpop.f32.mrf.mxu0
  %v141 = vadd.f32 0.0, %v140
  %142 = vmatmul.f32.gmra.mxu0 %v97
  %v143 = vpop.f32.mrf.mxu0
  %v144 = vadd.f32 0.0, %v143
  %145 = vmatmul.f32.gmra.mxu0 %v100
  %v146 = vpop.f32.mrf.mxu0
  %v147 = vadd.f32 0.0, %v146
  %148 = vmatmul.f32.gmra.mxu0 %v103
  %v149 = vpop.f32.mrf.mxu0
  %v150 = vadd.f32 0.0, %v149
  %151 = vmatmul.f32.gmra.mxu0 %v106
  %v152 = vpop.f32.mrf.mxu0
  %v153 = vadd.f32 0.0, %v152
  %154 = vdwg.mxu0
  %155 = vmatpush.msra.mxu0 0.0
  %156 = vmatpush.msra.mxu0 0.0
  %157 = vmatpush.msra.mxu0 0.0
  %158 = vmatpush.msra.mxu0 0.0
  %159 = vmatpush.msra.mxu0 0.0
  %160 = vmatpush.msra.mxu0 0.0
  %161 = vmatpush.msra.mxu0 0.0
  %162 = vmatpush.msra.mxu0 0.0
  %163 = vmatpush.msra.mxu0 %v66
  %164 = vmatpush.msra.mxu0 %v64
  %165 = vmatpush.msra.mxu0 %v62
  %166 = vmatpush.msra.mxu0 %v60
  %167 = vmatpush.msra.mxu0 %v58
  %168 = vmatpush.msra.mxu0 %v56
  %169 = vmatpush.msra.mxu0 %v54
  %170 = vmatpush.msra.mxu0 %v52
  %171 = vmatmul.f32.gmra.mxu0 %v79
  %v172 = vpop.f32.mrf.mxu0
  %v173 = vadd.f32 0.0, %v172
  %174 = vmatmul.f32.gmra.mxu0 %v82
  %v175 = vpop.f32.mrf.mxu0
  %v176 = vadd.f32 0.0, %v175
  %177 = vmatmul.f32.gmra.mxu0 %v85
  %v178 = vpop.f32.mrf.mxu0
  %v179 = vadd.f32 0.0, %v178
  %180 = vmatmul.f32.gmra.mxu0 %v88
  %v181 = vpop.f32.mrf.mxu0
  %v182 = vadd.f32 0.0, %v181
  %183 = vmatmul.f32.gmra.mxu0 %v91
  %v184 = vpop.f32.mrf.mxu0
  %v185 = vadd.f32 0.0, %v184
  %186 = vmatmul.f32.gmra.mxu0 %v94
  %v187 = vpop.f32.mrf.mxu0
  %v188 = vadd.f32 0.0, %v187
  %189 = vmatmul.f32.gmra.mxu0 %v97
  %v190 = vpop.f32.mrf.mxu0
  %v191 = vadd.f32 0.0, %v190
  %192 = vmatmul.f32.gmra.mxu0 %v100
  %v193 = vpop.f32.mrf.mxu0
  %v194 = vadd.f32 0.0, %v193
  %195 = vmatmul.f32.gmra.mxu0 %v103
  %v196 = vpop.f32.mrf.mxu0
  %v197 = vadd.f32 0.0, %v196
  %198 = vmatmul.f32.gmra.mxu0 %v106
  %v199 = vpop.f32.mrf.mxu0
  %v200 = vadd.f32 0.0, %v199
  %201 = vdwg.mxu0
  %v202 = vld [vmem:[%s1] sm:$0xff]
  %v203 = vld [vmem:[%s1 + $0x8] sm:$0xff]
  %v204 = vld [vmem:[%s1 + $0x10] sm:$0xff]
  %v205 = vld [vmem:[%s1 + $0x18] sm:$0xff]
  %v206 = vld [vmem:[%s1 + $0x20] sm:$0xff]
  %v207 = vld [vmem:[%s1 + $0x28] sm:$0xff]
  %v208 = vld [vmem:[%s1 + $0x30] sm:$0xff]
  %v209 = vld [vmem:[%s1 + $0x38] sm:$0xff]
  %v210 = vld [vmem:[%s1 + $0x40] sm:$0xff]
  %v211 = vld [vmem:[%s1 + $0x48] sm:$0xff]
  %v213 = vsel %vm77, %v202, 0
  %v216 = vsel %vm77, %v203, 0
  %v219 = vsel %vm77, %v204, 0
  %v222 = vsel %vm77, %v205, 0
  %v225 = vsel %vm77, %v206, 0
  %v228 = vsel %vm77, %v207, 0
  %v231 = vsel %vm77, %v208, 0
  %v234 = vsel %vm77, %v209, 0
  %v237 = vsel %vm77, %v210, 0
  %v240 = vsel %vm77, %v211, 0
  %242 = vmatpush.msra.mxu0 0.0
  %243 = vmatpush.msra.mxu0 0.0
  %244 = vmatpush.msra.mxu0 0.0
  %245 = vmatpush.msra.mxu0 0.0
  %246 = vmatpush.msra.mxu0 0.0
  %247 = vmatpush.msra.mxu0 0.0
  %248 = vmatpush.msra.mxu0 0.0
  %249 = vmatpush.msra.mxu0 0.0
  %250 = vmatpush.msra.mxu0 %v65
  %251 = vmatpush.msra.mxu0 %v63
  %252 = vmatpush.msra.mxu0 %v61
  %253 = vmatpush.msra.mxu0 %v59
  %254 = vmatpush.msra.mxu0 %v57
  %255 = vmatpush.msra.mxu0 %v55
  %256 = vmatpush.msra.mxu0 %v53
  %257 = vmatpush.msra.mxu0 %v51
  %258 = vmatmul.f32.gmra.mxu0 %v213
  %v259 = vpop.f32.mrf.mxu0
  %v260 = vadd.f32 0.0, %v259
  %261 = vmatmul.f32.gmra.mxu0 %v216
  %v262 = vpop.f32.mrf.mxu0
  %v263 = vadd.f32 0.0, %v262
  %264 = vmatmul.f32.gmra.mxu0 %v219
  %v265 = vpop.f32.mrf.mxu0
  %v266 = vadd.f32 0.0, %v265
  %267 = vmatmul.f32.gmra.mxu0 %v222
  %v268 = vpop.f32.mrf.mxu0
  %v269 = vadd.f32 0.0, %v268
  %270 = vmatmul.f32.gmra.mxu0 %v225
  %v271 = vpop.f32.mrf.mxu0
  %v272 = vadd.f32 0.0, %v271
  %273 = vmatmul.f32.gmra.mxu0 %v228
  %v274 = vpop.f32.mrf.mxu0
  %v275 = vadd.f32 0.0, %v274
  %276 = vmatmul.f32.gmra.mxu0 %v231
  %v277 = vpop.f32.mrf.mxu0
  %v278 = vadd.f32 0.0, %v277
  %279 = vmatmul.f32.gmra.mxu0 %v234
  %v280 = vpop.f32.mrf.mxu0
  %v281 = vadd.f32 0.0, %v280
  %282 = vmatmul.f32.gmra.mxu0 %v237
  %v283 = vpop.f32.mrf.mxu0
  %v284 = vadd.f32 0.0, %v283
  %285 = vmatmul.f32.gmra.mxu0 %v240
  %v286 = vpop.f32.mrf.mxu0
  %v287 = vadd.f32 0.0, %v286
  %288 = vdwg.mxu0
  %289 = vmatpush.msra.mxu0 0.0
  %290 = vmatpush.msra.mxu0 0.0
  %291 = vmatpush.msra.mxu0 0.0
  %292 = vmatpush.msra.mxu0 0.0
  %293 = vmatpush.msra.mxu0 0.0
  %294 = vmatpush.msra.mxu0 0.0
  %295 = vmatpush.msra.mxu0 0.0
  %296 = vmatpush.msra.mxu0 0.0
  %297 = vmatpush.msra.mxu0 %v66
  %298 = vmatpush.msra.mxu0 %v64
  %299 = vmatpush.msra.mxu0 %v62
  %300 = vmatpush.msra.mxu0 %v60
  %301 = vmatpush.msra.mxu0 %v58
  %302 = vmatpush.msra.mxu0 %v56
  %303 = vmatpush.msra.mxu0 %v54
  %304 = vmatpush.msra.mxu0 %v52
  %305 = vmatmul.f32.gmra.mxu0 %v213
  %v306 = vpop.f32.mrf.mxu0
  %v307 = vadd.f32 0.0, %v306
  %308 = vmatmul.f32.gmra.mxu0 %v216
  %v309 = vpop.f32.mrf.mxu0
  %v310 = vadd.f32 0.0, %v309
  %311 = vmatmul.f32.gmra.mxu0 %v219
  %v312 = vpop.f32.mrf.mxu0
  %v313 = vadd.f32 0.0, %v312
  %314 = vmatmul.f32.gmra.mxu0 %v222
  %v315 = vpop.f32.mrf.mxu0
  %v316 = vadd.f32 0.0, %v315
  %317 = vmatmul.f32.gmra.mxu0 %v225
  %v318 = vpop.f32.mrf.mxu0
  %v319 = vadd.f32 0.0, %v318
  %320 = vmatmul.f32.gmra.mxu0 %v228
  %v321 = vpop.f32.mrf.mxu0
  %v322 = vadd.f32 0.0, %v321
  %323 = vmatmul.f32.gmra.mxu0 %v231
  %v324 = vpop.f32.mrf.mxu0
  %v325 = vadd.f32 0.0, %v324
  %326 = vmatmul.f32.gmra.mxu0 %v234
  %v327 = vpop.f32.mrf.mxu0
  %v328 = vadd.f32 0.0, %v327
  %329 = vmatmul.f32.gmra.mxu0 %v237
  %v330 = vpop.f32.mrf.mxu0
  %v331 = vadd.f32 0.0, %v330
  %332 = vmatmul.f32.gmra.mxu0 %v240
  %v333 = vpop.f32.mrf.mxu0
  %v334 = vadd.f32 0.0, %v333
  %335 = vdwg.mxu0
  %v336 = vmul.f32 %v126, %v126
  %v337 = vmul.f32 %v129, %v129
  %v338 = vmul.f32 %v132, %v132
  %v339 = vmul.f32 %v135, %v135
  %v340 = vmul.f32 %v138, %v138
  %v341 = vmul.f32 %v141, %v141
  %v342 = vmul.f32 %v144, %v144
  %v343 = vmul.f32 %v147, %v147
  %v344 = vmul.f32 %v150, %v150
  %v345 = vmul.f32 %v153, %v153
  %v346 = vmul.f32 %v173, %v173
  %v347 = vmul.f32 %v176, %v176
  %v348 = vmul.f32 %v179, %v179
  %v349 = vmul.f32 %v182, %v182
  %v350 = vmul.f32 %v185, %v185
  %v351 = vmul.f32 %v188, %v188
  %v352 = vmul.f32 %v191, %v191
  %v353 = vmul.f32 %v194, %v194
  %v354 = vmul.f32 %v197, %v197
  %v355 = vmul.f32 %v200, %v200
  %v356 = vadd.f32 %v336, %v346
  %v357 = vadd.f32 %v337, %v347
  %v358 = vadd.f32 %v338, %v348
  %v359 = vadd.f32 %v339, %v349
  %v360 = vadd.f32 %v340, %v350
  %v361 = vadd.f32 %v341, %v351
  %v362 = vadd.f32 %v342, %v352
  %v363 = vadd.f32 %v343, %v353
  %v364 = vadd.f32 %v344, %v354
  %v365 = vadd.f32 %v345, %v355
  %v366 = vmax.f32 %v356, 1e-07
  %v367 = vmax.f32 %v357, 1e-07
  %v368 = vmax.f32 %v358, 1e-07
  %v369 = vmax.f32 %v359, 1e-07
  %v370 = vmax.f32 %v360, 1e-07
  %v371 = vmax.f32 %v361, 1e-07
  %v372 = vmax.f32 %v362, 1e-07
  %v373 = vmax.f32 %v363, 1e-07
  %v374 = vmax.f32 %v364, 1e-07
  %v375 = vmax.f32 %v365, 1e-07
  %v376 = vmul.f32 %v260, %v260
  %v377 = vmul.f32 %v263, %v263
  %v378 = vmul.f32 %v266, %v266
  %v379 = vmul.f32 %v269, %v269
  %v380 = vmul.f32 %v272, %v272
  %v381 = vmul.f32 %v275, %v275
  %v382 = vmul.f32 %v278, %v278
  %v383 = vmul.f32 %v281, %v281
  %v384 = vmul.f32 %v284, %v284
  %v385 = vmul.f32 %v287, %v287
  %v386 = vmul.f32 %v307, %v307
  %v387 = vmul.f32 %v310, %v310
  %v388 = vmul.f32 %v313, %v313
  %v389 = vmul.f32 %v316, %v316
  %v390 = vmul.f32 %v319, %v319
  %v391 = vmul.f32 %v322, %v322
  %v392 = vmul.f32 %v325, %v325
  %v393 = vmul.f32 %v328, %v328
  %v394 = vmul.f32 %v331, %v331
  %v395 = vmul.f32 %v334, %v334
  %v396 = vadd.f32 %v376, %v386
  %v397 = vadd.f32 %v377, %v387
  %v398 = vadd.f32 %v378, %v388
  %v399 = vadd.f32 %v379, %v389
  %v400 = vadd.f32 %v380, %v390
  %v401 = vadd.f32 %v381, %v391
  %v402 = vadd.f32 %v382, %v392
  %v403 = vadd.f32 %v383, %v393
  %v404 = vadd.f32 %v384, %v394
  %v405 = vadd.f32 %v385, %v395
  %v406 = vmax.f32 %v396, 1e-07
  %v407 = vmax.f32 %v397, 1e-07
  %v408 = vmax.f32 %v398, 1e-07
  %v409 = vmax.f32 %v399, 1e-07
  %v410 = vmax.f32 %v400, 1e-07
  %v411 = vmax.f32 %v401, 1e-07
  %v412 = vmax.f32 %v402, 1e-07
  %v413 = vmax.f32 %v403, 1e-07
  %v414 = vmax.f32 %v404, 1e-07
  %v415 = vmax.f32 %v405, 1e-07
  %v416 = vadd.f32 %v366, %v406
  %v417 = vadd.f32 %v367, %v407
  %v418 = vadd.f32 %v368, %v408
  %v419 = vadd.f32 %v369, %v409
  %v420 = vadd.f32 %v370, %v410
  %v421 = vadd.f32 %v371, %v411
  %v422 = vadd.f32 %v372, %v412
  %v423 = vadd.f32 %v373, %v413
  %v424 = vadd.f32 %v374, %v414
  %v425 = vadd.f32 %v375, %v415
  %v426 = vmul.f32 %v366, %v406
  %v427 = vmul.f32 %v367, %v407
  %v428 = vmul.f32 %v368, %v408
  %v429 = vmul.f32 %v369, %v409
  %v430 = vmul.f32 %v370, %v410
  %v431 = vmul.f32 %v371, %v411
  %v432 = vmul.f32 %v372, %v412
  %v433 = vmul.f32 %v373, %v413
  %v434 = vmul.f32 %v374, %v414
  %v435 = vmul.f32 %v375, %v415
  %v436 = vrsqrt.pop %v426
  %v437 = vmul.f32 %v436, %v426
  %v438 = vmul.f32 %v437, %v436
  %v439 = vmul.f32 0.5, %v438
  %v440 = vsub.f32 1.5, %v439
  %v441 = vmul.f32 %v436, %v440
  %v442 = vmul.f32 %v426, %v441
  %vm443 = vcmp.eq.f32.partialorder %v426, inf
  %v444 = vsel %vm443, %v426, %v442
  %vm445 = vcmp.eq.f32.partialorder %v426, 0.0
  %v446 = vand.u32 %v426, 2147483648
  %v447 = vsel %vm445, %v446, %v444
  %v448 = vrsqrt.pop %v427
  %v449 = vmul.f32 %v448, %v427
  %v450 = vmul.f32 %v449, %v448
  %v451 = vmul.f32 0.5, %v450
  %v452 = vsub.f32 1.5, %v451
  %v453 = vmul.f32 %v448, %v452
  %v454 = vmul.f32 %v427, %v453
  %vm455 = vcmp.eq.f32.partialorder %v427, inf
  %v456 = vsel %vm455, %v427, %v454
  %vm457 = vcmp.eq.f32.partialorder %v427, 0.0
  %v458 = vand.u32 %v427, 2147483648
  %v459 = vsel %vm457, %v458, %v456
  %v460 = vrsqrt.pop %v428
  %v461 = vmul.f32 %v460, %v428
  %v462 = vmul.f32 %v461, %v460
  %v463 = vmul.f32 0.5, %v462
  %v464 = vsub.f32 1.5, %v463
  %v465 = vmul.f32 %v460, %v464
  %v466 = vmul.f32 %v428, %v465
  %vm467 = vcmp.eq.f32.partialorder %v428, inf
  %v468 = vsel %vm467, %v428, %v466
  %vm469 = vcmp.eq.f32.partialorder %v428, 0.0
  %v470 = vand.u32 %v428, 2147483648
  %v471 = vsel %vm469, %v470, %v468
  %v472 = vrsqrt.pop %v429
  %v473 = vmul.f32 %v472, %v429
  %v474 = vmul.f32 %v473, %v472
  %v475 = vmul.f32 0.5, %v474
  %v476 = vsub.f32 1.5, %v475
  %v477 = vmul.f32 %v472, %v476
  %v478 = vmul.f32 %v429, %v477
  %vm479 = vcmp.eq.f32.partialorder %v429, inf
  %v480 = vsel %vm479, %v429, %v478
  %vm481 = vcmp.eq.f32.partialorder %v429, 0.0
  %v482 = vand.u32 %v429, 2147483648
  %v483 = vsel %vm481, %v482, %v480
  %v484 = vrsqrt.pop %v430
  %v485 = vmul.f32 %v484, %v430
  %v486 = vmul.f32 %v485, %v484
  %v487 = vmul.f32 0.5, %v486
  %v488 = vsub.f32 1.5, %v487
  %v489 = vmul.f32 %v484, %v488
  %v490 = vmul.f32 %v430, %v489
  %vm491 = vcmp.eq.f32.partialorder %v430, inf
  %v492 = vsel %vm491, %v430, %v490
  %vm493 = vcmp.eq.f32.partialorder %v430, 0.0
  %v494 = vand.u32 %v430, 2147483648
  %v495 = vsel %vm493, %v494, %v492
  %v496 = vrsqrt.pop %v431
  %v497 = vmul.f32 %v496, %v431
  %v498 = vmul.f32 %v497, %v496
  %v499 = vmul.f32 0.5, %v498
  %v500 = vsub.f32 1.5, %v499
  %v501 = vmul.f32 %v496, %v500
  %v502 = vmul.f32 %v431, %v501
  %vm503 = vcmp.eq.f32.partialorder %v431, inf
  %v504 = vsel %vm503, %v431, %v502
  %vm505 = vcmp.eq.f32.partialorder %v431, 0.0
  %v506 = vand.u32 %v431, 2147483648
  %v507 = vsel %vm505, %v506, %v504
  %v508 = vrsqrt.pop %v432
  %v509 = vmul.f32 %v508, %v432
  %v510 = vmul.f32 %v509, %v508
  %v511 = vmul.f32 0.5, %v510
  %v512 = vsub.f32 1.5, %v511
  %v513 = vmul.f32 %v508, %v512
  %v514 = vmul.f32 %v432, %v513
  %vm515 = vcmp.eq.f32.partialorder %v432, inf
  %v516 = vsel %vm515, %v432, %v514
  %vm517 = vcmp.eq.f32.partialorder %v432, 0.0
  %v518 = vand.u32 %v432, 2147483648
  %v519 = vsel %vm517, %v518, %v516
  %v520 = vrsqrt.pop %v433
  %v521 = vmul.f32 %v520, %v433
  %v522 = vmul.f32 %v521, %v520
  %v523 = vmul.f32 0.5, %v522
  %v524 = vsub.f32 1.5, %v523
  %v525 = vmul.f32 %v520, %v524
  %v526 = vmul.f32 %v433, %v525
  %vm527 = vcmp.eq.f32.partialorder %v433, inf
  %v528 = vsel %vm527, %v433, %v526
  %vm529 = vcmp.eq.f32.partialorder %v433, 0.0
  %v530 = vand.u32 %v433, 2147483648
  %v531 = vsel %vm529, %v530, %v528
  %v532 = vrsqrt.pop %v434
  %v533 = vmul.f32 %v532, %v434
  %v534 = vmul.f32 %v533, %v532
  %v535 = vmul.f32 0.5, %v534
  %v536 = vsub.f32 1.5, %v535
  %v537 = vmul.f32 %v532, %v536
  %v538 = vmul.f32 %v434, %v537
  %vm539 = vcmp.eq.f32.partialorder %v434, inf
  %v540 = vsel %vm539, %v434, %v538
  %vm541 = vcmp.eq.f32.partialorder %v434, 0.0
  %v542 = vand.u32 %v434, 2147483648
  %v543 = vsel %vm541, %v542, %v540
  %v544 = vrsqrt.pop %v435
  %v545 = vmul.f32 %v544, %v435
  %v546 = vmul.f32 %v545, %v544
  %v547 = vmul.f32 0.5, %v546
  %v548 = vsub.f32 1.5, %v547
  %v549 = vmul.f32 %v544, %v548
  %v550 = vmul.f32 %v435, %v549
  %vm551 = vcmp.eq.f32.partialorder %v435, inf
  %v552 = vsel %vm551, %v435, %v550
  %vm553 = vcmp.eq.f32.partialorder %v435, 0.0
  %v554 = vand.u32 %v435, 2147483648
  %v555 = vsel %vm553, %v554, %v552
  %v556 = vmul.f32 %v447, 2.0
  %v557 = vmul.f32 %v459, 2.0
  %v558 = vmul.f32 %v471, 2.0
  %v559 = vmul.f32 %v483, 2.0
  %v560 = vmul.f32 %v495, 2.0
  %v561 = vmul.f32 %v507, 2.0
  %v562 = vmul.f32 %v519, 2.0
  %v563 = vmul.f32 %v531, 2.0
  %v564 = vmul.f32 %v543, 2.0
  %v565 = vmul.f32 %v555, 2.0
  %v566 = vsub.f32 %v416, %v556
  %v567 = vsub.f32 %v417, %v557
  %v568 = vsub.f32 %v418, %v558
  %v569 = vsub.f32 %v419, %v559
  %v570 = vsub.f32 %v420, %v560
  %v571 = vsub.f32 %v421, %v561
  %v572 = vsub.f32 %v422, %v562
  %v573 = vsub.f32 %v423, %v563
  %v574 = vsub.f32 %v424, %v564
  %v575 = vsub.f32 %v425, %v565
  %v576 = vmax.f32 %v566, 0.0
  %v577 = vmax.f32 %v567, 0.0
  %v578 = vmax.f32 %v568, 0.0
  %v579 = vmax.f32 %v569, 0.0
  %v580 = vmax.f32 %v570, 0.0
  %v581 = vmax.f32 %v571, 0.0
  %v582 = vmax.f32 %v572, 0.0
  %v583 = vmax.f32 %v573, 0.0
  %v584 = vmax.f32 %v574, 0.0
  %v585 = vmax.f32 %v575, 0.0
  %v586 = vlog2.pop %v406
  %v587 = vmul.f32 %v586, 0.6931472
  %v588 = vlog2.pop %v407
  %v589 = vmul.f32 %v588, 0.6931472
  %v590 = vlog2.pop %v408
  %v591 = vmul.f32 %v590, 0.6931472
  %v592 = vlog2.pop %v409
  %v593 = vmul.f32 %v592, 0.6931472
  %v594 = vlog2.pop %v410
  %v595 = vmul.f32 %v594, 0.6931472
  %v596 = vlog2.pop %v411
  %v597 = vmul.f32 %v596, 0.6931472
  %v598 = vlog2.pop %v412
  %v599 = vmul.f32 %v598, 0.6931472
  %v600 = vlog2.pop %v413
  %v601 = vmul.f32 %v600, 0.6931472
  %v602 = vlog2.pop %v414
  %v603 = vmul.f32 %v602, 0.6931472
  %v604 = vlog2.pop %v415
  %v605 = vmul.f32 %v604, 0.6931472
  %v606 = vlog2.pop %v366
  %v607 = vmul.f32 %v606, 0.6931472
  %v608 = vlog2.pop %v367
  %v609 = vmul.f32 %v608, 0.6931472
  %v610 = vlog2.pop %v368
  %v611 = vmul.f32 %v610, 0.6931472
  %v612 = vlog2.pop %v369
  %v613 = vmul.f32 %v612, 0.6931472
  %v614 = vlog2.pop %v370
  %v615 = vmul.f32 %v614, 0.6931472
  %v616 = vlog2.pop %v371
  %v617 = vmul.f32 %v616, 0.6931472
  %v618 = vlog2.pop %v372
  %v619 = vmul.f32 %v618, 0.6931472
  %v620 = vlog2.pop %v373
  %v621 = vmul.f32 %v620, 0.6931472
  %v622 = vlog2.pop %v374
  %v623 = vmul.f32 %v622, 0.6931472
  %v624 = vlog2.pop %v375
  %v625 = vmul.f32 %v624, 0.6931472
  %v626 = vsub.f32 %v587, %v607
  %v627 = vsub.f32 %v589, %v609
  %v628 = vsub.f32 %v591, %v611
  %v629 = vsub.f32 %v593, %v613
  %v630 = vsub.f32 %v595, %v615
  %v631 = vsub.f32 %v597, %v617
  %v632 = vsub.f32 %v599, %v619
  %v633 = vsub.f32 %v601, %v621
  %v634 = vsub.f32 %v603, %v623
  %v635 = vsub.f32 %v605, %v625
  %v636 = vand.u32 2147483647, %v626
  %v637 = vand.u32 2147483647, %v627
  %v638 = vand.u32 2147483647, %v628
  %v639 = vand.u32 2147483647, %v629
  %v640 = vand.u32 2147483647, %v630
  %v641 = vand.u32 2147483647, %v631
  %v642 = vand.u32 2147483647, %v632
  %v643 = vand.u32 2147483647, %v633
  %v644 = vand.u32 2147483647, %v634
  %v645 = vand.u32 2147483647, %v635
  %v646 = vmul.f32 %v636, 0.5
  %v647 = vmul.f32 %v637, 0.5
  %v648 = vmul.f32 %v638, 0.5
  %v649 = vmul.f32 %v639, 0.5
  %v650 = vmul.f32 %v640, 0.5
  %v651 = vmul.f32 %v641, 0.5
  %v652 = vmul.f32 %v642, 0.5
  %v653 = vmul.f32 %v643, 0.5
  %v654 = vmul.f32 %v644, 0.5
  %v655 = vmul.f32 %v645, 0.5
  %v656 = vld [vmem:[#allocation2] sm:$0xff]
  %v657 = vld [vmem:[#allocation2 + $0x8] sm:$0xff]
  %v658 = vld [vmem:[#allocation2 + $0x10] sm:$0xff]
  %v659 = vld [vmem:[#allocation2 + $0x18] sm:$0xff]
  %v660 = vld [vmem:[#allocation2 + $0x20] sm:$0xff]
  %v661 = vld [vmem:[#allocation2 + $0x28] sm:$0xff]
  %v662 = vld [vmem:[#allocation2 + $0x30] sm:$0xff]
  %v663 = vld [vmem:[#allocation2 + $0x38] sm:$0xff]
  %v664 = vld [vmem:[#allocation2 + $0x40] sm:$0xff]
  %v665 = vld [vmem:[#allocation2 + $0x48] sm:$0xff]
  %v666 = vadd.f32 %v656, %v576
  %v667 = vadd.f32 %v657, %v577
  %v668 = vadd.f32 %v658, %v578
  %v669 = vadd.f32 %v659, %v579
  %v670 = vadd.f32 %v660, %v580
  %v671 = vadd.f32 %v661, %v581
  %v672 = vadd.f32 %v662, %v582
  %v673 = vadd.f32 %v663, %v583
  %v674 = vadd.f32 %v664, %v584
  %v675 = vadd.f32 %v665, %v585
  %676 = vst [vmem:[#allocation2] sm:$0xff] %v666
  %677 = vst [vmem:[#allocation2 + $0x8] sm:$0xff] %v667
  %678 = vst [vmem:[#allocation2 + $0x10] sm:$0xff] %v668
  %679 = vst [vmem:[#allocation2 + $0x18] sm:$0xff] %v669
  %680 = vst [vmem:[#allocation2 + $0x20] sm:$0xff] %v670
  %681 = vst [vmem:[#allocation2 + $0x28] sm:$0xff] %v671
  %682 = vst [vmem:[#allocation2 + $0x30] sm:$0xff] %v672
  %683 = vst [vmem:[#allocation2 + $0x38] sm:$0xff] %v673
  %684 = vst [vmem:[#allocation2 + $0x40] sm:$0xff] %v674
  %685 = vst [vmem:[#allocation2 + $0x48] sm:$0xff] %v675
  %v686 = vld [vmem:[#allocation3] sm:$0xff]
  %v687 = vld [vmem:[#allocation3 + $0x8] sm:$0xff]
  %v688 = vld [vmem:[#allocation3 + $0x10] sm:$0xff]
  %v689 = vld [vmem:[#allocation3 + $0x18] sm:$0xff]
  %v690 = vld [vmem:[#allocation3 + $0x20] sm:$0xff]
  %v691 = vld [vmem:[#allocation3 + $0x28] sm:$0xff]
  %v692 = vld [vmem:[#allocation3 + $0x30] sm:$0xff]
  %v693 = vld [vmem:[#allocation3 + $0x38] sm:$0xff]
  %v694 = vld [vmem:[#allocation3 + $0x40] sm:$0xff]
  %v695 = vld [vmem:[#allocation3 + $0x48] sm:$0xff]
  %v696 = vadd.f32 %v686, %v406
  %v697 = vadd.f32 %v687, %v407
  %v698 = vadd.f32 %v688, %v408
  %v699 = vadd.f32 %v689, %v409
  %v700 = vadd.f32 %v690, %v410
  %v701 = vadd.f32 %v691, %v411
  %v702 = vadd.f32 %v692, %v412
  %v703 = vadd.f32 %v693, %v413
  %v704 = vadd.f32 %v694, %v414
  %v705 = vadd.f32 %v695, %v415
  %706 = vst [vmem:[#allocation3] sm:$0xff] %v696
  %707 = vst [vmem:[#allocation3 + $0x8] sm:$0xff] %v697
  %708 = vst [vmem:[#allocation3 + $0x10] sm:$0xff] %v698
  %709 = vst [vmem:[#allocation3 + $0x18] sm:$0xff] %v699
  %710 = vst [vmem:[#allocation3 + $0x20] sm:$0xff] %v700
  %711 = vst [vmem:[#allocation3 + $0x28] sm:$0xff] %v701
  %712 = vst [vmem:[#allocation3 + $0x30] sm:$0xff] %v702
  %713 = vst [vmem:[#allocation3 + $0x38] sm:$0xff] %v703
  %714 = vst [vmem:[#allocation3 + $0x40] sm:$0xff] %v704
  %715 = vst [vmem:[#allocation3 + $0x48] sm:$0xff] %v705
  %v716 = vld [vmem:[#allocation4] sm:$0xff]
  %v717 = vld [vmem:[#allocation4 + $0x8] sm:$0xff]
  %v718 = vld [vmem:[#allocation4 + $0x10] sm:$0xff]
  %v719 = vld [vmem:[#allocation4 + $0x18] sm:$0xff]
  %v720 = vld [vmem:[#allocation4 + $0x20] sm:$0xff]
  %v721 = vld [vmem:[#allocation4 + $0x28] sm:$0xff]
  %v722 = vld [vmem:[#allocation4 + $0x30] sm:$0xff]
  %v723 = vld [vmem:[#allocation4 + $0x38] sm:$0xff]
  %v724 = vld [vmem:[#allocation4 + $0x40] sm:$0xff]
  %v725 = vld [vmem:[#allocation4 + $0x48] sm:$0xff]
  %v726 = vadd.f32 %v716, %v646
  %v727 = vadd.f32 %v717, %v647
  %v728 = vadd.f32 %v718, %v648
  %v729 = vadd.f32 %v719, %v649
  %v730 = vadd.f32 %v720, %v650
  %v731 = vadd.f32 %v721, %v651
  %v732 = vadd.f32 %v722, %v652
  %v733 = vadd.f32 %v723, %v653
  %v734 = vadd.f32 %v724, %v654
  %v735 = vadd.f32 %v725, %v655
  %736 = vst [vmem:[#allocation4] sm:$0xff] %v726
  %737 = vst [vmem:[#allocation4 + $0x8] sm:$0xff] %v727
  %738 = vst [vmem:[#allocation4 + $0x10] sm:$0xff] %v728
  %739 = vst [vmem:[#allocation4 + $0x18] sm:$0xff] %v729
  %740 = vst [vmem:[#allocation4 + $0x20] sm:$0xff] %v730
  %741 = vst [vmem:[#allocation4 + $0x28] sm:$0xff] %v731
  %742 = vst [vmem:[#allocation4 + $0x30] sm:$0xff] %v732
  %743 = vst [vmem:[#allocation4 + $0x38] sm:$0xff] %v733
  %744 = vst [vmem:[#allocation4 + $0x40] sm:$0xff] %v734
  %745 = vst [vmem:[#allocation4 + $0x48] sm:$0xff] %v735
  // Predicated region
  $region18: #{multi_resolution_stft_loss.5} parent=0 // pred_check
    %p746 = pneg %p17
  $region19: #{multi_resolution_stft_loss.5} parent=0 // pred_check_branch
    %748 = sbr.rel (%p746) target = $region21
  $region20: #{multi_resolution_stft_loss.5} parent=0 // pred_region
    %v749 = vlaneseq
    %v750 = vshrl.u32 %v749, 7
    %v751 = vlaneseq
    %v752 = vand.u32 %v751, 127
    %vm753 = vcmp.eq.s32.totalorder %v750, 0
    %vm754 = vcmp.eq.s32.totalorder %v752, 0
    %vm755 = vmand %vm753, %vm754
    %v756 = vld [vmem:[#allocation2] sm:$0xff]
    %v757 = vld [vmem:[#allocation2 + $0x8] sm:$0xff]
    %v758 = vld [vmem:[#allocation2 + $0x10] sm:$0xff]
    %v759 = vld [vmem:[#allocation2 + $0x18] sm:$0xff]
    %v760 = vld [vmem:[#allocation2 + $0x20] sm:$0xff]
    %v761 = vld [vmem:[#allocation2 + $0x28] sm:$0xff]
    %v762 = vld [vmem:[#allocation2 + $0x30] sm:$0xff]
    %v763 = vld [vmem:[#allocation2 + $0x38] sm:$0xff]
    %v764 = vld [vmem:[#allocation2 + $0x40] sm:$0xff]
    %v765 = vld [vmem:[#allocation2 + $0x48] sm:$0xff]
    %v766 = vadd.f32 %v756, %v757
    %v767 = vadd.f32 %v766, %v758
    %v768 = vadd.f32 %v767, %v759
    %v769 = vadd.f32 %v768, %v760
    %v770 = vadd.f32 %v769, %v761
    %v771 = vadd.f32 %v770, %v762
    %v772 = vadd.f32 %v771, %v763
    %v773 = vadd.f32 %v772, %v764
    %v774 = vadd.f32 %v773, %v765
    %775 = vadd.xlane.f32.xlu0 %v774
    %v776 = vpop.xlane.xlu0 %775
    %v777 = vrot.slane %v776, 4
    %v778 = vadd.f32 %v776, %v777
    %v779 = vrot.slane %v778, 2
    %v780 = vadd.f32 %v778, %v779
    %v781 = vrot.slane %v780, 1
    %v782 = vadd.f32 %v780, %v781
    %s783 = vtos %v782
    %v784 = vstv %s783
    %v785 = vsel %vm755, %v784, 0.0
    %786 = vst [vmem:[%s3] sm:$0xff] %v785
    %v787 = vld [vmem:[#allocation3] sm:$0xff]
    %v788 = vld [vmem:[#allocation3 + $0x8] sm:$0xff]
    %v789 = vld [vmem:[#allocation3 + $0x10] sm:$0xff]
    %v790 = vld [vmem:[#allocation3 + $0x18] sm:$0xff]
    %v791 = vld [vmem:[#allocation3 + $0x20] sm:$0xff]
    %v792 = vld [vmem:[#allocation3 + $0x28] sm:$0xff]
    %v793 = vld [vmem:[#allocation3 + $0x30] sm:$0xff]
    %v794 = vld [vmem:[#allocation3 + $0x38] sm:$0xff]
    %v795 = vld [vmem:[#allocation3 + $0x40] sm:$0xff]
    %v796 = vld [vmem:[#allocation3 + $0x48] sm:$0xff]
    %v797 = vadd.f32 %v787, %v788
    %v798 = vadd.f32 %v797, %v789
    %v799 = vadd.f32 %v798, %v790
    %v800 = vadd.f32 %v799, %v791
    %v801 = vadd.f32 %v800, %v792
    %v802 = vadd.f32 %v801, %v793
    %v803 = vadd.f32 %v802, %v794
    %v804 = vadd.f32 %v803, %v795
    %v805 = vadd.f32 %v804, %v796
    %806 = vadd.xlane.f32.xlu0 %v805
    %v807 = vpop.xlane.xlu0 %806
    %v808 = vrot.slane %v807, 4
    %v809 = vadd.f32 %v807, %v808
    %v810 = vrot.slane %v809, 2
    %v811 = vadd.f32 %v809, %v810
    %v812 = vrot.slane %v811, 1
    %v813 = vadd.f32 %v811, %v812
    %s814 = vtos %v813
    %v815 = vstv %s814
    %v816 = vsel %vm755, %v815, 0.0
    %817 = vst [vmem:[%s4] sm:$0xff] %v816
    %v818 = vld [vmem:[#allocation4] sm:$0xff]
    %v819 = vld [vmem:[#allocation4 + $0x8] sm:$0xff]
    %v820 = vld [vmem:[#allocation4 + $0x10] sm:$0xff]
    %v821 = vld [vmem:[#allocation4 + $0x18] sm:$0xff]
    %v822 = vld [vmem:[#allocation4 + $0x20] sm:$0xff]
    %v823 = vld [vmem:[#allocation4 + $0x28] sm:$0xff]
    %v824 = vld [vmem:[#allocation4 + $0x30] sm:$0xff]
    %v825 = vld [vmem:[#allocation4 + $0x38] sm:$0xff]
    %v826 = vld [vmem:[#allocation4 + $0x40] sm:$0xff]
    %v827 = vld [vmem:[#allocation4 + $0x48] sm:$0xff]
    %v828 = vadd.f32 %v818, %v819
    %v829 = vadd.f32 %v828, %v820
    %v830 = vadd.f32 %v829, %v821
    %v831 = vadd.f32 %v830, %v822
    %v832 = vadd.f32 %v831, %v823
    %v833 = vadd.f32 %v832, %v824
    %v834 = vadd.f32 %v833, %v825
    %v835 = vadd.f32 %v834, %v826
    %v836 = vadd.f32 %v835, %v827
    %837 = vadd.xlane.f32.xlu0 %v836
    %v838 = vpop.xlane.xlu0 %837
    %v839 = vrot.slane %v838, 4
    %v840 = vadd.f32 %v838, %v839
    %v841 = vrot.slane %v840, 2
    %v842 = vadd.f32 %v840, %v841
    %v843 = vrot.slane %v842, 1
    %v844 = vadd.f32 %v842, %v843
    %s845 = vtos %v844
    %v846 = vstv %s845
    %v847 = vsel %vm755, %v846, 0.0
    %848 = vst [vmem:[%s5] sm:$0xff] %v847
  $region21: #{multi_resolution_stft_loss.5} parent=0 // pred_fallthru
    _
  // Predicated region
  $region22: #{multi_resolution_stft_loss.5} parent=0 // pred_check
    _
  $region23: #{multi_resolution_stft_loss.5} parent=0 // pred_check_branch
    %850 = sbr.rel (0) target = $region25
  $region24: #{multi_resolution_stft_loss.5} parent=0 // pred_region
    _
  $region25: #{multi_resolution_stft_loss.5} parent=0 // pred_fallthru
    _
  // Predicated region
  $region26: #{multi_resolution_stft_loss.5} parent=0 // pred_check
    _
  $region27: #{multi_resolution_stft_loss.5} parent=0 // pred_check_branch
    %852 = sbr.rel (0) target = $region29
  $region28: #{multi_resolution_stft_loss.5} parent=0 // pred_region
    _
  $region29: #{multi_resolution_stft_loss.5} parent=0 // pred_fallthru
    _
  // Predicated region
  $region30: #{multi_resolution_stft_loss.5} parent=0 // pred_check
    _
  $region31: #{multi_resolution_stft_loss.5} parent=0 // pred_check_branch
    %854 = sbr.rel (0) target = $region33
  $region32: #{multi_resolution_stft_loss.5} parent=0 // pred_region
    _
  $region33: #{multi_resolution_stft_loss.5} parent=0 // pred_fallthru
    _
  // Predicated region
  $region34: #{multi_resolution_stft_loss.5} parent=0 // pred_check
    _
  $region35: #{multi_resolution_stft_loss.5} parent=0 // pred_check_branch
    %856 = sbr.rel (0) target = $region37
  $region36: #{multi_resolution_stft_loss.5} parent=0 // pred_region
    _
  $region37: #{multi_resolution_stft_loss.5} parent=0 // pred_fallthru
    _
  // Predicated region
  $region38: #{multi_resolution_stft_loss.5} parent=0 // pred_check
    _
  $region39: #{multi_resolution_stft_loss.5} parent=0 // pred_check_branch
    %858 = sbr.rel (0) target = $region41
  $region40: #{multi_resolution_stft_loss.5} parent=0 // pred_region
    _
  $region41: #{multi_resolution_stft_loss.5} parent=0 // pred_fallthru
    _
  // Predicated region
  $region42: #{multi_resolution_stft_loss.5} parent=0 // pred_check
    _
  $region43: #{multi_resolution_stft_loss.5} parent=0 // pred_check_branch
    %860 = sbr.rel (0) target = $region45
  $region44: #{multi_resolution_stft_loss.5} parent=0 // pred_region
    _
  $region45: #{multi_resolution_stft_loss.5} parent=0 // pred_fallthru
    _

</llo_original>
